<compile_context>
chip_gen: v6e
topology: v6e:2x2x1
jax: 0.10.0
libtpu: 0.0.40
codegen_flags: <defaults>
</compile_context>

<pallas_src>
import numpy as np
from functools import partial

import jax
import jax.numpy as jnp
from jax import lax
from jax.experimental import pallas as pl
from jax.experimental.pallas import tpu as pltpu

# --------------------------------------------------------------------------
# Tunables (sized to fit v7x's 64 MiB physical VMEM; identical tiles sit in the
# v5e/v6e sweet spot.  Per-step raster temporaries at these tiles are a few MiB.)
# --------------------------------------------------------------------------
P_TILE_MAX = 512                 # raster pixel tile (lane axis), multiple of 128
F_TILE_MAX = 256                 # face tile (sublane axis); MXU K = F_TILE per dot
SHADE_TILE_MAX = 8192            # shade kernel pixel tile (HBM-bandwidth bound)
IDX_BITS = 8                     # local face index bits packed into the depth key
IDX_MASK = (1 << IDX_BITS) - 1
BIG_DEPTH = 1.0e6                # "empty" depth (matches torch depth_buffer init)
BIG_KEY = int(np.float32(BIG_DEPTH).view(np.int32)) & ~IDX_MASK
VMEM_LIMIT = 40 * 1024 * 1024    # explicit scoped-VMEM budget (<= v7x physical)

assert F_TILE_MAX <= (1 << IDX_BITS)


def _round_up(x, m):
    return pl.cdiv(x, m) * m


def _select_mxu_dtype():
    """bf16 MXU operands on v6e/v7x; keep f32 on <= v5 (per perf review)."""
    try:
        kind = jax.devices()[0].device_kind.lower()
    except Exception:
        return jnp.float32
    for old in ("v2", "v3", "v4", "v5"):
        if old in kind:
            return jnp.float32
    return jnp.bfloat16


# --------------------------------------------------------------------------
# plain-JAX utilities (util.face_vertices / util.vertex_normals equivalents)
# --------------------------------------------------------------------------
def face_vertices(vertices, faces):
    """vertices (B,Nv,D), faces (B,Nf,3) int -> (B,Nf,3,D)."""
    B, Nv, D = vertices.shape
    Nf = faces.shape[1]
    offs = (jnp.arange(B, dtype=faces.dtype) * Nv)[:, None, None]
    flat = (faces + offs).reshape(-1)
    return vertices.reshape(-1, D)[flat].reshape(B, Nf, 3, D)


def vertex_normals(vertices, faces):
    """vertices (B,Nv,3), faces (B,Nf,3) -> per-vertex normals (B,Nv,3)."""
    B, Nv, _ = vertices.shape
    offs = (jnp.arange(B, dtype=faces.dtype) * Nv)[:, None, None]
    f = (faces + offs).reshape(-1, 3)                       # (B*Nf, 3)
    vf = vertices.reshape(-1, 3)[f.reshape(-1)].reshape(-1, 3, 3)
    n1 = jnp.cross(vf[:, 2] - vf[:, 1], vf[:, 0] - vf[:, 1])
    n2 = jnp.cross(vf[:, 0] - vf[:, 2], vf[:, 1] - vf[:, 2])
    n0 = jnp.cross(vf[:, 1] - vf[:, 0], vf[:, 2] - vf[:, 0])
    normals = jnp.zeros((B * Nv, 3), jnp.float32)
    normals = normals.at[f[:, 1]].add(n1)
    normals = normals.at[f[:, 2]].add(n2)
    normals = normals.at[f[:, 0]].add(n0)
    norm = jnp.maximum(jnp.linalg.norm(normals, axis=-1, keepdims=True), 1e-6)
    return (normals / norm).reshape(B, Nv, 3)


def grid_sample_bilinear(img, grid):
    """torch.F.grid_sample(img, grid, mode='bilinear', padding='zeros',
    align_corners=False).  img (B,C,Hi,Wi), grid (B,Ho,Wo,2) with (x,y) in [-1,1]."""
    B, C, Hi, Wi = img.shape
    gx, gy = grid[..., 0], grid[..., 1]
    ix = ((gx + 1.0) * Wi - 1.0) * 0.5
    iy = ((gy + 1.0) * Hi - 1.0) * 0.5
    ix0 = jnp.floor(ix)
    iy0 = jnp.floor(iy)

    def sample(img_b, iy_, ix_):
        valid = (ix_ >= 0) & (ix_ <= Wi - 1) & (iy_ >= 0) & (iy_ <= Hi - 1)
        ixc = jnp.clip(ix_, 0, Wi - 1).astype(jnp.int32)
        iyc = jnp.clip(iy_, 0, Hi - 1).astype(jnp.int32)
        v = img_b[:, iyc, ixc]                               # (C,Ho,Wo)
        return v * valid.astype(img_b.dtype)[None]

    def per_batch(img_b, ix_b, iy_b, ix0_b, iy0_b):
        wx1 = ix_b - ix0_b
        wx0 = 1.0 - wx1
        wy1 = iy_b - iy0_b
        wy0 = 1.0 - wy1
        v00 = sample(img_b, iy0_b, ix0_b)
        v01 = sample(img_b, iy0_b, ix0_b + 1)
        v10 = sample(img_b, iy0_b + 1, ix0_b)
        v11 = sample(img_b, iy0_b + 1, ix0_b + 1)
        return (v00 * (wy0 * wx0)[None] + v01 * (wy0 * wx1)[None]
                + v10 * (wy1 * wx0)[None] + v11 * (wy1 * wx1)[None])

    return jax.vmap(per_batch)(img, ix, iy, ix0, iy0)


# --------------------------------------------------------------------------
# Shared per-tile rasterizer body (MXU plane eval + packed-key z-test + 3 dots)
# --------------------------------------------------------------------------
def _raster_tile_body(pixh, coef, attr, *, f_tile, big, idx_mask, sel_dtype):
    # pixh : (3, P)      homogeneous pixel centers [x; y; 1]
    # coef : (3F, 3)     stacked plane coeffs [w0-plane | w1-plane | depth-plane]
    # attr : (D, 3F)     packed attributes   [A0-A2    | A1-A2    | A2         ]
    planes = jnp.dot(coef, pixh, preferred_element_type=jnp.float32)   # (3F, P)
    w0 = planes[0:f_tile, :]
    w1 = planes[f_tile:2 * f_tile, :]
    d = planes[2 * f_tile:3 * f_tile, :]

    # coverage: all barycentric weights >= 0 and depth in front of the camera
    covered = (jnp.minimum(jnp.minimum(w0, w1), 1.0 - w0 - w1) >= 0.0) & (d >= 0.0)
    # NOTE: depth is quantized to ~2^-15 relative precision by clearing the low
    # IDX_BITS mantissa bits for the packed key (z-fighting range only).
    keyf = jnp.where(covered, jnp.abs(d), big)               # abs() scrubs -0.0
    lidx = lax.broadcasted_iota(jnp.int32, (f_tile, 1), 0)   # hoisted column iota
    packed = (pltpu.bitcast(keyf, jnp.int32) & jnp.int32(~idx_mask)) | lidx
    bestp = jnp.min(packed, axis=0, keepdims=True)           # (1, P)
    bestd = bestp & jnp.int32(~idx_mask)                     # depth bits only
    onehot = packed == bestp                                 # exact one-hot mask

    zero = jnp.zeros_like(w0)
    s0 = jnp.where(onehot, w0, zero).astype(sel_dtype)
    s1 = jnp.where(onehot, w1, zero).astype(sel_dtype)
    s2 = jnp.where(onehot, 1.0, 0.0).astype(sel_dtype)

    dA0 = attr[:, 0:f_tile]
    dA1 = attr[:, f_tile:2 * f_tile]
    A2 = attr[:, 2 * f_tile:3 * f_tile]
    tile_vals = (jnp.dot(dA0, s0, preferred_element_type=jnp.float32)
                 + jnp.dot(dA1, s1, preferred_element_type=jnp.float32)
                 + jnp.dot(A2, s2, preferred_element_type=jnp.float32))
    return tile_vals, bestd


# Pallas kernel 1a: streaming rasterizer, grid = (B, pixel_tiles, face_tiles)
def _raster_stream_kernel(pixh_ref, coef_ref, attr_ref, vals_ref, vis_ref,
                          acc_key, *, f_tile, big, big_key, idx_mask, sel_dtype):
    fk = pl.program_id(2)

    @pl.when(fk == 0)
    def _init():
        vals_ref[...] = jnp.zeros_like(vals_ref)
        acc_key[...] = jnp.full_like(acc_key, big_key)

    tile_vals, bestd = _raster_tile_body(
        pixh_ref[...], coef_ref[...], attr_ref[...],
        f_tile=f_tile, big=big, idx_mask=idx_mask, sel_dtype=sel_dtype)

    # cross-face-tile merge on depth bits only (earlier face tile wins ties)
    better = bestd < acc_key[...]                             # (1, P)
    acc_key[...] = jnp.where(better, bestd, acc_key[...])
    vals_ref[...] = jnp.where(better, tile_vals, vals_ref[...])

    @pl.when(fk == pl.num_programs(2) - 1)
    def _finalize():
        vis_ref[...] = (acc_key[...] < big_key).astype(jnp.float32)


# Pallas kernel 1b: single-face-tile fast path, grid = (B, pixel_tiles)
def _raster_single_kernel(pixh_ref, coef_ref, attr_ref, vals_ref, vis_ref,
                          *, f_tile, big, big_key, idx_mask, sel_dtype):
    tile_vals, bestd = _raster_tile_body(
        pixh_ref[...], coef_ref[...], attr_ref[...],
        f_tile=f_tile, big=big, idx_mask=idx_mask, sel_dtype=sel_dtype)
    vis = (bestd < big_key).astype(jnp.float32)               # (1, P)
    vals_ref[...] = tile_vals * vis
    vis_ref[...] = vis


# --------------------------------------------------------------------------
# Pallas kernel 2: SH shading (add_SHlight) + albedo * shading + alpha composite
#   SH coeffs (with constant factors folded in) read as SMEM scalars; VPU-only.
# --------------------------------------------------------------------------
def _shade_kernel(sh_ref, n_ref, alb_ref, alpha_ref, shading_ref, img_ref):
    # sh_ref   : (B, 27) f32 in SMEM, layout sh[b, 9*c + k]
    # n_ref    : (3, P)  normals, alb_ref: (3, P), alpha_ref: (1, P)
    b = pl.program_id(0)
    n0 = n_ref[0:1, :]
    n1 = n_ref[1:2, :]
    n2 = n_ref[2:3, :]
    one = jnp.ones_like(n0)
    basis = (one, n0, n1, n2, n0 * n1, n0 * n2, n1 * n2,
             n0 * n0 - n1 * n1, 3.0 * n2 * n2 - 1.0)
    alpha = alpha_ref[...]
    bg = 1.0 - alpha
    for c in range(3):
        row = basis[0] * sh_ref[b, 9 * c]
        for k in range(1, 9):
            row = row + basis[k] * sh_ref[b, 9 * c + k]
        shading_ref[c:c + 1, :] = row
        img_ref[c:c + 1, :] = alb_ref[c:c + 1, :] * row * alpha + bg


# --------------------------------------------------------------------------
# Synthetic mesh (replaces load_obj — deterministic, in-script)
# --------------------------------------------------------------------------
def build_grid_mesh(G):
    n = G + 1
    u = np.linspace(0.0, 1.0, n, dtype=np.float32)
    uu, vv = np.meshgrid(u, u, indexing="xy")
    uv = np.stack([uu, vv], -1).reshape(-1, 2).astype(np.float32)
    x = uu * 2.0 - 1.0
    y = vv * 2.0 - 1.0
    z = 0.3 * np.sin(3.0 * x) * np.cos(2.0 * y)
    verts = np.stack([x, y, z], -1).reshape(-1, 3).astype(np.float32)
    faces = []
    for j in range(G):
        for i in range(G):
            v00 = j * n + i
            v01 = v00 + 1
            v10 = v00 + n
            v11 = v10 + 1
            faces.append([v00, v10, v01])
            faces.append([v01, v10, v11])
    return verts, uv, np.asarray(faces, np.int32)


# --------------------------------------------------------------------------
# SRenderY (Pallas/JAX)
# --------------------------------------------------------------------------
class SRenderYPallas:
    def __init__(self, image_size=16, uv_size=16, grid_res=4):
        self.image_size = image_size
        self.uv_size = uv_size
        self.sel_dtype = _select_mxu_dtype()
        verts, uv, faces = build_grid_mesh(grid_res)
        self.mesh_verts = jnp.asarray(verts)                       # (Nv,3)
        self.faces = jnp.asarray(faces)[None]                      # (1,Nf,3)
        self.raw_uvcoords = jnp.asarray(uv)[None]                  # (1,Nuv,2)

        uvcoords = jnp.concatenate(
            [self.raw_uvcoords, jnp.ones_like(self.raw_uvcoords[..., :1])], -1)
        uvcoords = uvcoords * 2.0 - 1.0
        uvcoords = uvcoords.at[..., 1].multiply(-1.0)
        self.uvcoords = uvcoords                                    # (1,Nuv,3)
        self.uvfaces = self.faces
        self.face_uvcoords = face_vertices(uvcoords, self.uvfaces)  # (1,Nf,3,3)

        pi = np.pi
        self.constant_factor = np.array(
            [1 / np.sqrt(4 * pi),
             2 * pi / 3 * np.sqrt(3 / (4 * pi)),
             2 * pi / 3 * np.sqrt(3 / (4 * pi)),
             2 * pi / 3 * np.sqrt(3 / (4 * pi)),
             pi / 4 * 3 * np.sqrt(5 / (12 * pi)),
             pi / 4 * 3 * np.sqrt(5 / (12 * pi)),
             pi / 4 * 3 * np.sqrt(5 / (12 * pi)),
             pi / 4 * (3 / 2) * np.sqrt(5 / (12 * pi)),
             pi / 4 * (1 / 2) * np.sqrt(5 / (4 * pi))], np.float32)

        # cache homogeneous pixel-center arrays per (h, w); pre-warm default size
        self._pix_cache = {}
        _, _, p_pad = self._pixel_tiling(image_size * image_size)
        self._pixel_centers(image_size, image_size, p_pad)

    @staticmethod
    def _pixel_tiling(P):
        p_tile = min(P_TILE_MAX, _round_up(P, 128))
        n_pt = pl.cdiv(P, p_tile)
        return p_tile, n_pt, n_pt * p_tile

    def _pixel_centers(self, h, w, P_pad):
        key = (h, w)
        cached = self._pix_cache.get(key)
        if cached is None:
            P = h * w
            yy, xx = np.meshgrid(np.arange(h), np.arange(w), indexing="ij")
            pix = np.zeros((3, P_pad), np.float32)
            pix[0, :P] = xx.reshape(-1) + 0.5
            pix[1, :P] = yy.reshape(-1) + 0.5
            pix[2, :] = 1.0
            cached = jnp.asarray(pix)
            self._pix_cache[key] = cached
        return cached

    # ---------------- StandardRasterizer equivalent (Pallas) ----------------
    def _rasterize(self, transformed_vertices, faces, attributes, h, w):
        B, Nf = faces.shape[0], faces.shape[1]
        D = attributes.shape[-1]

        v = transformed_vertices
        v = jnp.stack([v[..., 0] * (w / 2.0) + w / 2.0,
                       v[..., 1] * (h / 2.0) + h / 2.0,
                       v[..., 2] * (w / 2.0)], -1)
        # TODO(synk): exact pixel-center / tie-breaking convention of the original
        # standard_rasterize CUDA kernel is not published; we use pixel centers
        # (col+0.5, row+0.5) and nearest-depth / lowest-face-index wins.
        f_vs = face_vertices(v, faces).astype(jnp.float32)          # (B,Nf,3,3)

        # ---- per-face plane constants (hoisted out of the per-tile loop) ----
        x0, y0, z0 = f_vs[..., 0, 0], f_vs[..., 0, 1], f_vs[..., 0, 2]
        x1, y1, z1 = f_vs[..., 1, 0], f_vs[..., 1, 1], f_vs[..., 1, 2]
        x2, y2, z2 = f_vs[..., 2, 0], f_vs[..., 2, 1], f_vs[..., 2, 2]
        eps = 1e-8
        denom = (y1 - y2) * (x0 - x2) + (x2 - x1) * (y0 - y2)
        valid = jnp.abs(denom) >= eps
        inv = 1.0 / jnp.where(valid, denom, 1.0)
        a0 = (y1 - y2) * inv
        b0 = (x2 - x1) * inv
        a1 = (y2 - y0) * inv
        b1 = (x0 - x2) * inv
        c0 = -(a0 * x2 + b0 * y2)
        c1 = -(a1 * x2 + b1 * y2)
        dz0 = z0 - z2
        dz1 = z1 - z2
        da = a0 * dz0 + a1 * dz1
        db = b0 * dz0 + b1 * dz1
        dc = z2 + c0 * dz0 + c1 * dz1
        zero = jnp.zeros_like(a0)
        a0 = jnp.where(valid, a0, zero); b0 = jnp.where(valid, b0, zero)
        c0 = jnp.where(valid, c0, zero); a1 = jnp.where(valid, a1, zero)
        b1 = jnp.where(valid, b1, zero); c1 = jnp.where(valid, c1, zero)
        da = jnp.where(valid, da, zero); db = jnp.where(valid, db, zero)
        # degenerate faces: flat barycentrics, depth pushed to BIG => never visible
        dc = jnp.where(valid, dc, BIG_DEPTH)

        F_TILE = min(F_TILE_MAX, _round_up(Nf, 128))
        n_ft = pl.cdiv(Nf, F_TILE)
        F_pad = n_ft * F_TILE

        # stacked plane coefficients: rows [w0-plane | w1-plane | depth-plane]
        coef = jnp.stack([jnp.stack([a0, b0, c0], -1),
                          jnp.stack([a1, b1, c1], -1),
                          jnp.stack([da, db, dc], -1)], axis=1)      # (B,3,Nf,3)
        if F_pad > Nf:
            pad = jnp.zeros((B, 3, F_pad - Nf, 3), jnp.float32)
            pad = pad.at[:, 2, :, 2].set(BIG_DEPTH)
            coef = jnp.concatenate([coef, pad], axis=2)
        coef = coef.reshape(B, 3, n_ft, F_TILE, 3)
        coef = jnp.transpose(coef, (0, 2, 1, 3, 4)).reshape(B * n_ft, 3 * F_TILE, 3)

        # packed attribute matrix: columns [A0-A2 | A1-A2 | A2] per face tile
        attr = attributes.astype(jnp.float32)                        # (B,Nf,3,D)
        A0 = attr[:, :, 0, :]
        A1 = attr[:, :, 1, :]
        A2 = attr[:, :, 2, :]
        ap = jnp.stack([A0 - A2, A1 - A2, A2], axis=1)               # (B,3,Nf,D)
        if F_pad > Nf:
            ap = jnp.concatenate(
                [ap, jnp.zeros((B, 3, F_pad - Nf, D), jnp.float32)], axis=2)
        ap = ap.reshape(B, 3, n_ft, F_TILE, D)
        ap = jnp.transpose(ap, (0, 2, 4, 1, 3)).reshape(B * n_ft, D, 3 * F_TILE)
        ap = ap.astype(self.sel_dtype)

        P = h * w
        P_TILE, n_pt, P_pad = self._pixel_tiling(P)
        pixh = self._pixel_centers(h, w, P_pad)                      # (3, P_pad)

        common = dict(f_tile=F_TILE, big=BIG_DEPTH, big_key=BIG_KEY,
                      idx_mask=IDX_MASK, sel_dtype=self.sel_dtype)
        out_shape = (jax.ShapeDtypeStruct((B, D, P_pad), jnp.float32),
                     jax.ShapeDtypeStruct((B, 1, P_pad), jnp.float32))

        if n_ft == 1:
            # fast path: whole mesh in one face tile -> no reduction axis
            kernel = partial(_raster_single_kernel, **common)
            vals, vis = pl.pallas_call(
                kernel,
                out_shape=out_shape,
                grid=(B, n_pt),
                in_specs=[
                    pl.BlockSpec((3, P_TILE), lambda b, pj: (0, pj)),
                    pl.BlockSpec((None, 3 * F_TILE, 3), lambda b, pj: (b, 0, 0)),
                    pl.BlockSpec((None, D, 3 * F_TILE), lambda b, pj: (b, 0, 0)),
                ],
                out_specs=(pl.BlockSpec((None, D, P_TILE), lambda b, pj: (b, 0, pj)),
                           pl.BlockSpec((None, 1, P_TILE), lambda b, pj: (b, 0, pj))),
                compiler_params=pltpu.CompilerParams(
                    dimension_semantics=("parallel", "parallel"),
                    vmem_limit_bytes=VMEM_LIMIT),
            )(pixh, coef, ap)
        else:
            kernel = partial(_raster_stream_kernel, **common)
            vals, vis = pl.pallas_call(
                kernel,
                out_shape=out_shape,
                grid=(B, n_pt, n_ft),
                in_specs=[
                    pl.BlockSpec((3, P_TILE), lambda b, pj, fk: (0, pj)),
                    pl.BlockSpec((None, 3 * F_TILE, 3),
                                 lambda b, pj, fk: (b * n_ft + fk, 0, 0)),
                    pl.BlockSpec((None, D, 3 * F_TILE),
                                 lambda b, pj, fk: (b * n_ft + fk, 0, 0)),
                ],
                out_specs=(pl.BlockSpec((None, D, P_TILE),
                                        lambda b, pj, fk: (b, 0, pj)),
                           pl.BlockSpec((None, 1, P_TILE),
                                        lambda b, pj, fk: (b, 0, pj))),
                scratch_shapes=[pltpu.VMEM((1, P_TILE), jnp.int32)],
                compiler_params=pltpu.CompilerParams(
                    dimension_semantics=("parallel", "parallel", "arbitrary"),
                    vmem_limit_bytes=VMEM_LIMIT),
            )(pixh, coef, ap)
        return vals, vis, P_TILE, n_pt, P_pad

    # ------------------------------ forward --------------------------------
    def forward(self, vertices, transformed_vertices, albedos, lights=None,
                light_type="point", background=None, h=None, w=None):
        B = vertices.shape[0]
        h = self.image_size if h is None else h
        w = self.image_size if w is None else w
        P = h * w

        tv = transformed_vertices
        z = tv[:, :, 2]
        z = z - z.min()
        z = z / z.max()
        z = z * 80.0 + 10.0
        tv = tv.at[:, :, 2].set(z)

        faces = jnp.broadcast_to(self.faces, (B,) + self.faces.shape[1:])
        face_verts = face_vertices(vertices, faces)
        normals = vertex_normals(vertices, faces)
        face_normals_ = face_vertices(normals, faces)
        t_normals = vertex_normals(tv, faces)
        t_face_normals = face_vertices(t_normals, faces)
        face_uv = jnp.broadcast_to(self.face_uvcoords,
                                   (B,) + self.face_uvcoords.shape[1:])
        # TODO(synk): attributes could be built directly channel-major to avoid
        # the wrapper-side transpose in _rasterize's packing.
        attributes = jnp.concatenate(
            [face_uv, t_face_normals, face_verts, face_normals_], -1)  # (B,Nf,3,12)

        vals_flat, vis_flat, P_TILE, n_pt, P_pad = self._rasterize(
            tv, faces, attributes, h, w)                 # (B,12,P_pad), (B,1,P_pad)

        alpha_images = vis_flat[:, :, :P].reshape(B, 1, h, w)

        grid = jnp.transpose(vals_flat[:, :2, :P].reshape(B, 2, h, w), (0, 2, 3, 1))
        albedo_images = grid_sample_bilinear(albedos, grid)            # (B,3,h,w)

        transformed_normal_map = vals_flat[:, 3:6, :P].reshape(B, 3, h, w)
        pos_mask = (transformed_normal_map[:, 2:, :, :] < -0.05).astype(jnp.float32)

        normal_images = vals_flat[:, 9:12, :P].reshape(B, 3, h, w)

        if lights is not None and lights.shape[1] == 9:
            # fold SH constant factors into the coefficients (scalar table in SMEM)
            cf = jnp.asarray(self.constant_factor)                     # (9,)
            sh_flat = (jnp.transpose(lights.astype(jnp.float32), (0, 2, 1))
                       * cf[None, None, :]).reshape(B, 27)             # (B,27)

            # shade tile is decoupled from the raster tile (HBM-bandwidth bound)
            S_TILE = min(SHADE_TILE_MAX, _round_up(P, 128))
            n_st = pl.cdiv(P, S_TILE)
            P_sh = n_st * S_TILE

            def flat_pad(x):                                           # (B,C,P)->(B,C,P_sh)
                if P_sh > P:
                    return jnp.pad(x, ((0, 0), (0, 0), (0, P_sh - P)))
                return x

            normal_flat = flat_pad(vals_flat[:, 9:12, :P])
            albedo_flat = flat_pad(albedo_images.reshape(B, 3, P))
            alpha_flat = flat_pad(vis_flat[:, :, :P])

            shading_flat, images_flat = pl.pallas_call(
                _shade_kernel,
                out_shape=(jax.ShapeDtypeStruct((B, 3, P_sh), jnp.float32),
                           jax.ShapeDtypeStruct((B, 3, P_sh), jnp.float32)),
                grid=(B, n_st),
                in_specs=[
                    pl.BlockSpec(memory_space=pltpu.MemorySpace.SMEM),
                    pl.BlockSpec((None, 3, S_TILE), lambda b, pj: (b, 0, pj)),
                    pl.BlockSpec((None, 3, S_TILE), lambda b, pj: (b, 0, pj)),
                    pl.BlockSpec((None, 1, S_TILE), lambda b, pj: (b, 0, pj)),
                ],
                out_specs=(pl.BlockSpec((None, 3, S_TILE), lambda b, pj: (b, 0, pj)),
                           pl.BlockSpec((None, 3, S_TILE), lambda b, pj: (b, 0, pj))),
                compiler_params=pltpu.CompilerParams(
                    dimension_semantics=("parallel", "parallel"),
                    vmem_limit_bytes=VMEM_LIMIT),
            )(sh_flat, normal_flat, albedo_flat, alpha_flat)
            shading_images = shading_flat[:, :, :P].reshape(B, 3, h, w)
            images = images_flat[:, :, :P].reshape(B, 3, h, w)
            if background is not None:
                images = (albedo_images * shading_images * alpha_images
                          + background * (1.0 - alpha_images))
        else:
            # TODO(synk): point/directional light paths not implemented
            # (this forward targets SH lighting, matching the reference usage).
            shading_images = jnp.zeros_like(albedo_images)
            bg = jnp.ones_like(albedo_images) if background is None else background
            images = albedo_images * alpha_images + bg * (1.0 - alpha_images)

        return {
            "images": images,
            "albedo_images": albedo_images,
            "alpha_images": alpha_images,
            "pos_mask": pos_mask,
            "shading_images": shading_images,
            "grid": grid,
            "normals": normals,
            "normal_images": normal_images,
            "transformed_normals": t_normals,
        }


# --------------------------------------------------------------------------
if __name__ == "__main__":
    # main run: P = 1024 -> 2 pixel tiles, Nf = 288 -> 2 face tiles (streamed path)
    IMG, UV, GRID_RES, B = 32, 16, 12, 2
    renderer = SRenderYPallas(image_size=IMG, uv_size=UV, grid_res=GRID_RES)
    Nv = renderer.mesh_verts.shape[0]

    key = jax.random.PRNGKey(0)
    k1, k2, k3, k4 = jax.random.split(key, 4)
    base = jnp.broadcast_to(renderer.mesh_verts[None], (B, Nv, 3))
    vertices = base + 0.05 * jax.random.normal(k1, (B, Nv, 3), jnp.float32)
    transformed_vertices = (0.9 * base
                            + 0.05 * jax.random.normal(k2, (B, Nv, 3), jnp.float32))
    albedos = jax.random.uniform(k3, (B, 3, UV, UV), jnp.float32)
    lights = 0.3 * jax.random.normal(k4, (B, 9, 3), jnp.float32)
    lights = lights.at[:, 0, :].add(2.0)  # positive ambient SH band

    outputs = renderer.forward(vertices, transformed_vertices, albedos, lights=lights)
    jax.block_until_ready(outputs["images"])
    jax.block_until_ready(outputs["shading_images"])
    jax.block_until_ready(outputs["alpha_images"])
    assert outputs["images"].shape == (B, 3, IMG, IMG)
    assert outputs["alpha_images"].shape == (B, 1, IMG, IMG)
    assert outputs["normal_images"].shape == (B, 3, IMG, IMG)
    assert outputs["shading_images"].shape == (B, 3, IMG, IMG)
    assert bool(jnp.all(jnp.isfinite(outputs["images"])))

    # secondary run: single-face-tile mesh exercises the no-reduction fast path
    renderer2 = SRenderYPallas(image_size=16, uv_size=8, grid_res=8)   # Nf = 128
    Nv2 = renderer2.mesh_verts.shape[0]
    base2 = jnp.broadcast_to(renderer2.mesh_verts[None], (B, Nv2, 3))
    verts2 = base2 + 0.05 * jax.random.normal(k1, (B, Nv2, 3), jnp.float32)
    tverts2 = 0.9 * base2 + 0.05 * jax.random.normal(k2, (B, Nv2, 3), jnp.float32)
    albedos2 = jax.random.uniform(k3, (B, 3, 8, 8), jnp.float32)
    out2 = renderer2.forward(verts2, tverts2, albedos2, lights=None)
    jax.block_until_ready(out2["images"])
    assert out2["images"].shape == (B, 3, 16, 16)
    assert bool(jnp.all(jnp.isfinite(out2["images"])))

    print("KERNEL_OK")
</pallas_src>

<mosaic_0001>
module attributes {stable_mosaic.version = 11 : i64} {
  func.func @_raster_stream_kernel(%arg0: i32, %arg1: i32, %arg2: i32, %arg3: memref<3x512xf32, #tpu.memory_space<vmem>>, %arg4: memref<1x768x3xf32, #tpu.memory_space<vmem>>, %arg5: memref<1x12x768xbf16, #tpu.memory_space<vmem>>, %arg6: memref<1x12x512xf32, #tpu.memory_space<vmem>>, %arg7: memref<1x1x512xf32, #tpu.memory_space<vmem>>, %arg8: memref<1x512xi32, #tpu.memory_space<vmem>>) attributes {dimension_semantics = [#tpu.dimension_semantics<parallel>, #tpu.dimension_semantics<parallel>, #tpu.dimension_semantics<arbitrary>], iteration_bounds = array<i64: 2, 2, 2>, scalar_prefetch = 0 : i64, scratch_operands = 1 : i64, tpu.core_type = #tpu.core_type<tc>, window_params = [{transform_indices = @transform_0, window_bounds = array<i64: 3, 512>}, {transform_indices = @transform_1, window_bounds = array<i64: 1, 768, 3>}, {transform_indices = @transform_2, window_bounds = array<i64: 1, 12, 768>}, {transform_indices = @transform_3, window_bounds = array<i64: 1, 12, 512>}, {transform_indices = @transform_4, window_bounds = array<i64: 1, 1, 512>}]} {
    %c0_i32 = arith.constant 0 : i32
    %0 = arith.cmpi eq, %arg2, %c0_i32 : i32
    %1 = arith.extui %0 : i1 to i32
    %c0_i32_0 = arith.constant 0 : i32
    %2 = arith.cmpi ne, %1, %c0_i32_0 : i32
    scf.if %2 {
      %cst_33 = arith.constant 0.000000e+00 : f32
      %70 = vector.broadcast %cst_33 : f32 to vector<12x512xf32>
      %c0_34 = arith.constant 0 : index
      %c0_35 = arith.constant 0 : index
      %c0_36 = arith.constant 0 : index
      %71 = vector.load %arg6[%c0_34, %c0_35, %c0_36] : memref<1x12x512xf32, #tpu.memory_space<vmem>>, vector<1x12x512xf32>
      %72 = vector.shape_cast %71 : vector<1x12x512xf32> to vector<12x512xf32>
      %73 = vector.shape_cast %70 : vector<12x512xf32> to vector<1x12x512xf32>
      tpu.vector_store %arg6[%c0_34, %c0_35, %c0_36], %73 {strides = array<i32>} : memref<1x12x512xf32, #tpu.memory_space<vmem>>, vector<1x12x512xf32>,
      %c1232348160_i32 = arith.constant 1232348160 : i32
      %74 = vector.broadcast %c1232348160_i32 : i32 to vector<1x512xi32>
      %c0_37 = arith.constant 0 : index
      %c0_38 = arith.constant 0 : index
      %75 = vector.load %arg8[%c0_37, %c0_38] : memref<1x512xi32, #tpu.memory_space<vmem>>, vector<1x512xi32>
      tpu.vector_store %arg8[%c0_37, %c0_38], %74 {strides = array<i32>} : memref<1x512xi32, #tpu.memory_space<vmem>>, vector<1x512xi32>,
    } else {
    }
    %c0 = arith.constant 0 : index
    %c0_1 = arith.constant 0 : index
    %3 = vector.load %arg3[%c0, %c0_1] : memref<3x512xf32, #tpu.memory_space<vmem>>, vector<3x512xf32>
    %c0_2 = arith.constant 0 : index
    %c0_3 = arith.constant 0 : index
    %c0_4 = arith.constant 0 : index
    %4 = vector.load %arg4[%c0_2, %c0_3, %c0_4] : memref<1x768x3xf32, #tpu.memory_space<vmem>>, vector<1x768x3xf32>
    %5 = vector.shape_cast %4 : vector<1x768x3xf32> to vector<768x3xf32>
    %c0_5 = arith.constant 0 : index
    %c0_6 = arith.constant 0 : index
    %c0_7 = arith.constant 0 : index
    %6 = vector.load %arg5[%c0_5, %c0_6, %c0_7] : memref<1x12x768xbf16, #tpu.memory_space<vmem>>, vector<1x12x768xbf16>
    %7 = vector.shape_cast %6 : vector<1x12x768xbf16> to vector<12x768xbf16>
    %cst = arith.constant dense<0.000000e+00> : vector<768x512xf32>
    %8 = tpu.matmul %5, %3, %cst {dimension_numbers = #tpu.dot_dimension_numbers<[1], [0], [0], [1], [0, 0, 1, 1], [], []>} : vector<768x3xf32>, vector<3x512xf32>, vector<768x512xf32> -> vector<768x512xf32>
    %9 = vector.extract_strided_slice %8 {offsets = [0, 0], sizes = [256, 512], strides = [1, 1]} : vector<768x512xf32> to vector<256x512xf32>
    %10 = vector.extract_strided_slice %8 {offsets = [256, 0], sizes = [256, 512], strides = [1, 1]} : vector<768x512xf32> to vector<256x512xf32>
    %11 = vector.extract_strided_slice %8 {offsets = [512, 0], sizes = [256, 512], strides = [1, 1]} : vector<768x512xf32> to vector<256x512xf32>
    %12 = arith.minimumf %9, %10 : vector<256x512xf32>
    %cst_8 = arith.constant 1.000000e+00 : f32
    %13 = vector.broadcast %cst_8 : f32 to vector<256x512xf32>
    %14 = arith.subf %13, %9 : vector<256x512xf32>
    %15 = arith.subf %14, %10 : vector<256x512xf32>
    %16 = arith.minimumf %12, %15 : vector<256x512xf32>
    %cst_9 = arith.constant 0.000000e+00 : f32
    %17 = vector.broadcast %cst_9 : f32 to vector<256x512xf32>
    %18 = arith.cmpf oge, %16, %17 : vector<256x512xf32>
    %cst_10 = arith.constant 0.000000e+00 : f32
    %19 = vector.broadcast %cst_10 : f32 to vector<256x512xf32>
    %20 = arith.cmpf oge, %11, %19 : vector<256x512xf32>
    %21 = arith.andi %18, %20 : vector<256x512xi1>
    %22 = math.absf %11 : vector<256x512xf32>
    %cst_11 = arith.constant 1.000000e+06 : f32
    %23 = vector.broadcast %cst_11 : f32 to vector<256x512xf32>
    %24 = arith.select %21, %22, %23 : vector<256x512xi1>, vector<256x512xf32>
    %25 = tpu.iota {dimensions = array<i32: 0>} : vector<256x1xi32>
    %26 = tpu.bitcast %24 : vector<256x512xf32> -> vector<256x512xi32>
    %c-256_i32 = arith.constant -256 : i32
    %27 = vector.broadcast %c-256_i32 : i32 to vector<256x512xi32>
    %28 = arith.andi %26, %27 : vector<256x512xi32>
    %29 = vector.broadcast %25 : vector<256x1xi32> to vector<256x512xi32>
    %30 = arith.ori %28, %29 : vector<256x512xi32>
    %cst_12 = arith.constant dense<2147483647> : vector<512xi32>
    %31 = vector.multi_reduction <minsi>, %30, %cst_12 [0] : vector<256x512xi32> to vector<512xi32>
    %32 = vector.shape_cast %31 : vector<512xi32> to vector<1x512xi32>
    %c-256_i32_13 = arith.constant -256 : i32
    %33 = vector.broadcast %c-256_i32_13 : i32 to vector<1x512xi32>
    %34 = arith.andi %32, %33 : vector<1x512xi32>
    %35 = vector.broadcast %32 : vector<1x512xi32> to vector<256x512xi32>
    %36 = arith.cmpi eq, %30, %35 : vector<256x512xi32>
    %cst_14 = arith.constant 0.000000e+00 : f32
    %37 = vector.broadcast %cst_14 : f32 to vector<256x512xf32>
    %38 = arith.select %36, %9, %37 : vector<256x512xi1>, vector<256x512xf32>
    %39 = arith.truncf %38 : vector<256x512xf32> to vector<256x512xbf16>
    %40 = arith.select %36, %10, %37 : vector<256x512xi1>, vector<256x512xf32>
    %41 = arith.truncf %40 : vector<256x512xf32> to vector<256x512xbf16>
    %cst_15 = arith.constant 1.000000e+00 : f32
    %cst_16 = arith.constant 0.000000e+00 : f32
    %42 = vector.broadcast %cst_15 : f32 to vector<256x512xf32>
    %43 = vector.broadcast %cst_16 : f32 to vector<256x512xf32>
    %44 = arith.select %36, %42, %43 : vector<256x512xi1>, vector<256x512xf32>
    %45 = arith.truncf %44 : vector<256x512xf32> to vector<256x512xbf16>
    %46 = vector.extract_strided_slice %7 {offsets = [0, 0], sizes = [12, 256], strides = [1, 1]} : vector<12x768xbf16> to vector<12x256xbf16>
    %47 = vector.extract_strided_slice %7 {offsets = [0, 256], sizes = [12, 256], strides = [1, 1]} : vector<12x768xbf16> to vector<12x256xbf16>
    %48 = vector.extract_strided_slice %7 {offsets = [0, 512], sizes = [12, 256], strides = [1, 1]} : vector<12x768xbf16> to vector<12x256xbf16>
    %cst_17 = arith.constant dense<0.000000e+00> : vector<12x512xf32>
    %49 = tpu.matmul %46, %39, %cst_17 {dimension_numbers = #tpu.dot_dimension_numbers<[1], [0], [0], [1], [0, 0, 1, 1], [], []>} : vector<12x256xbf16>, vector<256x512xbf16>, vector<12x512xf32> -> vector<12x512xf32>
    %cst_18 = arith.constant dense<0.000000e+00> : vector<12x512xf32>
    %50 = tpu.matmul %47, %41, %cst_18 {dimension_numbers = #tpu.dot_dimension_numbers<[1], [0], [0], [1], [0, 0, 1, 1], [], []>} : vector<12x256xbf16>, vector<256x512xbf16>, vector<12x512xf32> -> vector<12x512xf32>
    %51 = arith.addf %49, %50 : vector<12x512xf32>
    %cst_19 = arith.constant dense<0.000000e+00> : vector<12x512xf32>
    %52 = tpu.matmul %48, %45, %cst_19 {dimension_numbers = #tpu.dot_dimension_numbers<[1], [0], [0], [1], [0, 0, 1, 1], [], []>} : vector<12x256xbf16>, vector<256x512xbf16>, vector<12x512xf32> -> vector<12x512xf32>
    %53 = arith.addf %51, %52 : vector<12x512xf32>
    %c0_20 = arith.constant 0 : index
    %c0_21 = arith.constant 0 : index
    %54 = vector.load %arg8[%c0_20, %c0_21] : memref<1x512xi32, #tpu.memory_space<vmem>>, vector<1x512xi32>
    %55 = arith.cmpi slt, %34, %54 : vector<1x512xi32>
    %c0_22 = arith.constant 0 : index
    %c0_23 = arith.constant 0 : index
    %56 = vector.load %arg8[%c0_22, %c0_23] : memref<1x512xi32, #tpu.memory_space<vmem>>, vector<1x512xi32>
    %57 = arith.select %55, %34, %56 : vector<1x512xi1>, vector<1x512xi32>
    %c0_24 = arith.constant 0 : index
    %c0_25 = arith.constant 0 : index
    %58 = vector.load %arg8[%c0_24, %c0_25] : memref<1x512xi32, #tpu.memory_space<vmem>>, vector<1x512xi32>
    tpu.vector_store %arg8[%c0_24, %c0_25], %57 {strides = array<i32>} : memref<1x512xi32, #tpu.memory_space<vmem>>, vector<1x512xi32>,
    %c0_26 = arith.constant 0 : index
    %c0_27 = arith.constant 0 : index
    %c0_28 = arith.constant 0 : index
    %59 = vector.load %arg6[%c0_26, %c0_27, %c0_28] : memref<1x12x512xf32, #tpu.memory_space<vmem>>, vector<1x12x512xf32>
    %60 = vector.shape_cast %59 : vector<1x12x512xf32> to vector<12x512xf32>
    %61 = vector.shape_cast %55 : vector<1x512xi1> to vector<1x512xi1>
    %62 = vector.broadcast %61 : vector<1x512xi1> to vector<12x512xi1>
    %63 = arith.select %62, %53, %60 : vector<12x512xi1>, vector<12x512xf32>
    %c0_29 = arith.constant 0 : index
    %c0_30 = arith.constant 0 : index
    %c0_31 = arith.constant 0 : index
    %64 = vector.load %arg6[%c0_29, %c0_30, %c0_31] : memref<1x12x512xf32, #tpu.memory_space<vmem>>, vector<1x12x512xf32>
    %65 = vector.shape_cast %64 : vector<1x12x512xf32> to vector<12x512xf32>
    %66 = vector.shape_cast %63 : vector<12x512xf32> to vector<1x12x512xf32>
    tpu.vector_store %arg6[%c0_29, %c0_30, %c0_31], %66 {strides = array<i32>} : memref<1x12x512xf32, #tpu.memory_space<vmem>>, vector<1x12x512xf32>,
    %c1_i32 = arith.constant 1 : i32
    %67 = arith.cmpi eq, %arg2, %c1_i32 : i32
    %68 = arith.extui %67 : i1 to i32
    %c0_i32_32 = arith.constant 0 : i32
    %69 = arith.cmpi ne, %68, %c0_i32_32 : i32
    scf.if %69 {
      %c0_33 = arith.constant 0 : index
      %c0_34 = arith.constant 0 : index
      %70 = vector.load %arg8[%c0_33, %c0_34] : memref<1x512xi32, #tpu.memory_space<vmem>>, vector<1x512xi32>
      %c1232348160_i32 = arith.constant 1232348160 : i32
      %71 = vector.broadcast %c1232348160_i32 : i32 to vector<1x512xi32>
      %72 = arith.cmpi slt, %70, %71 : vector<1x512xi32>
      %73 = arith.extui %72 : vector<1x512xi1> to vector<1x512xi32>
      %74 = arith.sitofp %73 : vector<1x512xi32> to vector<1x512xf32>
      %c0_35 = arith.constant 0 : index
      %c0_36 = arith.constant 0 : index
      %c0_37 = arith.constant 0 : index
      %75 = vector.load %arg7[%c0_35, %c0_36, %c0_37] : memref<1x1x512xf32, #tpu.memory_space<vmem>>, vector<1x1x512xf32>
      %76 = vector.shape_cast %75 : vector<1x1x512xf32> to vector<1x512xf32>
      %77 = vector.shape_cast %74 : vector<1x512xf32> to vector<1x1x512xf32>
      tpu.vector_store %arg7[%c0_35, %c0_36, %c0_37], %77 {strides = array<i32>} : memref<1x1x512xf32, #tpu.memory_space<vmem>>, vector<1x1x512xf32>,
    } else {
    }
    return
  }
  func.func @transform_0(%arg0: i32, %arg1: i32, %arg2: i32) -> (i32, i32) {
    %c0_i32 = arith.constant 0 : i32
    %c0_i32_0 = arith.constant 0 : i32
    return %c0_i32, %arg1 : i32, i32
  }
  func.func @transform_1(%arg0: i32, %arg1: i32, %arg2: i32) -> (i32, i32, i32) {
    %c2_i32 = arith.constant 2 : i32
    %0 = arith.muli %arg0, %c2_i32 : i32
    %1 = arith.addi %0, %arg2 : i32
    %c0_i32 = arith.constant 0 : i32
    %c0_i32_0 = arith.constant 0 : i32
    %c0_i32_1 = arith.constant 0 : i32
    return %1, %c0_i32, %c0_i32_0 : i32, i32, i32
  }
  func.func @transform_2(%arg0: i32, %arg1: i32, %arg2: i32) -> (i32, i32, i32) {
    %c2_i32 = arith.constant 2 : i32
    %0 = arith.muli %arg0, %c2_i32 : i32
    %1 = arith.addi %0, %arg2 : i32
    %c0_i32 = arith.constant 0 : i32
    %c0_i32_0 = arith.constant 0 : i32
    %c0_i32_1 = arith.constant 0 : i32
    return %1, %c0_i32, %c0_i32_0 : i32, i32, i32
  }
  func.func @transform_3(%arg0: i32, %arg1: i32, %arg2: i32) -> (i32, i32, i32) {
    %c0_i32 = arith.constant 0 : i32
    %c0_i32_0 = arith.constant 0 : i32
    return %arg0, %c0_i32, %arg1 : i32, i32, i32
  }
  func.func @transform_4(%arg0: i32, %arg1: i32, %arg2: i32) -> (i32, i32, i32) {
    %c0_i32 = arith.constant 0 : i32
    %c0_i32_0 = arith.constant 0 : i32
    return %arg0, %c0_i32, %arg1 : i32, i32, i32
  }
}

</mosaic_0001>

<llo_original>
// kernel: tpu_custom_call.1
$region0: #{tpu_custom_call.1}
  #allocation0 [shape = 'u32[]', space=smem, size = 0x4, offset = 0x4, fixed_abs, tag = 'smem constant byte address 0x4 - core index']
  #allocation1 [shape = 'u32[144,128]{1,0:T(1,128)}', space=vmem, size = 0x12000, scoped, tag = 'internal scratch']
  #allocation2 [shape = 's32[1,512]{1,0:T(1,128)}', space=vmem, size = 0x800, scoped, tag = 'scratch operand']
  %s0 = inlined_call_operand.vmem [shape: f32[3,1024], index: 0, kind: input, shape index: {}]
  %s1 = inlined_call_operand.vmem [shape: f32[4,768,3], index: 1, kind: input, shape index: {}]
  %s2 = inlined_call_operand.vmem [shape: bf16[4,12,768], index: 2, kind: input, shape index: {}]
  %s3 = inlined_call_operand.vmem [shape: f32[2,12,1024], index: 3, kind: output, shape index: {0}]
  %s4 = inlined_call_operand.hbm [shape: f32[2,1,1024], index: 4, kind: output, shape index: {1}]
  %5 = xla_tuple %s3, %s4
  %s6 = sld [smem:[#allocation0]]
  $region80: #{tpu_custom_call.1} parent=0
    _
  %s8 = ssub.s32 1, %s6
  %s9 = scalar_select 0, %s8, %s6
  $region1: #{tpu_custom_call.1} parent=0
    #allocation3 [shape = 'u8[65536]{0}', space=vmem, size = 0x10000, scoped, tag = 'output window, operand 0']
    #allocation4 [shape = 'u8[4096]{0}', space=vmem, size = 0x1000, scoped, tag = 'output window, operand 1']
    #allocation5 [shape = 's32[2]{0}', space=sflag, size = 0x8, scoped, tag = 'scoped memory for tpu_custom_call.1']
    %10 = vsyncpa [#allocation5], 0
    %s11 = scalar_lea.sflag [#allocation5], 1
    %12 = vsyncpa %s11, 0
    loop: start=0, step=1, limit=10
    $region2: #{tpu_custom_call.1} parent=1 // loop_pre_header
      _
    $region3: #{tpu_custom_call.1} parent=1 // loop_header
      %s14 = sphi 0, %s18
      %p15 = scmp.ge.s32.totalorder %s14, 10
      %s21 = sphi 0, %s40
      %s22 = sphi 0, %s36
      %s23 = sphi 0, %s32
      %s24 = sphi 0, %s21
      %s25 = sphi 0, %s22
      %s26 = sphi 0, %s23
      %s27 = sphi 0, %s24
      %s28 = sphi 0, %s25
      %s29 = sphi 0, %s26
      %s43 = sphi 0, %s45
      %s46 = sphi 0, %s43
      %s47 = sphi 0, %s46
      %s63 = sphi 0, %s47
      %s73 = sphi 0, %s75
      %s76 = sphi 0, %s73
      %s77 = sphi 0, %s76
      %s93 = sphi 0, %s77
      %s103 = sphi 0, %s105
      %s106 = sphi 0, %s103
      %s107 = sphi 0, %s106
      %s123 = sphi 0, %s107
      %s131 = sphi 0, %s133
      %s134 = sphi 0, %s131
      %s135 = sphi 0, %s134
      %s151 = sphi 0, %s135
      %s159 = sphi 0, %s161
      %s162 = sphi 0, %s159
      %s163 = sphi 0, %s162
      %s179 = sphi 0, %s163
    $region4: #{tpu_custom_call.1} parent=1 // loop_header_branch
      %17 = sbr.rel (%p15) target = $region8
    $region5: #{tpu_custom_call.1} parent=1 // loop_body
      %s19 = ssub.s32 %s14, 1
      %s20 = ssub.s32 %s14, 2
      %s30 = sadd.s32 1, %s23
      %p31 = scmp.ge.s32.totalorder %s30, 2
      %s32 = scalar_select %p31, 0, %s30
      %s33 = sadd.s32 1, %s22
      %s34 = scalar_select %p31, %s33, %s22
      %p35 = scmp.ge.s32.totalorder %s34, 2
      %s36 = scalar_select %p35, 0, %s34
      %s37 = sadd.s32 1, %s21
      %s38 = scalar_select %p35, %s37, %s21
      %p39 = scmp.ge.s32.totalorder %s38, 2
      %s40 = scalar_select %p39, 0, %s38
      %s41 = ssub.s32 %s22, %s36
      %p42 = scmp.eq.s32.totalorder %s41, 0
      %s44 = sadd.s32 %s43, 1
      %s45 = scalar_select %p42, %s43, %s44
      %p48 = pneg %p42
      %p49 = scmp.eq.s32.totalorder %s14, 7
      %p50 = por %p48, %p49
      %p51 = scmp.ne.s32.totalorder %s43, %s46
      %p52 = scmp.eq.s32.totalorder %s14, 0
      %p53 = por %p51, %p52
      %p54 = scmp.ne.s32.totalorder %s43, %s46
      %p55 = scmp.eq.s32.totalorder %s19, 7
      %p56 = por %p54, %p55
      %p57 = scmp.ne.s32.totalorder %s46, %s47
      %p58 = scmp.eq.s32.totalorder %s19, 0
      %p59 = por %p57, %p58
      %p60 = scmp.ne.s32.totalorder %s46, %s47
      %p61 = scmp.eq.s32.totalorder %s20, 7
      %p62 = por %p60, %p61
      %p64 = scmp.ne.s32.totalorder %s47, %s63
      %p65 = scmp.eq.s32.totalorder %s20, 0
      %p66 = por %p64, %p65
      %s67 = smul.u32 %s21, 2
      %s68 = sadd.s32 %s67, %s23
      %s69 = smul.u32 %s40, 2
      %s70 = sadd.s32 %s69, %s32
      %s71 = ssub.s32 %s68, %s70
      %p72 = scmp.eq.s32.totalorder %s71, 0
      %s74 = sadd.s32 %s73, 1
      %s75 = scalar_select %p72, %s73, %s74
      %p78 = pneg %p72
      %p79 = scmp.eq.s32.totalorder %s14, 7
      %p80 = por %p78, %p79
      %p81 = scmp.ne.s32.totalorder %s73, %s76
      %p82 = scmp.eq.s32.totalorder %s14, 0
      %p83 = por %p81, %p82
      %p84 = scmp.ne.s32.totalorder %s73, %s76
      %p85 = scmp.eq.s32.totalorder %s19, 7
      %p86 = por %p84, %p85
      %p87 = scmp.ne.s32.totalorder %s76, %s77
      %p88 = scmp.eq.s32.totalorder %s19, 0
      %p89 = por %p87, %p88
      %p90 = scmp.ne.s32.totalorder %s76, %s77
      %p91 = scmp.eq.s32.totalorder %s20, 7
      %p92 = por %p90, %p91
      %p94 = scmp.ne.s32.totalorder %s77, %s93
      %p95 = scmp.eq.s32.totalorder %s20, 0
      %p96 = por %p94, %p95
      %s97 = smul.u32 %s21, 2
      %s98 = sadd.s32 %s97, %s23
      %s99 = smul.u32 %s40, 2
      %s100 = sadd.s32 %s99, %s32
      %s101 = ssub.s32 %s98, %s100
      %p102 = scmp.eq.s32.totalorder %s101, 0
      %s104 = sadd.s32 %s103, 1
      %s105 = scalar_select %p102, %s103, %s104
      %p108 = pneg %p102
      %p109 = scmp.eq.s32.totalorder %s14, 7
      %p110 = por %p108, %p109
      %p111 = scmp.ne.s32.totalorder %s103, %s106
      %p112 = scmp.eq.s32.totalorder %s14, 0
      %p113 = por %p111, %p112
      %p114 = scmp.ne.s32.totalorder %s103, %s106
      %p115 = scmp.eq.s32.totalorder %s19, 7
      %p116 = por %p114, %p115
      %p117 = scmp.ne.s32.totalorder %s106, %s107
      %p118 = scmp.eq.s32.totalorder %s19, 0
      %p119 = por %p117, %p118
      %p120 = scmp.ne.s32.totalorder %s106, %s107
      %p121 = scmp.eq.s32.totalorder %s20, 7
      %p122 = por %p120, %p121
      %p124 = scmp.ne.s32.totalorder %s107, %s123
      %p125 = scmp.eq.s32.totalorder %s20, 0
      %p126 = por %p124, %p125
      %s127 = ssub.s32 %s21, %s40
      %s128 = ssub.s32 %s22, %s36
      %s129 = sor.u32 %s127, %s128
      %p130 = scmp.eq.s32.totalorder %s129, 0
      %s132 = sadd.s32 %s131, 1
      %s133 = scalar_select %p130, %s131, %s132
      %p136 = pneg %p130
      %p137 = scmp.eq.s32.totalorder %s14, 7
      %p138 = por %p136, %p137
      %p139 = scmp.ne.s32.totalorder %s131, %s134
      %p140 = scmp.eq.s32.totalorder %s14, 0
      %p141 = por %p139, %p140
      %p142 = scmp.ne.s32.totalorder %s131, %s134
      %p143 = scmp.eq.s32.totalorder %s19, 7
      %p144 = por %p142, %p143
      %p145 = scmp.ne.s32.totalorder %s134, %s135
      %p146 = scmp.eq.s32.totalorder %s19, 0
      %p147 = por %p145, %p146
      %p148 = scmp.ne.s32.totalorder %s134, %s135
      %p149 = scmp.eq.s32.totalorder %s20, 7
      %p150 = por %p148, %p149
      %p152 = scmp.ne.s32.totalorder %s135, %s151
      %p153 = scmp.eq.s32.totalorder %s20, 0
      %p154 = por %p152, %p153
      %s155 = ssub.s32 %s21, %s40
      %s156 = ssub.s32 %s22, %s36
      %s157 = sor.u32 %s155, %s156
      %p158 = scmp.eq.s32.totalorder %s157, 0
      %s160 = sadd.s32 %s159, 1
      %s161 = scalar_select %p158, %s159, %s160
      %p164 = pneg %p158
      %p165 = scmp.eq.s32.totalorder %s14, 7
      %p166 = por %p164, %p165
      %p167 = scmp.ne.s32.totalorder %s159, %s162
      %p168 = scmp.eq.s32.totalorder %s14, 0
      %p169 = por %p167, %p168
      %p170 = scmp.ne.s32.totalorder %s159, %s162
      %p171 = scmp.eq.s32.totalorder %s19, 7
      %p172 = por %p170, %p171
      %p173 = scmp.ne.s32.totalorder %s162, %s163
      %p174 = scmp.eq.s32.totalorder %s19, 0
      %p175 = por %p173, %p174
      %p176 = scmp.ne.s32.totalorder %s162, %s163
      %p177 = scmp.eq.s32.totalorder %s20, 7
      %p178 = por %p176, %p177
      %p180 = scmp.ne.s32.totalorder %s163, %s179
      %p181 = scmp.eq.s32.totalorder %s20, 0
      %p182 = por %p180, %p181
      %p183 = scmp.le.s32.totalorder 1, %s14
      %p184 = scmp.lt.s32.totalorder %s14, 9
      %p185 = pnand %p183, %p184
      %p186 = pneg %p185
      // Predicated region
      $region9: #{tpu_custom_call.1} parent=5 // pred_check
        _
      $region10: #{tpu_custom_call.1} parent=5 // pred_check_branch
        %188 = sbr.rel (%p185) target = $region12
      $region11: #{tpu_custom_call.1} parent=5 // pred_region
        %s189 = ssub.s32 %s14, 1
      $region12: #{tpu_custom_call.1} parent=5 // pred_fallthru
        _
      %p190 = scmp.lt.s32.totalorder %s14, 8
      // Predicated region
      $region13: #{tpu_custom_call.1} parent=5 // pred_check
        %p191 = pneg %p190
      $region14: #{tpu_custom_call.1} parent=5 // pred_check_branch
        %193 = sbr.rel (%p191) target = $region16
      $region15: #{tpu_custom_call.1} parent=5 // pred_region
        // Predicated region
        $region17: #{tpu_custom_call.1} parent=15 // pred_check
          %p194 = pneg %p53
        $region18: #{tpu_custom_call.1} parent=15 // pred_check_branch
          %196 = sbr.rel (%p194) target = $region20
        $region19: #{tpu_custom_call.1} parent=15 // pred_region
          %s197 = smul.u32 4, %s22
          %p198 = scmp.lt.s32.totalorder %s197, 7
          %s199 = scalar_select %p198, %s197, 7
          %s200 = smul.addr %s199, 4
          %s201 = scalar_lea.vmem %s0, %s200
          %s202 = smul.u32 4, %s22
        $region20: #{tpu_custom_call.1} parent=15 // pred_fallthru
          _
        // Predicated region
        $region21: #{tpu_custom_call.1} parent=15 // pred_check
          %p203 = pneg %p83
        $region22: #{tpu_custom_call.1} parent=15 // pred_check_branch
          %205 = sbr.rel (%p203) target = $region24
        $region23: #{tpu_custom_call.1} parent=15 // pred_region
          %s206 = smul.u32 %s21, 2
          %s207 = sadd.s32 %s206, %s23
          %p208 = scmp.lt.s32.totalorder %s207, 3
          %s209 = scalar_select %p208, %s207, 3
          %s210 = smul.addr %s209, 96
          %s211 = smul.addr %s210, 8
          %s212 = scalar_lea.vmem %s1, %s211
          %s213 = smul.u32 %s21, 2
          %s214 = sadd.s32 %s213, %s23
        $region24: #{tpu_custom_call.1} parent=15 // pred_fallthru
          _
        // Predicated region
        $region25: #{tpu_custom_call.1} parent=15 // pred_check
          %p215 = pneg %p113
        $region26: #{tpu_custom_call.1} parent=15 // pred_check_branch
          %217 = sbr.rel (%p215) target = $region28
        $region27: #{tpu_custom_call.1} parent=15 // pred_region
          %s218 = smul.u32 %s21, 2
          %s219 = sadd.s32 %s218, %s23
          %p220 = scmp.lt.s32.totalorder %s219, 3
          %s221 = scalar_select %p220, %s219, 3
          %s222 = smul.addr %s221, 12
          %s223 = smul.addr %s222, 4
          %s224 = scalar_lea.vmem %s2, %s223
          %s225 = smul.u32 %s21, 2
          %s226 = sadd.s32 %s225, %s23
        $region28: #{tpu_custom_call.1} parent=15 // pred_fallthru
          _
      $region16: #{tpu_custom_call.1} parent=5 // pred_fallthru
        _
      %p227 = scmp.le.s32.totalorder 1, %s14
      %p228 = scmp.lt.s32.totalorder %s14, 9
      %p229 = pnand %p227, %p228
      %p230 = pneg %p229
      // Predicated region
      $region29: #{tpu_custom_call.1} parent=5 // pred_check
        _
      $region30: #{tpu_custom_call.1} parent=5 // pred_check_branch
        %232 = sbr.rel (%p229) target = $region32
      $region31: #{tpu_custom_call.1} parent=5 // pred_region
        %s233 = ssub.s32 %s14, 1
        %s234 = smul.u32 4, %s25
        %p235 = scmp.lt.s32.totalorder %s234, 7
        %s236 = scalar_select %p235, %s234, 7
        %s237 = smul.addr %s236, 4
        %s238 = scalar_lea.vmem %s0, %s237
        %p239 = pneg %p59
        %p240 = pneg %p56
        %s241 = smul.u32 %s24, 2
        %s242 = sadd.s32 %s241, %s26
        %p243 = scmp.lt.s32.totalorder %s242, 3
        %s244 = scalar_select %p243, %s242, 3
        %s245 = smul.addr %s244, 96
        %s246 = smul.addr %s245, 8
        %s247 = scalar_lea.vmem %s1, %s246
        %p248 = pneg %p89
        %p249 = pneg %p86
        %s250 = smul.u32 %s24, 2
        %s251 = sadd.s32 %s250, %s26
        %p252 = scmp.lt.s32.totalorder %s251, 3
        %s253 = scalar_select %p252, %s251, 3
        %s254 = smul.addr %s253, 12
        %s255 = smul.addr %s254, 4
        %s256 = scalar_lea.vmem %s2, %s255
        %p257 = pneg %p119
        %p258 = pneg %p116
        %p259 = pneg %p147
        %p260 = pneg %p144
        %s261 = sand.u32 %s134, 1
        %s262 = sand.u32 %s134, 1
        %s263 = smul.addr %s262, 64
        %s264 = scalar_lea.vmem [#allocation3], %s263
        %p265 = pneg %p175
        %p266 = pneg %p172
        %s267 = sand.u32 %s162, 1
        %s268 = scalar_lea.sflag [#allocation5], %s267
        %s269 = sand.u32 %s162, 1
        %s270 = smul.addr %s269, 4
        %s271 = scalar_lea.vmem [#allocation4], %s270
        %s272 = smul.u32 4, %s25
        %p273 = scmp.lt.s32.totalorder %s272, 7
        %s274 = scalar_select %p273, %s272, 7
        %s275 = smul.addr %s274, 4
        %s276 = scalar_lea.vmem %s0, %s275
        %s277 = smul.u32 4, %s25
        %s278 = smul.u32 %s24, 2
        %s279 = sadd.s32 %s278, %s26
        %p280 = scmp.lt.s32.totalorder %s279, 3
        %s281 = scalar_select %p280, %s279, 3
        %s282 = smul.addr %s281, 96
        %s283 = smul.addr %s282, 8
        %s284 = scalar_lea.vmem %s1, %s283
        %s285 = smul.u32 %s24, 2
        %s286 = sadd.s32 %s285, %s26
        %s287 = smul.u32 %s24, 2
        %s288 = sadd.s32 %s287, %s26
        %p289 = scmp.lt.s32.totalorder %s288, 3
        %s290 = scalar_select %p289, %s288, 3
        %s291 = smul.addr %s290, 12
        %s292 = smul.addr %s291, 4
        %s293 = scalar_lea.vmem %s2, %s292
        %s294 = smul.u32 %s24, 2
        %s295 = sadd.s32 %s294, %s26
        %s296 = smul.u32 4, %s25
        %s297 = smul.u32 4, %s25
        %p298 = scmp.eq.s32.totalorder %s26, 0
        // Predicated region
        $region33: #{tpu_custom_call.1} parent=31 // pred_check
          %p299 = pneg %p298
        $region34: #{tpu_custom_call.1} parent=31 // pred_check_branch
          %301 = sbr.rel (%p299) target = $region36
        $region35: #{tpu_custom_call.1} parent=31 // pred_region
          %302 = vst [vmem:[%s264] sm:$0xff] 0.0
          %303 = vst [vmem:[%s264 + $0x8] sm:$0xff] 0.0
          %304 = vst [vmem:[%s264 + $0x10] sm:$0xff] 0.0
          %305 = vst [vmem:[%s264 + $0x18] sm:$0xff] 0.0
          %306 = vst [vmem:[%s264 + $0x20] sm:$0xf] 0.0
          %307 = vst [vmem:[%s264 + $0x28] sm:$0xf] 0.0
          %308 = vst [vmem:[%s264 + $0x30] sm:$0xf] 0.0
          %309 = vst [vmem:[%s264 + $0x38] sm:$0xf] 0.0
          %v310 = vlaneseq
          %vm311 = vcmp.ge.s32.totalorder %v310, 0
          %vm312 = vcmp.lt.s32.totalorder %v310, 512
          %vm313 = vmand %vm311, %vm312
          %314 = vst.msk [vmem:[#allocation2] sm:$0xf] %vm313, 1232348160
        $region36: #{tpu_custom_call.1} parent=31 // pred_fallthru
          _
        %v315 = vld [vmem:[%s276] sm:$0x77]
        %v316 = vld [vmem:[%s276 + $0x8] sm:$0x77]
        %v317 = vld [vmem:[%s284] sm:$0xff]
        %v318 = vld [vmem:[%s284 + $0x8] sm:$0xff]
        %v319 = vld [vmem:[%s284 + $0x10] sm:$0xff]
        %v320 = vld [vmem:[%s284 + $0x18] sm:$0xff]
        %v321 = vld [vmem:[%s284 + $0x20] sm:$0xff]
        %v322 = vld [vmem:[%s284 + $0x28] sm:$0xff]
        %v323 = vld [vmem:[%s284 + $0x30] sm:$0xff]
        %v324 = vld [vmem:[%s284 + $0x38] sm:$0xff]
        %v325 = vld [vmem:[%s284 + $0x40] sm:$0xff]
        %v326 = vld [vmem:[%s284 + $0x48] sm:$0xff]
        %v327 = vld [vmem:[%s284 + $0x50] sm:$0xff]
        %v328 = vld [vmem:[%s284 + $0x58] sm:$0xff]
        %v329 = vld [vmem:[%s284 + $0x60] sm:$0xff]
        %v330 = vld [vmem:[%s284 + $0x68] sm:$0xff]
        %v331 = vld [vmem:[%s284 + $0x70] sm:$0xff]
        %v332 = vld [vmem:[%s284 + $0x78] sm:$0xff]
        %v333 = vld [vmem:[%s284 + $0x80] sm:$0xff]
        %v334 = vld [vmem:[%s284 + $0x88] sm:$0xff]
        %v335 = vld [vmem:[%s284 + $0x90] sm:$0xff]
        %v336 = vld [vmem:[%s284 + $0x98] sm:$0xff]
        %v337 = vld [vmem:[%s284 + $0xa0] sm:$0xff]
        %v338 = vld [vmem:[%s284 + $0xa8] sm:$0xff]
        %v339 = vld [vmem:[%s284 + $0xb0] sm:$0xff]
        %v340 = vld [vmem:[%s284 + $0xb8] sm:$0xff]
        %v341 = vld [vmem:[%s284 + $0xc0] sm:$0xff]
        %v342 = vld [vmem:[%s284 + $0xc8] sm:$0xff]
        %v343 = vld [vmem:[%s284 + $0xd0] sm:$0xff]
        %v344 = vld [vmem:[%s284 + $0xd8] sm:$0xff]
        %v345 = vld [vmem:[%s284 + $0xe0] sm:$0xff]
        %v346 = vld [vmem:[%s284 + $0xe8] sm:$0xff]
        %v347 = vld [vmem:[%s284 + $0xf0] sm:$0xff]
        %v348 = vld [vmem:[%s284 + $0xf8] sm:$0xff]
        %v349 = vld [vmem:[%s284 + $0x100] sm:$0xff]
        %v350 = vld [vmem:[%s284 + $0x108] sm:$0xff]
        %v351 = vld [vmem:[%s284 + $0x110] sm:$0xff]
        %v352 = vld [vmem:[%s284 + $0x118] sm:$0xff]
        %v353 = vld [vmem:[%s284 + $0x120] sm:$0xff]
        %v354 = vld [vmem:[%s284 + $0x128] sm:$0xff]
        %v355 = vld [vmem:[%s284 + $0x130] sm:$0xff]
        %v356 = vld [vmem:[%s284 + $0x138] sm:$0xff]
        %v357 = vld [vmem:[%s284 + $0x140] sm:$0xff]
        %v358 = vld [vmem:[%s284 + $0x148] sm:$0xff]
        %v359 = vld [vmem:[%s284 + $0x150] sm:$0xff]
        %v360 = vld [vmem:[%s284 + $0x158] sm:$0xff]
        %v361 = vld [vmem:[%s284 + $0x160] sm:$0xff]
        %v362 = vld [vmem:[%s284 + $0x168] sm:$0xff]
        %v363 = vld [vmem:[%s284 + $0x170] sm:$0xff]
        %v364 = vld [vmem:[%s284 + $0x178] sm:$0xff]
        %v365 = vld [vmem:[%s284 + $0x180] sm:$0xff]
        %v366 = vld [vmem:[%s284 + $0x188] sm:$0xff]
        %v367 = vld [vmem:[%s284 + $0x190] sm:$0xff]
        %v368 = vld [vmem:[%s284 + $0x198] sm:$0xff]
        %v369 = vld [vmem:[%s284 + $0x1a0] sm:$0xff]
        %v370 = vld [vmem:[%s284 + $0x1a8] sm:$0xff]
        %v371 = vld [vmem:[%s284 + $0x1b0] sm:$0xff]
        %v372 = vld [vmem:[%s284 + $0x1b8] sm:$0xff]
        %v373 = vld [vmem:[%s284 + $0x1c0] sm:$0xff]
        %v374 = vld [vmem:[%s284 + $0x1c8] sm:$0xff]
        %v375 = vld [vmem:[%s284 + $0x1d0] sm:$0xff]
        %v376 = vld [vmem:[%s284 + $0x1d8] sm:$0xff]
        %v377 = vld [vmem:[%s284 + $0x1e0] sm:$0xff]
        %v378 = vld [vmem:[%s284 + $0x1e8] sm:$0xff]
        %v379 = vld [vmem:[%s284 + $0x1f0] sm:$0xff]
        %v380 = vld [vmem:[%s284 + $0x1f8] sm:$0xff]
        %v381 = vld [vmem:[%s284 + $0x200] sm:$0xff]
        %v382 = vld [vmem:[%s284 + $0x208] sm:$0xff]
        %v383 = vld [vmem:[%s284 + $0x210] sm:$0xff]
        %v384 = vld [vmem:[%s284 + $0x218] sm:$0xff]
        %v385 = vld [vmem:[%s284 + $0x220] sm:$0xff]
        %v386 = vld [vmem:[%s284 + $0x228] sm:$0xff]
        %v387 = vld [vmem:[%s284 + $0x230] sm:$0xff]
        %v388 = vld [vmem:[%s284 + $0x238] sm:$0xff]
        %v389 = vld [vmem:[%s284 + $0x240] sm:$0xff]
        %v390 = vld [vmem:[%s284 + $0x248] sm:$0xff]
        %v391 = vld [vmem:[%s284 + $0x250] sm:$0xff]
        %v392 = vld [vmem:[%s284 + $0x258] sm:$0xff]
        %v393 = vld [vmem:[%s284 + $0x260] sm:$0xff]
        %v394 = vld [vmem:[%s284 + $0x268] sm:$0xff]
        %v395 = vld [vmem:[%s284 + $0x270] sm:$0xff]
        %v396 = vld [vmem:[%s284 + $0x278] sm:$0xff]
        %v397 = vld [vmem:[%s284 + $0x280] sm:$0xff]
        %v398 = vld [vmem:[%s284 + $0x288] sm:$0xff]
        %v399 = vld [vmem:[%s284 + $0x290] sm:$0xff]
        %v400 = vld [vmem:[%s284 + $0x298] sm:$0xff]
        %v401 = vld [vmem:[%s284 + $0x2a0] sm:$0xff]
        %v402 = vld [vmem:[%s284 + $0x2a8] sm:$0xff]
        %v403 = vld [vmem:[%s284 + $0x2b0] sm:$0xff]
        %v404 = vld [vmem:[%s284 + $0x2b8] sm:$0xff]
        %v405 = vld [vmem:[%s284 + $0x2c0] sm:$0xff]
        %v406 = vld [vmem:[%s284 + $0x2c8] sm:$0xff]
        %v407 = vld [vmem:[%s284 + $0x2d0] sm:$0xff]
        %v408 = vld [vmem:[%s284 + $0x2d8] sm:$0xff]
        %v409 = vld [vmem:[%s284 + $0x2e0] sm:$0xff]
        %v410 = vld [vmem:[%s284 + $0x2e8] sm:$0xff]
        %v411 = vld [vmem:[%s284 + $0x2f0] sm:$0xff]
        %v412 = vld [vmem:[%s284 + $0x2f8] sm:$0xff]
        %v413 = vld [vmem:[%s293] sm:$0xff]
        %v414 = vld [vmem:[%s293 + $0x8] sm:$0xff]
        %v415 = vld [vmem:[%s293 + $0x10] sm:$0xff]
        %v416 = vld [vmem:[%s293 + $0x18] sm:$0x33]
        %v417 = vld [vmem:[%s293 + $0x20] sm:$0x33]
        %v418 = vld [vmem:[%s293 + $0x28] sm:$0x33]
        %v421 = vcombine.high %v315, %v315
        %v422 = vcombine.high %v316, %v316
        %vm423 = vcmask 23552
        %v425 = vsel %vm423, %v317, 0
        %v428 = vsel %vm423, %v318, 0
        %v431 = vsel %vm423, %v319, 0
        %v434 = vsel %vm423, %v320, 0
        %v437 = vsel %vm423, %v321, 0
        %v440 = vsel %vm423, %v322, 0
        %v443 = vsel %vm423, %v323, 0
        %v446 = vsel %vm423, %v324, 0
        %v449 = vsel %vm423, %v325, 0
        %v452 = vsel %vm423, %v326, 0
        %v455 = vsel %vm423, %v327, 0
        %v458 = vsel %vm423, %v328, 0
        %v461 = vsel %vm423, %v329, 0
        %v464 = vsel %vm423, %v330, 0
        %v467 = vsel %vm423, %v331, 0
        %v470 = vsel %vm423, %v332, 0
        %v473 = vsel %vm423, %v333, 0
        %v476 = vsel %vm423, %v334, 0
        %v479 = vsel %vm423, %v335, 0
        %v482 = vsel %vm423, %v336, 0
        %v485 = vsel %vm423, %v337, 0
        %v488 = vsel %vm423, %v338, 0
        %v491 = vsel %vm423, %v339, 0
        %v494 = vsel %vm423, %v340, 0
        %v497 = vsel %vm423, %v341, 0
        %v500 = vsel %vm423, %v342, 0
        %v503 = vsel %vm423, %v343, 0
        %v506 = vsel %vm423, %v344, 0
        %v509 = vsel %vm423, %v345, 0
        %v512 = vsel %vm423, %v346, 0
        %v515 = vsel %vm423, %v347, 0
        %v518 = vsel %vm423, %v348, 0
        %v521 = vsel %vm423, %v349, 0
        %v524 = vsel %vm423, %v350, 0
        %v527 = vsel %vm423, %v351, 0
        %v530 = vsel %vm423, %v352, 0
        %v533 = vsel %vm423, %v353, 0
        %v536 = vsel %vm423, %v354, 0
        %v539 = vsel %vm423, %v355, 0
        %v542 = vsel %vm423, %v356, 0
        %v545 = vsel %vm423, %v357, 0
        %v548 = vsel %vm423, %v358, 0
        %v551 = vsel %vm423, %v359, 0
        %v554 = vsel %vm423, %v360, 0
        %v557 = vsel %vm423, %v361, 0
        %v560 = vsel %vm423, %v362, 0
        %v563 = vsel %vm423, %v363, 0
        %v566 = vsel %vm423, %v364, 0
        %v569 = vsel %vm423, %v365, 0
        %v572 = vsel %vm423, %v366, 0
        %v575 = vsel %vm423, %v367, 0
        %v578 = vsel %vm423, %v368, 0
        %v581 = vsel %vm423, %v369, 0
        %v584 = vsel %vm423, %v370, 0
        %v587 = vsel %vm423, %v371, 0
        %v590 = vsel %vm423, %v372, 0
        %v593 = vsel %vm423, %v373, 0
        %v596 = vsel %vm423, %v374, 0
        %v599 = vsel %vm423, %v375, 0
        %v602 = vsel %vm423, %v376, 0
        %v605 = vsel %vm423, %v377, 0
        %v608 = vsel %vm423, %v378, 0
        %v611 = vsel %vm423, %v379, 0
        %v614 = vsel %vm423, %v380, 0
        %v617 = vsel %vm423, %v381, 0
        %v620 = vsel %vm423, %v382, 0
        %v623 = vsel %vm423, %v383, 0
        %v626 = vsel %vm423, %v384, 0
        %v629 = vsel %vm423, %v385, 0
        %v632 = vsel %vm423, %v386, 0
        %v635 = vsel %vm423, %v387, 0
        %v638 = vsel %vm423, %v388, 0
        %v641 = vsel %vm423, %v389, 0
        %v644 = vsel %vm423, %v390, 0
        %v647 = vsel %vm423, %v391, 0
        %v650 = vsel %vm423, %v392, 0
        %v653 = vsel %vm423, %v393, 0
        %v656 = vsel %vm423, %v394, 0
        %v659 = vsel %vm423, %v395, 0
        %v662 = vsel %vm423, %v396, 0
        %v665 = vsel %vm423, %v397, 0
        %v668 = vsel %vm423, %v398, 0
        %v671 = vsel %vm423, %v399, 0
        %v674 = vsel %vm423, %v400, 0
        %v677 = vsel %vm423, %v401, 0
        %v680 = vsel %vm423, %v402, 0
        %v683 = vsel %vm423, %v403, 0
        %v686 = vsel %vm423, %v404, 0
        %v689 = vsel %vm423, %v405, 0
        %v692 = vsel %vm423, %v406, 0
        %v695 = vsel %vm423, %v407, 0
        %v698 = vsel %vm423, %v408, 0
        %v701 = vsel %vm423, %v409, 0
        %v704 = vsel %vm423, %v410, 0
        %v707 = vsel %vm423, %v411, 0
        %v710 = vsel %vm423, %v412, 0
        %vm712 = vcmask 1042432
        %v713 = vsel %vm712, %v315, 0
        %v715 = vsel %vm712, %v421, 0
        %v717 = vsel %vm712, %v316, 0
        %v719 = vsel %vm712, %v422, 0
        %721 = vmatprep.subr.mxu0 0.0
        %722 = vmatpush1.msra.mxu0 0.0
        %723 = vmatprep.subr.mxu0 0.0
        %724 = vmatpush1.msra.mxu0 0.0
        %725 = vmatprep.subr.mxu0 0.0
        %726 = vmatpush1.msra.mxu0 0.0
        %727 = vmatprep.subr.mxu0 0.0
        %728 = vmatpush1.msra.mxu0 0.0
        %729 = vmatprep.subr.mxu0 0.0
        %730 = vmatpush1.msra.mxu0 0.0
        %731 = vmatprep.subr.mxu0 0.0
        %732 = vmatpush1.msra.mxu0 0.0
        %733 = vmatprep.subr.mxu0 0.0
        %734 = vmatpush1.msra.mxu0 0.0
        %735 = vmatprep.subr.mxu0 0.0
        %736 = vmatpush1.msra.mxu0 0.0
        %737 = vmatprep.subr.mxu0 0.0
        %738 = vmatpush1.msra.mxu0 0.0
        %739 = vmatprep.subr.mxu0 0.0
        %740 = vmatpush1.msra.mxu0 0.0
        %741 = vmatprep.subr.mxu0 0.0
        %742 = vmatpush1.msra.mxu0 0.0
        %743 = vmatprep.subr.mxu0 0.0
        %744 = vmatpush1.msra.mxu0 0.0
        %745 = vmatprep.subr.mxu0 0.0
        %746 = vmatpush1.msra.mxu0 0.0
        %747 = vmatprep.subr.mxu0 0.0
        %748 = vmatpush1.msra.mxu0 0.0
        %749 = vmatprep.subr.mxu0 0.0
        %750 = vmatpush1.msra.mxu0 0.0
        %751 = vmatprep.subr.mxu0 %v715
        %752 = vmatpush1.msra.mxu0 %v713
        %753 = vmatprep.subr.mxu0 0.0
        %754 = vmatpush2.msra.mxu0 0.0
        %755 = vmatprep.subr.mxu0 0.0
        %756 = vmatpush2.msra.mxu0 0.0
        %757 = vmatprep.subr.mxu0 0.0
        %758 = vmatpush2.msra.mxu0 0.0
        %759 = vmatprep.subr.mxu0 0.0
        %760 = vmatpush2.msra.mxu0 0.0
        %761 = vmatprep.subr.mxu0 0.0
        %762 = vmatpush2.msra.mxu0 0.0
        %763 = vmatprep.subr.mxu0 0.0
        %764 = vmatpush2.msra.mxu0 0.0
        %765 = vmatprep.subr.mxu0 0.0
        %766 = vmatpush2.msra.mxu0 0.0
        %767 = vmatprep.subr.mxu0 0.0
        %768 = vmatpush2.msra.mxu0 0.0
        %769 = vmatprep.subr.mxu0 0.0
        %770 = vmatpush2.msra.mxu0 0.0
        %771 = vmatprep.subr.mxu0 0.0
        %772 = vmatpush2.msra.mxu0 0.0
        %773 = vmatprep.subr.mxu0 0.0
        %774 = vmatpush2.msra.mxu0 0.0
        %775 = vmatprep.subr.mxu0 0.0
        %776 = vmatpush2.msra.mxu0 0.0
        %777 = vmatprep.subr.mxu0 0.0
        %778 = vmatpush2.msra.mxu0 0.0
        %779 = vmatprep.subr.mxu0 0.0
        %780 = vmatpush2.msra.mxu0 0.0
        %781 = vmatprep.subr.mxu0 0.0
        %782 = vmatpush2.msra.mxu0 0.0
        %783 = vmatprep.subr.mxu0 0.0
        %784 = vmatpush2.msra.mxu0 0.0
        %785 = vmatprep.mubr.f32.mxu0 0.0
        %786 = vmatmul.mubr.f32.gmra.mxu0 %v425
        %v787 = vpop.f32.mrf.mxu0
        %v788 = vadd.f32 0.0, %v787
        %v789 = vpop.f32.mrf.mxu0
        %v790 = vadd.f32 0.0, %v789
        %791 = vmatprep.mubr.f32.mxu0 0.0
        %792 = vmatmul.mubr.f32.gmra.mxu0 %v428
        %v793 = vpop.f32.mrf.mxu0
        %v794 = vadd.f32 0.0, %v793
        %v795 = vpop.f32.mrf.mxu0
        %v796 = vadd.f32 0.0, %v795
        %797 = vmatprep.mubr.f32.mxu0 0.0
        %798 = vmatmul.mubr.f32.gmra.mxu0 %v431
        %v799 = vpop.f32.mrf.mxu0
        %v800 = vadd.f32 0.0, %v799
        %v801 = vpop.f32.mrf.mxu0
        %v802 = vadd.f32 0.0, %v801
        %803 = vmatprep.mubr.f32.mxu0 0.0
        %804 = vmatmul.mubr.f32.gmra.mxu0 %v434
        %v805 = vpop.f32.mrf.mxu0
        %v806 = vadd.f32 0.0, %v805
        %v807 = vpop.f32.mrf.mxu0
        %v808 = vadd.f32 0.0, %v807
        %809 = vmatprep.mubr.f32.mxu0 0.0
        %810 = vmatmul.mubr.f32.gmra.mxu0 %v437
        %v811 = vpop.f32.mrf.mxu0
        %v812 = vadd.f32 0.0, %v811
        %v813 = vpop.f32.mrf.mxu0
        %v814 = vadd.f32 0.0, %v813
        %815 = vmatprep.mubr.f32.mxu0 0.0
        %816 = vmatmul.mubr.f32.gmra.mxu0 %v440
        %v817 = vpop.f32.mrf.mxu0
        %v818 = vadd.f32 0.0, %v817
        %v819 = vpop.f32.mrf.mxu0
        %v820 = vadd.f32 0.0, %v819
        %821 = vmatprep.mubr.f32.mxu0 0.0
        %822 = vmatmul.mubr.f32.gmra.mxu0 %v443
        %v823 = vpop.f32.mrf.mxu0
        %v824 = vadd.f32 0.0, %v823
        %v825 = vpop.f32.mrf.mxu0
        %v826 = vadd.f32 0.0, %v825
        %827 = vmatprep.mubr.f32.mxu0 0.0
        %828 = vmatmul.mubr.f32.gmra.mxu0 %v446
        %v829 = vpop.f32.mrf.mxu0
        %v830 = vadd.f32 0.0, %v829
        %v831 = vpop.f32.mrf.mxu0
        %v832 = vadd.f32 0.0, %v831
        %833 = vmatprep.mubr.f32.mxu0 0.0
        %834 = vmatmul.mubr.f32.gmra.mxu0 %v449
        %v835 = vpop.f32.mrf.mxu0
        %v836 = vadd.f32 0.0, %v835
        %v837 = vpop.f32.mrf.mxu0
        %v838 = vadd.f32 0.0, %v837
        %839 = vmatprep.mubr.f32.mxu0 0.0
        %840 = vmatmul.mubr.f32.gmra.mxu0 %v452
        %v841 = vpop.f32.mrf.mxu0
        %v842 = vadd.f32 0.0, %v841
        %v843 = vpop.f32.mrf.mxu0
        %v844 = vadd.f32 0.0, %v843
        %845 = vmatprep.mubr.f32.mxu0 0.0
        %846 = vmatmul.mubr.f32.gmra.mxu0 %v455
        %v847 = vpop.f32.mrf.mxu0
        %v848 = vadd.f32 0.0, %v847
        %v849 = vpop.f32.mrf.mxu0
        %v850 = vadd.f32 0.0, %v849
        %851 = vmatprep.mubr.f32.mxu0 0.0
        %852 = vmatmul.mubr.f32.gmra.mxu0 %v458
        %v853 = vpop.f32.mrf.mxu0
        %v854 = vadd.f32 0.0, %v853
        %v855 = vpop.f32.mrf.mxu0
        %v856 = vadd.f32 0.0, %v855
        %857 = vmatprep.mubr.f32.mxu0 0.0
        %858 = vmatmul.mubr.f32.gmra.mxu0 %v461
        %v859 = vpop.f32.mrf.mxu0
        %v860 = vadd.f32 0.0, %v859
        %v861 = vpop.f32.mrf.mxu0
        %v862 = vadd.f32 0.0, %v861
        %863 = vmatprep.mubr.f32.mxu0 0.0
        %864 = vmatmul.mubr.f32.gmra.mxu0 %v464
        %v865 = vpop.f32.mrf.mxu0
        %v866 = vadd.f32 0.0, %v865
        %v867 = vpop.f32.mrf.mxu0
        %v868 = vadd.f32 0.0, %v867
        %869 = vmatprep.mubr.f32.mxu0 0.0
        %870 = vmatmul.mubr.f32.gmra.mxu0 %v467
        %v871 = vpop.f32.mrf.mxu0
        %v872 = vadd.f32 0.0, %v871
        %v873 = vpop.f32.mrf.mxu0
        %v874 = vadd.f32 0.0, %v873
        %875 = vmatprep.mubr.f32.mxu0 0.0
        %876 = vmatmul.mubr.f32.gmra.mxu0 %v470
        %v877 = vpop.f32.mrf.mxu0
        %v878 = vadd.f32 0.0, %v877
        %v879 = vpop.f32.mrf.mxu0
        %v880 = vadd.f32 0.0, %v879
        %881 = vmatprep.mubr.f32.mxu0 0.0
        %882 = vmatmul.mubr.f32.gmra.mxu0 %v473
        %v883 = vpop.f32.mrf.mxu0
        %v884 = vadd.f32 0.0, %v883
        %v885 = vpop.f32.mrf.mxu0
        %v886 = vadd.f32 0.0, %v885
        %887 = vmatprep.mubr.f32.mxu0 0.0
        %888 = vmatmul.mubr.f32.gmra.mxu0 %v476
        %v889 = vpop.f32.mrf.mxu0
        %v890 = vadd.f32 0.0, %v889
        %v891 = vpop.f32.mrf.mxu0
        %v892 = vadd.f32 0.0, %v891
        %893 = vmatprep.mubr.f32.mxu0 0.0
        %894 = vmatmul.mubr.f32.gmra.mxu0 %v479
        %v895 = vpop.f32.mrf.mxu0
        %v896 = vadd.f32 0.0, %v895
        %v897 = vpop.f32.mrf.mxu0
        %v898 = vadd.f32 0.0, %v897
        %899 = vmatprep.mubr.f32.mxu0 0.0
        %900 = vmatmul.mubr.f32.gmra.mxu0 %v482
        %v901 = vpop.f32.mrf.mxu0
        %v902 = vadd.f32 0.0, %v901
        %v903 = vpop.f32.mrf.mxu0
        %v904 = vadd.f32 0.0, %v903
        %905 = vmatprep.mubr.f32.mxu0 0.0
        %906 = vmatmul.mubr.f32.gmra.mxu0 %v485
        %v907 = vpop.f32.mrf.mxu0
        %v908 = vadd.f32 0.0, %v907
        %v909 = vpop.f32.mrf.mxu0
        %v910 = vadd.f32 0.0, %v909
        %911 = vmatprep.mubr.f32.mxu0 0.0
        %912 = vmatmul.mubr.f32.gmra.mxu0 %v488
        %v913 = vpop.f32.mrf.mxu0
        %v914 = vadd.f32 0.0, %v913
        %v915 = vpop.f32.mrf.mxu0
        %v916 = vadd.f32 0.0, %v915
        %917 = vmatprep.mubr.f32.mxu0 0.0
        %918 = vmatmul.mubr.f32.gmra.mxu0 %v491
        %v919 = vpop.f32.mrf.mxu0
        %v920 = vadd.f32 0.0, %v919
        %v921 = vpop.f32.mrf.mxu0
        %v922 = vadd.f32 0.0, %v921
        %923 = vmatprep.mubr.f32.mxu0 0.0
        %924 = vmatmul.mubr.f32.gmra.mxu0 %v494
        %v925 = vpop.f32.mrf.mxu0
        %v926 = vadd.f32 0.0, %v925
        %v927 = vpop.f32.mrf.mxu0
        %v928 = vadd.f32 0.0, %v927
        %929 = vmatprep.mubr.f32.mxu0 0.0
        %930 = vmatmul.mubr.f32.gmra.mxu0 %v497
        %v931 = vpop.f32.mrf.mxu0
        %v932 = vadd.f32 0.0, %v931
        %v933 = vpop.f32.mrf.mxu0
        %v934 = vadd.f32 0.0, %v933
        %935 = vmatprep.mubr.f32.mxu0 0.0
        %936 = vmatmul.mubr.f32.gmra.mxu0 %v500
        %v937 = vpop.f32.mrf.mxu0
        %v938 = vadd.f32 0.0, %v937
        %v939 = vpop.f32.mrf.mxu0
        %v940 = vadd.f32 0.0, %v939
        %941 = vmatprep.mubr.f32.mxu0 0.0
        %942 = vmatmul.mubr.f32.gmra.mxu0 %v503
        %v943 = vpop.f32.mrf.mxu0
        %v944 = vadd.f32 0.0, %v943
        %v945 = vpop.f32.mrf.mxu0
        %v946 = vadd.f32 0.0, %v945
        %947 = vmatprep.mubr.f32.mxu0 0.0
        %948 = vmatmul.mubr.f32.gmra.mxu0 %v506
        %v949 = vpop.f32.mrf.mxu0
        %v950 = vadd.f32 0.0, %v949
        %v951 = vpop.f32.mrf.mxu0
        %v952 = vadd.f32 0.0, %v951
        %953 = vmatprep.mubr.f32.mxu0 0.0
        %954 = vmatmul.mubr.f32.gmra.mxu0 %v509
        %v955 = vpop.f32.mrf.mxu0
        %v956 = vadd.f32 0.0, %v955
        %v957 = vpop.f32.mrf.mxu0
        %v958 = vadd.f32 0.0, %v957
        %959 = vmatprep.mubr.f32.mxu0 0.0
        %960 = vmatmul.mubr.f32.gmra.mxu0 %v512
        %v961 = vpop.f32.mrf.mxu0
        %v962 = vadd.f32 0.0, %v961
        %v963 = vpop.f32.mrf.mxu0
        %v964 = vadd.f32 0.0, %v963
        %965 = vmatprep.mubr.f32.mxu0 0.0
        %966 = vmatmul.mubr.f32.gmra.mxu0 %v515
        %v967 = vpop.f32.mrf.mxu0
        %v968 = vadd.f32 0.0, %v967
        %v969 = vpop.f32.mrf.mxu0
        %v970 = vadd.f32 0.0, %v969
        %971 = vmatprep.mubr.f32.mxu0 0.0
        %972 = vmatmul.mubr.f32.gmra.mxu0 %v518
        %v973 = vpop.f32.mrf.mxu0
        %v974 = vadd.f32 0.0, %v973
        %v975 = vpop.f32.mrf.mxu0
        %v976 = vadd.f32 0.0, %v975
        %977 = vmatprep.mubr.f32.mxu0 0.0
        %978 = vmatmul.mubr.f32.gmra.mxu0 %v521
        %v979 = vpop.f32.mrf.mxu0
        %v980 = vadd.f32 0.0, %v979
        %v981 = vpop.f32.mrf.mxu0
        %v982 = vadd.f32 0.0, %v981
        %983 = vmatprep.mubr.f32.mxu0 0.0
        %984 = vmatmul.mubr.f32.gmra.mxu0 %v524
        %v985 = vpop.f32.mrf.mxu0
        %v986 = vadd.f32 0.0, %v985
        %v987 = vpop.f32.mrf.mxu0
        %v988 = vadd.f32 0.0, %v987
        %989 = vmatprep.mubr.f32.mxu0 0.0
        %990 = vmatmul.mubr.f32.gmra.mxu0 %v527
        %v991 = vpop.f32.mrf.mxu0
        %v992 = vadd.f32 0.0, %v991
        %v993 = vpop.f32.mrf.mxu0
        %v994 = vadd.f32 0.0, %v993
        %995 = vmatprep.mubr.f32.mxu0 0.0
        %996 = vmatmul.mubr.f32.gmra.mxu0 %v530
        %v997 = vpop.f32.mrf.mxu0
        %v998 = vadd.f32 0.0, %v997
        %v999 = vpop.f32.mrf.mxu0
        %v1000 = vadd.f32 0.0, %v999
        %1001 = vmatprep.mubr.f32.mxu0 0.0
        %1002 = vmatmul.mubr.f32.gmra.mxu0 %v533
        %v1003 = vpop.f32.mrf.mxu0
        %v1004 = vadd.f32 0.0, %v1003
        %v1005 = vpop.f32.mrf.mxu0
        %v1006 = vadd.f32 0.0, %v1005
        %1007 = vmatprep.mubr.f32.mxu0 0.0
        %1008 = vmatmul.mubr.f32.gmra.mxu0 %v536
        %v1009 = vpop.f32.mrf.mxu0
        %v1010 = vadd.f32 0.0, %v1009
        %v1011 = vpop.f32.mrf.mxu0
        %v1012 = vadd.f32 0.0, %v1011
        %1013 = vmatprep.mubr.f32.mxu0 0.0
        %1014 = vmatmul.mubr.f32.gmra.mxu0 %v539
        %v1015 = vpop.f32.mrf.mxu0
        %v1016 = vadd.f32 0.0, %v1015
        %v1017 = vpop.f32.mrf.mxu0
        %v1018 = vadd.f32 0.0, %v1017
        %1019 = vmatprep.mubr.f32.mxu0 0.0
        %1020 = vmatmul.mubr.f32.gmra.mxu0 %v542
        %v1021 = vpop.f32.mrf.mxu0
        %v1022 = vadd.f32 0.0, %v1021
        %v1023 = vpop.f32.mrf.mxu0
        %v1024 = vadd.f32 0.0, %v1023
        %1025 = vmatprep.mubr.f32.mxu0 0.0
        %1026 = vmatmul.mubr.f32.gmra.mxu0 %v545
        %v1027 = vpop.f32.mrf.mxu0
        %v1028 = vadd.f32 0.0, %v1027
        %v1029 = vpop.f32.mrf.mxu0
        %v1030 = vadd.f32 0.0, %v1029
        %1031 = vmatprep.mubr.f32.mxu0 0.0
        %1032 = vmatmul.mubr.f32.gmra.mxu0 %v548
        %v1033 = vpop.f32.mrf.mxu0
        %v1034 = vadd.f32 0.0, %v1033
        %v1035 = vpop.f32.mrf.mxu0
        %v1036 = vadd.f32 0.0, %v1035
        %1037 = vmatprep.mubr.f32.mxu0 0.0
        %1038 = vmatmul.mubr.f32.gmra.mxu0 %v551
        %v1039 = vpop.f32.mrf.mxu0
        %v1040 = vadd.f32 0.0, %v1039
        %v1041 = vpop.f32.mrf.mxu0
        %v1042 = vadd.f32 0.0, %v1041
        %1043 = vmatprep.mubr.f32.mxu0 0.0
        %1044 = vmatmul.mubr.f32.gmra.mxu0 %v554
        %v1045 = vpop.f32.mrf.mxu0
        %v1046 = vadd.f32 0.0, %v1045
        %v1047 = vpop.f32.mrf.mxu0
        %v1048 = vadd.f32 0.0, %v1047
        %1049 = vmatprep.mubr.f32.mxu0 0.0
        %1050 = vmatmul.mubr.f32.gmra.mxu0 %v557
        %v1051 = vpop.f32.mrf.mxu0
        %v1052 = vadd.f32 0.0, %v1051
        %v1053 = vpop.f32.mrf.mxu0
        %v1054 = vadd.f32 0.0, %v1053
        %1055 = vmatprep.mubr.f32.mxu0 0.0
        %1056 = vmatmul.mubr.f32.gmra.mxu0 %v560
        %v1057 = vpop.f32.mrf.mxu0
        %v1058 = vadd.f32 0.0, %v1057
        %v1059 = vpop.f32.mrf.mxu0
        %v1060 = vadd.f32 0.0, %v1059
        %1061 = vmatprep.mubr.f32.mxu0 0.0
        %1062 = vmatmul.mubr.f32.gmra.mxu0 %v563
        %v1063 = vpop.f32.mrf.mxu0
        %v1064 = vadd.f32 0.0, %v1063
        %v1065 = vpop.f32.mrf.mxu0
        %v1066 = vadd.f32 0.0, %v1065
        %1067 = vmatprep.mubr.f32.mxu0 0.0
        %1068 = vmatmul.mubr.f32.gmra.mxu0 %v566
        %v1069 = vpop.f32.mrf.mxu0
        %v1070 = vadd.f32 0.0, %v1069
        %v1071 = vpop.f32.mrf.mxu0
        %v1072 = vadd.f32 0.0, %v1071
        %1073 = vmatprep.mubr.f32.mxu0 0.0
        %1074 = vmatmul.mubr.f32.gmra.mxu0 %v569
        %v1075 = vpop.f32.mrf.mxu0
        %v1076 = vadd.f32 0.0, %v1075
        %v1077 = vpop.f32.mrf.mxu0
        %v1078 = vadd.f32 0.0, %v1077
        %1079 = vmatprep.mubr.f32.mxu0 0.0
        %1080 = vmatmul.mubr.f32.gmra.mxu0 %v572
        %v1081 = vpop.f32.mrf.mxu0
        %v1082 = vadd.f32 0.0, %v1081
        %v1083 = vpop.f32.mrf.mxu0
        %v1084 = vadd.f32 0.0, %v1083
        %1085 = vmatprep.mubr.f32.mxu0 0.0
        %1086 = vmatmul.mubr.f32.gmra.mxu0 %v575
        %v1087 = vpop.f32.mrf.mxu0
        %v1088 = vadd.f32 0.0, %v1087
        %v1089 = vpop.f32.mrf.mxu0
        %v1090 = vadd.f32 0.0, %v1089
        %1091 = vmatprep.mubr.f32.mxu0 0.0
        %1092 = vmatmul.mubr.f32.gmra.mxu0 %v578
        %v1093 = vpop.f32.mrf.mxu0
        %v1094 = vadd.f32 0.0, %v1093
        %v1095 = vpop.f32.mrf.mxu0
        %v1096 = vadd.f32 0.0, %v1095
        %1097 = vmatprep.mubr.f32.mxu0 0.0
        %1098 = vmatmul.mubr.f32.gmra.mxu0 %v581
        %v1099 = vpop.f32.mrf.mxu0
        %v1100 = vadd.f32 0.0, %v1099
        %v1101 = vpop.f32.mrf.mxu0
        %v1102 = vadd.f32 0.0, %v1101
        %1103 = vmatprep.mubr.f32.mxu0 0.0
        %1104 = vmatmul.mubr.f32.gmra.mxu0 %v584
        %v1105 = vpop.f32.mrf.mxu0
        %v1106 = vadd.f32 0.0, %v1105
        %v1107 = vpop.f32.mrf.mxu0
        %v1108 = vadd.f32 0.0, %v1107
        %1109 = vmatprep.mubr.f32.mxu0 0.0
        %1110 = vmatmul.mubr.f32.gmra.mxu0 %v587
        %v1111 = vpop.f32.mrf.mxu0
        %v1112 = vadd.f32 0.0, %v1111
        %v1113 = vpop.f32.mrf.mxu0
        %v1114 = vadd.f32 0.0, %v1113
        %1115 = vmatprep.mubr.f32.mxu0 0.0
        %1116 = vmatmul.mubr.f32.gmra.mxu0 %v590
        %v1117 = vpop.f32.mrf.mxu0
        %v1118 = vadd.f32 0.0, %v1117
        %v1119 = vpop.f32.mrf.mxu0
        %v1120 = vadd.f32 0.0, %v1119
        %1121 = vmatprep.mubr.f32.mxu0 0.0
        %1122 = vmatmul.mubr.f32.gmra.mxu0 %v593
        %v1123 = vpop.f32.mrf.mxu0
        %v1124 = vadd.f32 0.0, %v1123
        %v1125 = vpop.f32.mrf.mxu0
        %v1126 = vadd.f32 0.0, %v1125
        %1127 = vmatprep.mubr.f32.mxu0 0.0
        %1128 = vmatmul.mubr.f32.gmra.mxu0 %v596
        %v1129 = vpop.f32.mrf.mxu0
        %v1130 = vadd.f32 0.0, %v1129
        %v1131 = vpop.f32.mrf.mxu0
        %v1132 = vadd.f32 0.0, %v1131
        %1133 = vmatprep.mubr.f32.mxu0 0.0
        %1134 = vmatmul.mubr.f32.gmra.mxu0 %v599
        %v1135 = vpop.f32.mrf.mxu0
        %v1136 = vadd.f32 0.0, %v1135
        %v1137 = vpop.f32.mrf.mxu0
        %v1138 = vadd.f32 0.0, %v1137
        %1139 = vmatprep.mubr.f32.mxu0 0.0
        %1140 = vmatmul.mubr.f32.gmra.mxu0 %v602
        %v1141 = vpop.f32.mrf.mxu0
        %v1142 = vadd.f32 0.0, %v1141
        %v1143 = vpop.f32.mrf.mxu0
        %v1144 = vadd.f32 0.0, %v1143
        %1145 = vmatprep.mubr.f32.mxu0 0.0
        %1146 = vmatmul.mubr.f32.gmra.mxu0 %v605
        %v1147 = vpop.f32.mrf.mxu0
        %v1148 = vadd.f32 0.0, %v1147
        %v1149 = vpop.f32.mrf.mxu0
        %v1150 = vadd.f32 0.0, %v1149
        %1151 = vmatprep.mubr.f32.mxu0 0.0
        %1152 = vmatmul.mubr.f32.gmra.mxu0 %v608
        %v1153 = vpop.f32.mrf.mxu0
        %v1154 = vadd.f32 0.0, %v1153
        %v1155 = vpop.f32.mrf.mxu0
        %v1156 = vadd.f32 0.0, %v1155
        %1157 = vmatprep.mubr.f32.mxu0 0.0
        %1158 = vmatmul.mubr.f32.gmra.mxu0 %v611
        %v1159 = vpop.f32.mrf.mxu0
        %v1160 = vadd.f32 0.0, %v1159
        %v1161 = vpop.f32.mrf.mxu0
        %v1162 = vadd.f32 0.0, %v1161
        %1163 = vmatprep.mubr.f32.mxu0 0.0
        %1164 = vmatmul.mubr.f32.gmra.mxu0 %v614
        %v1165 = vpop.f32.mrf.mxu0
        %v1166 = vadd.f32 0.0, %v1165
        %v1167 = vpop.f32.mrf.mxu0
        %v1168 = vadd.f32 0.0, %v1167
        %1169 = vmatprep.mubr.f32.mxu0 0.0
        %1170 = vmatmul.mubr.f32.gmra.mxu0 %v617
        %v1171 = vpop.f32.mrf.mxu0
        %v1172 = vadd.f32 0.0, %v1171
        %v1173 = vpop.f32.mrf.mxu0
        %v1174 = vadd.f32 0.0, %v1173
        %1175 = vmatprep.mubr.f32.mxu0 0.0
        %1176 = vmatmul.mubr.f32.gmra.mxu0 %v620
        %v1177 = vpop.f32.mrf.mxu0
        %v1178 = vadd.f32 0.0, %v1177
        %v1179 = vpop.f32.mrf.mxu0
        %v1180 = vadd.f32 0.0, %v1179
        %1181 = vmatprep.mubr.f32.mxu0 0.0
        %1182 = vmatmul.mubr.f32.gmra.mxu0 %v623
        %v1183 = vpop.f32.mrf.mxu0
        %v1184 = vadd.f32 0.0, %v1183
        %v1185 = vpop.f32.mrf.mxu0
        %v1186 = vadd.f32 0.0, %v1185
        %1187 = vmatprep.mubr.f32.mxu0 0.0
        %1188 = vmatmul.mubr.f32.gmra.mxu0 %v626
        %v1189 = vpop.f32.mrf.mxu0
        %v1190 = vadd.f32 0.0, %v1189
        %v1191 = vpop.f32.mrf.mxu0
        %v1192 = vadd.f32 0.0, %v1191
        %1193 = vmatprep.mubr.f32.mxu0 0.0
        %1194 = vmatmul.mubr.f32.gmra.mxu0 %v629
        %v1195 = vpop.f32.mrf.mxu0
        %v1196 = vadd.f32 0.0, %v1195
        %v1197 = vpop.f32.mrf.mxu0
        %v1198 = vadd.f32 0.0, %v1197
        %1199 = vmatprep.mubr.f32.mxu0 0.0
        %1200 = vmatmul.mubr.f32.gmra.mxu0 %v632
        %v1201 = vpop.f32.mrf.mxu0
        %v1202 = vadd.f32 0.0, %v1201
        %v1203 = vpop.f32.mrf.mxu0
        %v1204 = vadd.f32 0.0, %v1203
        %1205 = vmatprep.mubr.f32.mxu0 0.0
        %1206 = vmatmul.mubr.f32.gmra.mxu0 %v635
        %v1207 = vpop.f32.mrf.mxu0
        %v1208 = vadd.f32 0.0, %v1207
        %v1209 = vpop.f32.mrf.mxu0
        %v1210 = vadd.f32 0.0, %v1209
        %1211 = vmatprep.mubr.f32.mxu0 0.0
        %1212 = vmatmul.mubr.f32.gmra.mxu0 %v638
        %v1213 = vpop.f32.mrf.mxu0
        %v1214 = vadd.f32 0.0, %v1213
        %v1215 = vpop.f32.mrf.mxu0
        %v1216 = vadd.f32 0.0, %v1215
        %1217 = vmatprep.mubr.f32.mxu0 0.0
        %1218 = vmatmul.mubr.f32.gmra.mxu0 %v641
        %v1219 = vpop.f32.mrf.mxu0
        %v1220 = vadd.f32 0.0, %v1219
        %v1221 = vpop.f32.mrf.mxu0
        %v1222 = vadd.f32 0.0, %v1221
        %1223 = vmatprep.mubr.f32.mxu0 0.0
        %1224 = vmatmul.mubr.f32.gmra.mxu0 %v644
        %v1225 = vpop.f32.mrf.mxu0
        %v1226 = vadd.f32 0.0, %v1225
        %v1227 = vpop.f32.mrf.mxu0
        %v1228 = vadd.f32 0.0, %v1227
        %1229 = vmatprep.mubr.f32.mxu0 0.0
        %1230 = vmatmul.mubr.f32.gmra.mxu0 %v647
        %v1231 = vpop.f32.mrf.mxu0
        %v1232 = vadd.f32 0.0, %v1231
        %v1233 = vpop.f32.mrf.mxu0
        %v1234 = vadd.f32 0.0, %v1233
        %1235 = vmatprep.mubr.f32.mxu0 0.0
        %1236 = vmatmul.mubr.f32.gmra.mxu0 %v650
        %v1237 = vpop.f32.mrf.mxu0
        %v1238 = vadd.f32 0.0, %v1237
        %v1239 = vpop.f32.mrf.mxu0
        %v1240 = vadd.f32 0.0, %v1239
        %1241 = vmatprep.mubr.f32.mxu0 0.0
        %1242 = vmatmul.mubr.f32.gmra.mxu0 %v653
        %v1243 = vpop.f32.mrf.mxu0
        %v1244 = vadd.f32 0.0, %v1243
        %v1245 = vpop.f32.mrf.mxu0
        %v1246 = vadd.f32 0.0, %v1245
        %1247 = vmatprep.mubr.f32.mxu0 0.0
        %1248 = vmatmul.mubr.f32.gmra.mxu0 %v656
        %v1249 = vpop.f32.mrf.mxu0
        %v1250 = vadd.f32 0.0, %v1249
        %v1251 = vpop.f32.mrf.mxu0
        %v1252 = vadd.f32 0.0, %v1251
        %1253 = vmatprep.mubr.f32.mxu0 0.0
        %1254 = vmatmul.mubr.f32.gmra.mxu0 %v659
        %v1255 = vpop.f32.mrf.mxu0
        %v1256 = vadd.f32 0.0, %v1255
        %v1257 = vpop.f32.mrf.mxu0
        %v1258 = vadd.f32 0.0, %v1257
        %1259 = vmatprep.mubr.f32.mxu0 0.0
        %1260 = vmatmul.mubr.f32.gmra.mxu0 %v662
        %v1261 = vpop.f32.mrf.mxu0
        %v1262 = vadd.f32 0.0, %v1261
        %v1263 = vpop.f32.mrf.mxu0
        %v1264 = vadd.f32 0.0, %v1263
        %1265 = vmatprep.mubr.f32.mxu0 0.0
        %1266 = vmatmul.mubr.f32.gmra.mxu0 %v665
        %v1267 = vpop.f32.mrf.mxu0
        %v1268 = vadd.f32 0.0, %v1267
        %v1269 = vpop.f32.mrf.mxu0
        %v1270 = vadd.f32 0.0, %v1269
        %1271 = vmatprep.mubr.f32.mxu0 0.0
        %1272 = vmatmul.mubr.f32.gmra.mxu0 %v668
        %v1273 = vpop.f32.mrf.mxu0
        %v1274 = vadd.f32 0.0, %v1273
        %v1275 = vpop.f32.mrf.mxu0
        %v1276 = vadd.f32 0.0, %v1275
        %1277 = vmatprep.mubr.f32.mxu0 0.0
        %1278 = vmatmul.mubr.f32.gmra.mxu0 %v671
        %v1279 = vpop.f32.mrf.mxu0
        %v1280 = vadd.f32 0.0, %v1279
        %v1281 = vpop.f32.mrf.mxu0
        %v1282 = vadd.f32 0.0, %v1281
        %1283 = vmatprep.mubr.f32.mxu0 0.0
        %1284 = vmatmul.mubr.f32.gmra.mxu0 %v674
        %v1285 = vpop.f32.mrf.mxu0
        %v1286 = vadd.f32 0.0, %v1285
        %v1287 = vpop.f32.mrf.mxu0
        %v1288 = vadd.f32 0.0, %v1287
        %1289 = vmatprep.mubr.f32.mxu0 0.0
        %1290 = vmatmul.mubr.f32.gmra.mxu0 %v677
        %v1291 = vpop.f32.mrf.mxu0
        %v1292 = vadd.f32 0.0, %v1291
        %v1293 = vpop.f32.mrf.mxu0
        %v1294 = vadd.f32 0.0, %v1293
        %1295 = vmatprep.mubr.f32.mxu0 0.0
        %1296 = vmatmul.mubr.f32.gmra.mxu0 %v680
        %v1297 = vpop.f32.mrf.mxu0
        %v1298 = vadd.f32 0.0, %v1297
        %v1299 = vpop.f32.mrf.mxu0
        %v1300 = vadd.f32 0.0, %v1299
        %1301 = vmatprep.mubr.f32.mxu0 0.0
        %1302 = vmatmul.mubr.f32.gmra.mxu0 %v683
        %v1303 = vpop.f32.mrf.mxu0
        %v1304 = vadd.f32 0.0, %v1303
        %v1305 = vpop.f32.mrf.mxu0
        %v1306 = vadd.f32 0.0, %v1305
        %1307 = vmatprep.mubr.f32.mxu0 0.0
        %1308 = vmatmul.mubr.f32.gmra.mxu0 %v686
        %v1309 = vpop.f32.mrf.mxu0
        %v1310 = vadd.f32 0.0, %v1309
        %v1311 = vpop.f32.mrf.mxu0
        %v1312 = vadd.f32 0.0, %v1311
        %1313 = vmatprep.mubr.f32.mxu0 0.0
        %1314 = vmatmul.mubr.f32.gmra.mxu0 %v689
        %v1315 = vpop.f32.mrf.mxu0
        %v1316 = vadd.f32 0.0, %v1315
        %v1317 = vpop.f32.mrf.mxu0
        %v1318 = vadd.f32 0.0, %v1317
        %1319 = vmatprep.mubr.f32.mxu0 0.0
        %1320 = vmatmul.mubr.f32.gmra.mxu0 %v692
        %v1321 = vpop.f32.mrf.mxu0
        %v1322 = vadd.f32 0.0, %v1321
        %v1323 = vpop.f32.mrf.mxu0
        %v1324 = vadd.f32 0.0, %v1323
        %1325 = vmatprep.mubr.f32.mxu0 0.0
        %1326 = vmatmul.mubr.f32.gmra.mxu0 %v695
        %v1327 = vpop.f32.mrf.mxu0
        %v1328 = vadd.f32 0.0, %v1327
        %v1329 = vpop.f32.mrf.mxu0
        %v1330 = vadd.f32 0.0, %v1329
        %1331 = vmatprep.mubr.f32.mxu0 0.0
        %1332 = vmatmul.mubr.f32.gmra.mxu0 %v698
        %v1333 = vpop.f32.mrf.mxu0
        %v1334 = vadd.f32 0.0, %v1333
        %v1335 = vpop.f32.mrf.mxu0
        %v1336 = vadd.f32 0.0, %v1335
        %1337 = vmatprep.mubr.f32.mxu0 0.0
        %1338 = vmatmul.mubr.f32.gmra.mxu0 %v701
        %v1339 = vpop.f32.mrf.mxu0
        %v1340 = vadd.f32 0.0, %v1339
        %v1341 = vpop.f32.mrf.mxu0
        %v1342 = vadd.f32 0.0, %v1341
        %1343 = vmatprep.mubr.f32.mxu0 0.0
        %1344 = vmatmul.mubr.f32.gmra.mxu0 %v704
        %v1345 = vpop.f32.mrf.mxu0
        %v1346 = vadd.f32 0.0, %v1345
        %v1347 = vpop.f32.mrf.mxu0
        %v1348 = vadd.f32 0.0, %v1347
        %1349 = vmatprep.mubr.f32.mxu0 0.0
        %1350 = vmatmul.mubr.f32.gmra.mxu0 %v707
        %v1351 = vpop.f32.mrf.mxu0
        %v1352 = vadd.f32 0.0, %v1351
        %v1353 = vpop.f32.mrf.mxu0
        %v1354 = vadd.f32 0.0, %v1353
        %1355 = vmatprep.mubr.f32.mxu0 0.0
        %1356 = vmatmul.mubr.f32.gmra.mxu0 %v710
        %v1357 = vpop.f32.mrf.mxu0
        %v1358 = vadd.f32 0.0, %v1357
        %v1359 = vpop.f32.mrf.mxu0
        %v1360 = vadd.f32 0.0, %v1359
        %1361 = vdwg.mxu0
        %1362 = vmatprep.subr.mxu0 0.0
        %1363 = vmatpush1.msra.mxu0 0.0
        %1364 = vmatprep.subr.mxu0 0.0
        %1365 = vmatpush1.msra.mxu0 0.0
        %1366 = vmatprep.subr.mxu0 0.0
        %1367 = vmatpush1.msra.mxu0 0.0
        %1368 = vmatprep.subr.mxu0 0.0
        %1369 = vmatpush1.msra.mxu0 0.0
        %1370 = vmatprep.subr.mxu0 0.0
        %1371 = vmatpush1.msra.mxu0 0.0
        %1372 = vmatprep.subr.mxu0 0.0
        %1373 = vmatpush1.msra.mxu0 0.0
        %1374 = vmatprep.subr.mxu0 0.0
        %1375 = vmatpush1.msra.mxu0 0.0
        %1376 = vmatprep.subr.mxu0 0.0
        %1377 = vmatpush1.msra.mxu0 0.0
        %1378 = vmatprep.subr.mxu0 0.0
        %1379 = vmatpush1.msra.mxu0 0.0
        %1380 = vmatprep.subr.mxu0 0.0
        %1381 = vmatpush1.msra.mxu0 0.0
        %1382 = vmatprep.subr.mxu0 0.0
        %1383 = vmatpush1.msra.mxu0 0.0
        %1384 = vmatprep.subr.mxu0 0.0
        %1385 = vmatpush1.msra.mxu0 0.0
        %1386 = vmatprep.subr.mxu0 0.0
        %1387 = vmatpush1.msra.mxu0 0.0
        %1388 = vmatprep.subr.mxu0 0.0
        %1389 = vmatpush1.msra.mxu0 0.0
        %1390 = vmatprep.subr.mxu0 0.0
        %1391 = vmatpush1.msra.mxu0 0.0
        %1392 = vmatprep.subr.mxu0 %v719
        %1393 = vmatpush1.msra.mxu0 %v717
        %1394 = vmatprep.subr.mxu0 0.0
        %1395 = vmatpush2.msra.mxu0 0.0
        %1396 = vmatprep.subr.mxu0 0.0
        %1397 = vmatpush2.msra.mxu0 0.0
        %1398 = vmatprep.subr.mxu0 0.0
        %1399 = vmatpush2.msra.mxu0 0.0
        %1400 = vmatprep.subr.mxu0 0.0
        %1401 = vmatpush2.msra.mxu0 0.0
        %1402 = vmatprep.subr.mxu0 0.0
        %1403 = vmatpush2.msra.mxu0 0.0
        %1404 = vmatprep.subr.mxu0 0.0
        %1405 = vmatpush2.msra.mxu0 0.0
        %1406 = vmatprep.subr.mxu0 0.0
        %1407 = vmatpush2.msra.mxu0 0.0
        %1408 = vmatprep.subr.mxu0 0.0
        %1409 = vmatpush2.msra.mxu0 0.0
        %1410 = vmatprep.subr.mxu0 0.0
        %1411 = vmatpush2.msra.mxu0 0.0
        %1412 = vmatprep.subr.mxu0 0.0
        %1413 = vmatpush2.msra.mxu0 0.0
        %1414 = vmatprep.subr.mxu0 0.0
        %1415 = vmatpush2.msra.mxu0 0.0
        %1416 = vmatprep.subr.mxu0 0.0
        %1417 = vmatpush2.msra.mxu0 0.0
        %1418 = vmatprep.subr.mxu0 0.0
        %1419 = vmatpush2.msra.mxu0 0.0
        %1420 = vmatprep.subr.mxu0 0.0
        %1421 = vmatpush2.msra.mxu0 0.0
        %1422 = vmatprep.subr.mxu0 0.0
        %1423 = vmatpush2.msra.mxu0 0.0
        %1424 = vmatprep.subr.mxu0 0.0
        %1425 = vmatpush2.msra.mxu0 0.0
        %1426 = vmatprep.mubr.f32.mxu0 0.0
        %1427 = vmatmul.mubr.f32.gmra.mxu0 %v425
        %v1428 = vpop.f32.mrf.mxu0
        %v1429 = vadd.f32 0.0, %v1428
        %v1430 = vpop.f32.mrf.mxu0
        %v1431 = vadd.f32 0.0, %v1430
        %1432 = vmatprep.mubr.f32.mxu0 0.0
        %1433 = vmatmul.mubr.f32.gmra.mxu0 %v428
        %v1434 = vpop.f32.mrf.mxu0
        %v1435 = vadd.f32 0.0, %v1434
        %v1436 = vpop.f32.mrf.mxu0
        %v1437 = vadd.f32 0.0, %v1436
        %1438 = vmatprep.mubr.f32.mxu0 0.0
        %1439 = vmatmul.mubr.f32.gmra.mxu0 %v431
        %v1440 = vpop.f32.mrf.mxu0
        %v1441 = vadd.f32 0.0, %v1440
        %v1442 = vpop.f32.mrf.mxu0
        %v1443 = vadd.f32 0.0, %v1442
        %1444 = vmatprep.mubr.f32.mxu0 0.0
        %1445 = vmatmul.mubr.f32.gmra.mxu0 %v434
        %v1446 = vpop.f32.mrf.mxu0
        %v1447 = vadd.f32 0.0, %v1446
        %v1448 = vpop.f32.mrf.mxu0
        %v1449 = vadd.f32 0.0, %v1448
        %1450 = vmatprep.mubr.f32.mxu0 0.0
        %1451 = vmatmul.mubr.f32.gmra.mxu0 %v437
        %v1452 = vpop.f32.mrf.mxu0
        %v1453 = vadd.f32 0.0, %v1452
        %v1454 = vpop.f32.mrf.mxu0
        %v1455 = vadd.f32 0.0, %v1454
        %1456 = vmatprep.mubr.f32.mxu0 0.0
        %1457 = vmatmul.mubr.f32.gmra.mxu0 %v440
        %v1458 = vpop.f32.mrf.mxu0
        %v1459 = vadd.f32 0.0, %v1458
        %v1460 = vpop.f32.mrf.mxu0
        %v1461 = vadd.f32 0.0, %v1460
        %1462 = vmatprep.mubr.f32.mxu0 0.0
        %1463 = vmatmul.mubr.f32.gmra.mxu0 %v443
        %v1464 = vpop.f32.mrf.mxu0
        %v1465 = vadd.f32 0.0, %v1464
        %v1466 = vpop.f32.mrf.mxu0
        %v1467 = vadd.f32 0.0, %v1466
        %1468 = vmatprep.mubr.f32.mxu0 0.0
        %1469 = vmatmul.mubr.f32.gmra.mxu0 %v446
        %v1470 = vpop.f32.mrf.mxu0
        %v1471 = vadd.f32 0.0, %v1470
        %v1472 = vpop.f32.mrf.mxu0
        %v1473 = vadd.f32 0.0, %v1472
        %1474 = vmatprep.mubr.f32.mxu0 0.0
        %1475 = vmatmul.mubr.f32.gmra.mxu0 %v449
        %v1476 = vpop.f32.mrf.mxu0
        %v1477 = vadd.f32 0.0, %v1476
        %v1478 = vpop.f32.mrf.mxu0
        %v1479 = vadd.f32 0.0, %v1478
        %1480 = vmatprep.mubr.f32.mxu0 0.0
        %1481 = vmatmul.mubr.f32.gmra.mxu0 %v452
        %v1482 = vpop.f32.mrf.mxu0
        %v1483 = vadd.f32 0.0, %v1482
        %v1484 = vpop.f32.mrf.mxu0
        %v1485 = vadd.f32 0.0, %v1484
        %1486 = vmatprep.mubr.f32.mxu0 0.0
        %1487 = vmatmul.mubr.f32.gmra.mxu0 %v455
        %v1488 = vpop.f32.mrf.mxu0
        %v1489 = vadd.f32 0.0, %v1488
        %v1490 = vpop.f32.mrf.mxu0
        %v1491 = vadd.f32 0.0, %v1490
        %1492 = vmatprep.mubr.f32.mxu0 0.0
        %1493 = vmatmul.mubr.f32.gmra.mxu0 %v458
        %v1494 = vpop.f32.mrf.mxu0
        %v1495 = vadd.f32 0.0, %v1494
        %v1496 = vpop.f32.mrf.mxu0
        %v1497 = vadd.f32 0.0, %v1496
        %1498 = vmatprep.mubr.f32.mxu0 0.0
        %1499 = vmatmul.mubr.f32.gmra.mxu0 %v461
        %v1500 = vpop.f32.mrf.mxu0
        %v1501 = vadd.f32 0.0, %v1500
        %v1502 = vpop.f32.mrf.mxu0
        %v1503 = vadd.f32 0.0, %v1502
        %1504 = vmatprep.mubr.f32.mxu0 0.0
        %1505 = vmatmul.mubr.f32.gmra.mxu0 %v464
        %v1506 = vpop.f32.mrf.mxu0
        %v1507 = vadd.f32 0.0, %v1506
        %v1508 = vpop.f32.mrf.mxu0
        %v1509 = vadd.f32 0.0, %v1508
        %1510 = vmatprep.mubr.f32.mxu0 0.0
        %1511 = vmatmul.mubr.f32.gmra.mxu0 %v467
        %v1512 = vpop.f32.mrf.mxu0
        %v1513 = vadd.f32 0.0, %v1512
        %v1514 = vpop.f32.mrf.mxu0
        %v1515 = vadd.f32 0.0, %v1514
        %1516 = vmatprep.mubr.f32.mxu0 0.0
        %1517 = vmatmul.mubr.f32.gmra.mxu0 %v470
        %v1518 = vpop.f32.mrf.mxu0
        %v1519 = vadd.f32 0.0, %v1518
        %v1520 = vpop.f32.mrf.mxu0
        %v1521 = vadd.f32 0.0, %v1520
        %1522 = vmatprep.mubr.f32.mxu0 0.0
        %1523 = vmatmul.mubr.f32.gmra.mxu0 %v473
        %v1524 = vpop.f32.mrf.mxu0
        %v1525 = vadd.f32 0.0, %v1524
        %v1526 = vpop.f32.mrf.mxu0
        %v1527 = vadd.f32 0.0, %v1526
        %1528 = vmatprep.mubr.f32.mxu0 0.0
        %1529 = vmatmul.mubr.f32.gmra.mxu0 %v476
        %v1530 = vpop.f32.mrf.mxu0
        %v1531 = vadd.f32 0.0, %v1530
        %v1532 = vpop.f32.mrf.mxu0
        %v1533 = vadd.f32 0.0, %v1532
        %1534 = vmatprep.mubr.f32.mxu0 0.0
        %1535 = vmatmul.mubr.f32.gmra.mxu0 %v479
        %v1536 = vpop.f32.mrf.mxu0
        %v1537 = vadd.f32 0.0, %v1536
        %v1538 = vpop.f32.mrf.mxu0
        %v1539 = vadd.f32 0.0, %v1538
        %1540 = vmatprep.mubr.f32.mxu0 0.0
        %1541 = vmatmul.mubr.f32.gmra.mxu0 %v482
        %v1542 = vpop.f32.mrf.mxu0
        %v1543 = vadd.f32 0.0, %v1542
        %v1544 = vpop.f32.mrf.mxu0
        %v1545 = vadd.f32 0.0, %v1544
        %1546 = vmatprep.mubr.f32.mxu0 0.0
        %1547 = vmatmul.mubr.f32.gmra.mxu0 %v485
        %v1548 = vpop.f32.mrf.mxu0
        %v1549 = vadd.f32 0.0, %v1548
        %v1550 = vpop.f32.mrf.mxu0
        %v1551 = vadd.f32 0.0, %v1550
        %1552 = vmatprep.mubr.f32.mxu0 0.0
        %1553 = vmatmul.mubr.f32.gmra.mxu0 %v488
        %v1554 = vpop.f32.mrf.mxu0
        %v1555 = vadd.f32 0.0, %v1554
        %v1556 = vpop.f32.mrf.mxu0
        %v1557 = vadd.f32 0.0, %v1556
        %1558 = vmatprep.mubr.f32.mxu0 0.0
        %1559 = vmatmul.mubr.f32.gmra.mxu0 %v491
        %v1560 = vpop.f32.mrf.mxu0
        %v1561 = vadd.f32 0.0, %v1560
        %v1562 = vpop.f32.mrf.mxu0
        %v1563 = vadd.f32 0.0, %v1562
        %1564 = vmatprep.mubr.f32.mxu0 0.0
        %1565 = vmatmul.mubr.f32.gmra.mxu0 %v494
        %v1566 = vpop.f32.mrf.mxu0
        %v1567 = vadd.f32 0.0, %v1566
        %v1568 = vpop.f32.mrf.mxu0
        %v1569 = vadd.f32 0.0, %v1568
        %1570 = vmatprep.mubr.f32.mxu0 0.0
        %1571 = vmatmul.mubr.f32.gmra.mxu0 %v497
        %v1572 = vpop.f32.mrf.mxu0
        %v1573 = vadd.f32 0.0, %v1572
        %v1574 = vpop.f32.mrf.mxu0
        %v1575 = vadd.f32 0.0, %v1574
        %1576 = vmatprep.mubr.f32.mxu0 0.0
        %1577 = vmatmul.mubr.f32.gmra.mxu0 %v500
        %v1578 = vpop.f32.mrf.mxu0
        %v1579 = vadd.f32 0.0, %v1578
        %v1580 = vpop.f32.mrf.mxu0
        %v1581 = vadd.f32 0.0, %v1580
        %1582 = vmatprep.mubr.f32.mxu0 0.0
        %1583 = vmatmul.mubr.f32.gmra.mxu0 %v503
        %v1584 = vpop.f32.mrf.mxu0
        %v1585 = vadd.f32 0.0, %v1584
        %v1586 = vpop.f32.mrf.mxu0
        %v1587 = vadd.f32 0.0, %v1586
        %1588 = vmatprep.mubr.f32.mxu0 0.0
        %1589 = vmatmul.mubr.f32.gmra.mxu0 %v506
        %v1590 = vpop.f32.mrf.mxu0
        %v1591 = vadd.f32 0.0, %v1590
        %v1592 = vpop.f32.mrf.mxu0
        %v1593 = vadd.f32 0.0, %v1592
        %1594 = vmatprep.mubr.f32.mxu0 0.0
        %1595 = vmatmul.mubr.f32.gmra.mxu0 %v509
        %v1596 = vpop.f32.mrf.mxu0
        %v1597 = vadd.f32 0.0, %v1596
        %v1598 = vpop.f32.mrf.mxu0
        %v1599 = vadd.f32 0.0, %v1598
        %1600 = vmatprep.mubr.f32.mxu0 0.0
        %1601 = vmatmul.mubr.f32.gmra.mxu0 %v512
        %v1602 = vpop.f32.mrf.mxu0
        %v1603 = vadd.f32 0.0, %v1602
        %v1604 = vpop.f32.mrf.mxu0
        %v1605 = vadd.f32 0.0, %v1604
        %1606 = vmatprep.mubr.f32.mxu0 0.0
        %1607 = vmatmul.mubr.f32.gmra.mxu0 %v515
        %v1608 = vpop.f32.mrf.mxu0
        %v1609 = vadd.f32 0.0, %v1608
        %v1610 = vpop.f32.mrf.mxu0
        %v1611 = vadd.f32 0.0, %v1610
        %1612 = vmatprep.mubr.f32.mxu0 0.0
        %1613 = vmatmul.mubr.f32.gmra.mxu0 %v518
        %v1614 = vpop.f32.mrf.mxu0
        %v1615 = vadd.f32 0.0, %v1614
        %v1616 = vpop.f32.mrf.mxu0
        %v1617 = vadd.f32 0.0, %v1616
        %1618 = vmatprep.mubr.f32.mxu0 0.0
        %1619 = vmatmul.mubr.f32.gmra.mxu0 %v521
        %v1620 = vpop.f32.mrf.mxu0
        %v1621 = vadd.f32 0.0, %v1620
        %v1622 = vpop.f32.mrf.mxu0
        %v1623 = vadd.f32 0.0, %v1622
        %1624 = vmatprep.mubr.f32.mxu0 0.0
        %1625 = vmatmul.mubr.f32.gmra.mxu0 %v524
        %v1626 = vpop.f32.mrf.mxu0
        %v1627 = vadd.f32 0.0, %v1626
        %v1628 = vpop.f32.mrf.mxu0
        %v1629 = vadd.f32 0.0, %v1628
        %1630 = vmatprep.mubr.f32.mxu0 0.0
        %1631 = vmatmul.mubr.f32.gmra.mxu0 %v527
        %v1632 = vpop.f32.mrf.mxu0
        %v1633 = vadd.f32 0.0, %v1632
        %v1634 = vpop.f32.mrf.mxu0
        %v1635 = vadd.f32 0.0, %v1634
        %1636 = vmatprep.mubr.f32.mxu0 0.0
        %1637 = vmatmul.mubr.f32.gmra.mxu0 %v530
        %v1638 = vpop.f32.mrf.mxu0
        %v1639 = vadd.f32 0.0, %v1638
        %v1640 = vpop.f32.mrf.mxu0
        %v1641 = vadd.f32 0.0, %v1640
        %1642 = vmatprep.mubr.f32.mxu0 0.0
        %1643 = vmatmul.mubr.f32.gmra.mxu0 %v533
        %v1644 = vpop.f32.mrf.mxu0
        %v1645 = vadd.f32 0.0, %v1644
        %v1646 = vpop.f32.mrf.mxu0
        %v1647 = vadd.f32 0.0, %v1646
        %1648 = vmatprep.mubr.f32.mxu0 0.0
        %1649 = vmatmul.mubr.f32.gmra.mxu0 %v536
        %v1650 = vpop.f32.mrf.mxu0
        %v1651 = vadd.f32 0.0, %v1650
        %v1652 = vpop.f32.mrf.mxu0
        %v1653 = vadd.f32 0.0, %v1652
        %1654 = vmatprep.mubr.f32.mxu0 0.0
        %1655 = vmatmul.mubr.f32.gmra.mxu0 %v539
        %v1656 = vpop.f32.mrf.mxu0
        %v1657 = vadd.f32 0.0, %v1656
        %v1658 = vpop.f32.mrf.mxu0
        %v1659 = vadd.f32 0.0, %v1658
        %1660 = vmatprep.mubr.f32.mxu0 0.0
        %1661 = vmatmul.mubr.f32.gmra.mxu0 %v542
        %v1662 = vpop.f32.mrf.mxu0
        %v1663 = vadd.f32 0.0, %v1662
        %v1664 = vpop.f32.mrf.mxu0
        %v1665 = vadd.f32 0.0, %v1664
        %1666 = vmatprep.mubr.f32.mxu0 0.0
        %1667 = vmatmul.mubr.f32.gmra.mxu0 %v545
        %v1668 = vpop.f32.mrf.mxu0
        %v1669 = vadd.f32 0.0, %v1668
        %v1670 = vpop.f32.mrf.mxu0
        %v1671 = vadd.f32 0.0, %v1670
        %1672 = vmatprep.mubr.f32.mxu0 0.0
        %1673 = vmatmul.mubr.f32.gmra.mxu0 %v548
        %v1674 = vpop.f32.mrf.mxu0
        %v1675 = vadd.f32 0.0, %v1674
        %v1676 = vpop.f32.mrf.mxu0
        %v1677 = vadd.f32 0.0, %v1676
        %1678 = vmatprep.mubr.f32.mxu0 0.0
        %1679 = vmatmul.mubr.f32.gmra.mxu0 %v551
        %v1680 = vpop.f32.mrf.mxu0
        %v1681 = vadd.f32 0.0, %v1680
        %v1682 = vpop.f32.mrf.mxu0
        %v1683 = vadd.f32 0.0, %v1682
        %1684 = vmatprep.mubr.f32.mxu0 0.0
        %1685 = vmatmul.mubr.f32.gmra.mxu0 %v554
        %v1686 = vpop.f32.mrf.mxu0
        %v1687 = vadd.f32 0.0, %v1686
        %v1688 = vpop.f32.mrf.mxu0
        %v1689 = vadd.f32 0.0, %v1688
        %1690 = vmatprep.mubr.f32.mxu0 0.0
        %1691 = vmatmul.mubr.f32.gmra.mxu0 %v557
        %v1692 = vpop.f32.mrf.mxu0
        %v1693 = vadd.f32 0.0, %v1692
        %v1694 = vpop.f32.mrf.mxu0
        %v1695 = vadd.f32 0.0, %v1694
        %1696 = vmatprep.mubr.f32.mxu0 0.0
        %1697 = vmatmul.mubr.f32.gmra.mxu0 %v560
        %v1698 = vpop.f32.mrf.mxu0
        %v1699 = vadd.f32 0.0, %v1698
        %v1700 = vpop.f32.mrf.mxu0
        %v1701 = vadd.f32 0.0, %v1700
        %1702 = vmatprep.mubr.f32.mxu0 0.0
        %1703 = vmatmul.mubr.f32.gmra.mxu0 %v563
        %v1704 = vpop.f32.mrf.mxu0
        %v1705 = vadd.f32 0.0, %v1704
        %v1706 = vpop.f32.mrf.mxu0
        %v1707 = vadd.f32 0.0, %v1706
        %1708 = vmatprep.mubr.f32.mxu0 0.0
        %1709 = vmatmul.mubr.f32.gmra.mxu0 %v566
        %v1710 = vpop.f32.mrf.mxu0
        %v1711 = vadd.f32 0.0, %v1710
        %v1712 = vpop.f32.mrf.mxu0
        %v1713 = vadd.f32 0.0, %v1712
        %1714 = vmatprep.mubr.f32.mxu0 0.0
        %1715 = vmatmul.mubr.f32.gmra.mxu0 %v569
        %v1716 = vpop.f32.mrf.mxu0
        %v1717 = vadd.f32 0.0, %v1716
        %v1718 = vpop.f32.mrf.mxu0
        %v1719 = vadd.f32 0.0, %v1718
        %1720 = vmatprep.mubr.f32.mxu0 0.0
        %1721 = vmatmul.mubr.f32.gmra.mxu0 %v572
        %v1722 = vpop.f32.mrf.mxu0
        %v1723 = vadd.f32 0.0, %v1722
        %v1724 = vpop.f32.mrf.mxu0
        %v1725 = vadd.f32 0.0, %v1724
        %1726 = vmatprep.mubr.f32.mxu0 0.0
        %1727 = vmatmul.mubr.f32.gmra.mxu0 %v575
        %v1728 = vpop.f32.mrf.mxu0
        %v1729 = vadd.f32 0.0, %v1728
        %v1730 = vpop.f32.mrf.mxu0
        %v1731 = vadd.f32 0.0, %v1730
        %1732 = vmatprep.mubr.f32.mxu0 0.0
        %1733 = vmatmul.mubr.f32.gmra.mxu0 %v578
        %v1734 = vpop.f32.mrf.mxu0
        %v1735 = vadd.f32 0.0, %v1734
        %v1736 = vpop.f32.mrf.mxu0
        %v1737 = vadd.f32 0.0, %v1736
        %1738 = vmatprep.mubr.f32.mxu0 0.0
        %1739 = vmatmul.mubr.f32.gmra.mxu0 %v581
        %v1740 = vpop.f32.mrf.mxu0
        %v1741 = vadd.f32 0.0, %v1740
        %v1742 = vpop.f32.mrf.mxu0
        %v1743 = vadd.f32 0.0, %v1742
        %1744 = vmatprep.mubr.f32.mxu0 0.0
        %1745 = vmatmul.mubr.f32.gmra.mxu0 %v584
        %v1746 = vpop.f32.mrf.mxu0
        %v1747 = vadd.f32 0.0, %v1746
        %v1748 = vpop.f32.mrf.mxu0
        %v1749 = vadd.f32 0.0, %v1748
        %1750 = vmatprep.mubr.f32.mxu0 0.0
        %1751 = vmatmul.mubr.f32.gmra.mxu0 %v587
        %v1752 = vpop.f32.mrf.mxu0
        %v1753 = vadd.f32 0.0, %v1752
        %v1754 = vpop.f32.mrf.mxu0
        %v1755 = vadd.f32 0.0, %v1754
        %1756 = vmatprep.mubr.f32.mxu0 0.0
        %1757 = vmatmul.mubr.f32.gmra.mxu0 %v590
        %v1758 = vpop.f32.mrf.mxu0
        %v1759 = vadd.f32 0.0, %v1758
        %v1760 = vpop.f32.mrf.mxu0
        %v1761 = vadd.f32 0.0, %v1760
        %1762 = vmatprep.mubr.f32.mxu0 0.0
        %1763 = vmatmul.mubr.f32.gmra.mxu0 %v593
        %v1764 = vpop.f32.mrf.mxu0
        %v1765 = vadd.f32 0.0, %v1764
        %v1766 = vpop.f32.mrf.mxu0
        %v1767 = vadd.f32 0.0, %v1766
        %1768 = vmatprep.mubr.f32.mxu0 0.0
        %1769 = vmatmul.mubr.f32.gmra.mxu0 %v596
        %v1770 = vpop.f32.mrf.mxu0
        %v1771 = vadd.f32 0.0, %v1770
        %v1772 = vpop.f32.mrf.mxu0
        %v1773 = vadd.f32 0.0, %v1772
        %1774 = vmatprep.mubr.f32.mxu0 0.0
        %1775 = vmatmul.mubr.f32.gmra.mxu0 %v599
        %v1776 = vpop.f32.mrf.mxu0
        %v1777 = vadd.f32 0.0, %v1776
        %v1778 = vpop.f32.mrf.mxu0
        %v1779 = vadd.f32 0.0, %v1778
        %1780 = vmatprep.mubr.f32.mxu0 0.0
        %1781 = vmatmul.mubr.f32.gmra.mxu0 %v602
        %v1782 = vpop.f32.mrf.mxu0
        %v1783 = vadd.f32 0.0, %v1782
        %v1784 = vpop.f32.mrf.mxu0
        %v1785 = vadd.f32 0.0, %v1784
        %1786 = vmatprep.mubr.f32.mxu0 0.0
        %1787 = vmatmul.mubr.f32.gmra.mxu0 %v605
        %v1788 = vpop.f32.mrf.mxu0
        %v1789 = vadd.f32 0.0, %v1788
        %v1790 = vpop.f32.mrf.mxu0
        %v1791 = vadd.f32 0.0, %v1790
        %1792 = vmatprep.mubr.f32.mxu0 0.0
        %1793 = vmatmul.mubr.f32.gmra.mxu0 %v608
        %v1794 = vpop.f32.mrf.mxu0
        %v1795 = vadd.f32 0.0, %v1794
        %v1796 = vpop.f32.mrf.mxu0
        %v1797 = vadd.f32 0.0, %v1796
        %1798 = vmatprep.mubr.f32.mxu0 0.0
        %1799 = vmatmul.mubr.f32.gmra.mxu0 %v611
        %v1800 = vpop.f32.mrf.mxu0
        %v1801 = vadd.f32 0.0, %v1800
        %v1802 = vpop.f32.mrf.mxu0
        %v1803 = vadd.f32 0.0, %v1802
        %1804 = vmatprep.mubr.f32.mxu0 0.0
        %1805 = vmatmul.mubr.f32.gmra.mxu0 %v614
        %v1806 = vpop.f32.mrf.mxu0
        %v1807 = vadd.f32 0.0, %v1806
        %v1808 = vpop.f32.mrf.mxu0
        %v1809 = vadd.f32 0.0, %v1808
        %1810 = vmatprep.mubr.f32.mxu0 0.0
        %1811 = vmatmul.mubr.f32.gmra.mxu0 %v617
        %v1812 = vpop.f32.mrf.mxu0
        %v1813 = vadd.f32 0.0, %v1812
        %v1814 = vpop.f32.mrf.mxu0
        %v1815 = vadd.f32 0.0, %v1814
        %1816 = vmatprep.mubr.f32.mxu0 0.0
        %1817 = vmatmul.mubr.f32.gmra.mxu0 %v620
        %v1818 = vpop.f32.mrf.mxu0
        %v1819 = vadd.f32 0.0, %v1818
        %v1820 = vpop.f32.mrf.mxu0
        %v1821 = vadd.f32 0.0, %v1820
        %1822 = vmatprep.mubr.f32.mxu0 0.0
        %1823 = vmatmul.mubr.f32.gmra.mxu0 %v623
        %v1824 = vpop.f32.mrf.mxu0
        %v1825 = vadd.f32 0.0, %v1824
        %v1826 = vpop.f32.mrf.mxu0
        %v1827 = vadd.f32 0.0, %v1826
        %1828 = vmatprep.mubr.f32.mxu0 0.0
        %1829 = vmatmul.mubr.f32.gmra.mxu0 %v626
        %v1830 = vpop.f32.mrf.mxu0
        %v1831 = vadd.f32 0.0, %v1830
        %v1832 = vpop.f32.mrf.mxu0
        %v1833 = vadd.f32 0.0, %v1832
        %1834 = vmatprep.mubr.f32.mxu0 0.0
        %1835 = vmatmul.mubr.f32.gmra.mxu0 %v629
        %v1836 = vpop.f32.mrf.mxu0
        %v1837 = vadd.f32 0.0, %v1836
        %v1838 = vpop.f32.mrf.mxu0
        %v1839 = vadd.f32 0.0, %v1838
        %1840 = vmatprep.mubr.f32.mxu0 0.0
        %1841 = vmatmul.mubr.f32.gmra.mxu0 %v632
        %v1842 = vpop.f32.mrf.mxu0
        %v1843 = vadd.f32 0.0, %v1842
        %v1844 = vpop.f32.mrf.mxu0
        %v1845 = vadd.f32 0.0, %v1844
        %1846 = vmatprep.mubr.f32.mxu0 0.0
        %1847 = vmatmul.mubr.f32.gmra.mxu0 %v635
        %v1848 = vpop.f32.mrf.mxu0
        %v1849 = vadd.f32 0.0, %v1848
        %v1850 = vpop.f32.mrf.mxu0
        %v1851 = vadd.f32 0.0, %v1850
        %1852 = vmatprep.mubr.f32.mxu0 0.0
        %1853 = vmatmul.mubr.f32.gmra.mxu0 %v638
        %v1854 = vpop.f32.mrf.mxu0
        %v1855 = vadd.f32 0.0, %v1854
        %v1856 = vpop.f32.mrf.mxu0
        %v1857 = vadd.f32 0.0, %v1856
        %1858 = vmatprep.mubr.f32.mxu0 0.0
        %1859 = vmatmul.mubr.f32.gmra.mxu0 %v641
        %v1860 = vpop.f32.mrf.mxu0
        %v1861 = vadd.f32 0.0, %v1860
        %v1862 = vpop.f32.mrf.mxu0
        %v1863 = vadd.f32 0.0, %v1862
        %1864 = vmatprep.mubr.f32.mxu0 0.0
        %1865 = vmatmul.mubr.f32.gmra.mxu0 %v644
        %v1866 = vpop.f32.mrf.mxu0
        %v1867 = vadd.f32 0.0, %v1866
        %v1868 = vpop.f32.mrf.mxu0
        %v1869 = vadd.f32 0.0, %v1868
        %1870 = vmatprep.mubr.f32.mxu0 0.0
        %1871 = vmatmul.mubr.f32.gmra.mxu0 %v647
        %v1872 = vpop.f32.mrf.mxu0
        %v1873 = vadd.f32 0.0, %v1872
        %v1874 = vpop.f32.mrf.mxu0
        %v1875 = vadd.f32 0.0, %v1874
        %1876 = vmatprep.mubr.f32.mxu0 0.0
        %1877 = vmatmul.mubr.f32.gmra.mxu0 %v650
        %v1878 = vpop.f32.mrf.mxu0
        %v1879 = vadd.f32 0.0, %v1878
        %v1880 = vpop.f32.mrf.mxu0
        %v1881 = vadd.f32 0.0, %v1880
        %1882 = vmatprep.mubr.f32.mxu0 0.0
        %1883 = vmatmul.mubr.f32.gmra.mxu0 %v653
        %v1884 = vpop.f32.mrf.mxu0
        %v1885 = vadd.f32 0.0, %v1884
        %v1886 = vpop.f32.mrf.mxu0
        %v1887 = vadd.f32 0.0, %v1886
        %1888 = vmatprep.mubr.f32.mxu0 0.0
        %1889 = vmatmul.mubr.f32.gmra.mxu0 %v656
        %v1890 = vpop.f32.mrf.mxu0
        %v1891 = vadd.f32 0.0, %v1890
        %v1892 = vpop.f32.mrf.mxu0
        %v1893 = vadd.f32 0.0, %v1892
        %1894 = vmatprep.mubr.f32.mxu0 0.0
        %1895 = vmatmul.mubr.f32.gmra.mxu0 %v659
        %v1896 = vpop.f32.mrf.mxu0
        %v1897 = vadd.f32 0.0, %v1896
        %v1898 = vpop.f32.mrf.mxu0
        %v1899 = vadd.f32 0.0, %v1898
        %1900 = vmatprep.mubr.f32.mxu0 0.0
        %1901 = vmatmul.mubr.f32.gmra.mxu0 %v662
        %v1902 = vpop.f32.mrf.mxu0
        %v1903 = vadd.f32 0.0, %v1902
        %v1904 = vpop.f32.mrf.mxu0
        %v1905 = vadd.f32 0.0, %v1904
        %1906 = vmatprep.mubr.f32.mxu0 0.0
        %1907 = vmatmul.mubr.f32.gmra.mxu0 %v665
        %v1908 = vpop.f32.mrf.mxu0
        %v1909 = vadd.f32 0.0, %v1908
        %v1910 = vpop.f32.mrf.mxu0
        %v1911 = vadd.f32 0.0, %v1910
        %1912 = vmatprep.mubr.f32.mxu0 0.0
        %1913 = vmatmul.mubr.f32.gmra.mxu0 %v668
        %v1914 = vpop.f32.mrf.mxu0
        %v1915 = vadd.f32 0.0, %v1914
        %v1916 = vpop.f32.mrf.mxu0
        %v1917 = vadd.f32 0.0, %v1916
        %1918 = vmatprep.mubr.f32.mxu0 0.0
        %1919 = vmatmul.mubr.f32.gmra.mxu0 %v671
        %v1920 = vpop.f32.mrf.mxu0
        %v1921 = vadd.f32 0.0, %v1920
        %v1922 = vpop.f32.mrf.mxu0
        %v1923 = vadd.f32 0.0, %v1922
        %1924 = vmatprep.mubr.f32.mxu0 0.0
        %1925 = vmatmul.mubr.f32.gmra.mxu0 %v674
        %v1926 = vpop.f32.mrf.mxu0
        %v1927 = vadd.f32 0.0, %v1926
        %v1928 = vpop.f32.mrf.mxu0
        %v1929 = vadd.f32 0.0, %v1928
        %1930 = vmatprep.mubr.f32.mxu0 0.0
        %1931 = vmatmul.mubr.f32.gmra.mxu0 %v677
        %v1932 = vpop.f32.mrf.mxu0
        %v1933 = vadd.f32 0.0, %v1932
        %v1934 = vpop.f32.mrf.mxu0
        %v1935 = vadd.f32 0.0, %v1934
        %1936 = vmatprep.mubr.f32.mxu0 0.0
        %1937 = vmatmul.mubr.f32.gmra.mxu0 %v680
        %v1938 = vpop.f32.mrf.mxu0
        %v1939 = vadd.f32 0.0, %v1938
        %v1940 = vpop.f32.mrf.mxu0
        %v1941 = vadd.f32 0.0, %v1940
        %1942 = vmatprep.mubr.f32.mxu0 0.0
        %1943 = vmatmul.mubr.f32.gmra.mxu0 %v683
        %v1944 = vpop.f32.mrf.mxu0
        %v1945 = vadd.f32 0.0, %v1944
        %v1946 = vpop.f32.mrf.mxu0
        %v1947 = vadd.f32 0.0, %v1946
        %1948 = vmatprep.mubr.f32.mxu0 0.0
        %1949 = vmatmul.mubr.f32.gmra.mxu0 %v686
        %v1950 = vpop.f32.mrf.mxu0
        %v1951 = vadd.f32 0.0, %v1950
        %v1952 = vpop.f32.mrf.mxu0
        %v1953 = vadd.f32 0.0, %v1952
        %1954 = vmatprep.mubr.f32.mxu0 0.0
        %1955 = vmatmul.mubr.f32.gmra.mxu0 %v689
        %v1956 = vpop.f32.mrf.mxu0
        %v1957 = vadd.f32 0.0, %v1956
        %v1958 = vpop.f32.mrf.mxu0
        %v1959 = vadd.f32 0.0, %v1958
        %1960 = vmatprep.mubr.f32.mxu0 0.0
        %1961 = vmatmul.mubr.f32.gmra.mxu0 %v692
        %v1962 = vpop.f32.mrf.mxu0
        %v1963 = vadd.f32 0.0, %v1962
        %v1964 = vpop.f32.mrf.mxu0
        %v1965 = vadd.f32 0.0, %v1964
        %1966 = vmatprep.mubr.f32.mxu0 0.0
        %1967 = vmatmul.mubr.f32.gmra.mxu0 %v695
        %v1968 = vpop.f32.mrf.mxu0
        %v1969 = vadd.f32 0.0, %v1968
        %v1970 = vpop.f32.mrf.mxu0
        %v1971 = vadd.f32 0.0, %v1970
        %1972 = vmatprep.mubr.f32.mxu0 0.0
        %1973 = vmatmul.mubr.f32.gmra.mxu0 %v698
        %v1974 = vpop.f32.mrf.mxu0
        %v1975 = vadd.f32 0.0, %v1974
        %v1976 = vpop.f32.mrf.mxu0
        %v1977 = vadd.f32 0.0, %v1976
        %1978 = vmatprep.mubr.f32.mxu0 0.0
        %1979 = vmatmul.mubr.f32.gmra.mxu0 %v701
        %v1980 = vpop.f32.mrf.mxu0
        %v1981 = vadd.f32 0.0, %v1980
        %v1982 = vpop.f32.mrf.mxu0
        %v1983 = vadd.f32 0.0, %v1982
        %1984 = vmatprep.mubr.f32.mxu0 0.0
        %1985 = vmatmul.mubr.f32.gmra.mxu0 %v704
        %v1986 = vpop.f32.mrf.mxu0
        %v1987 = vadd.f32 0.0, %v1986
        %v1988 = vpop.f32.mrf.mxu0
        %v1989 = vadd.f32 0.0, %v1988
        %1990 = vmatprep.mubr.f32.mxu0 0.0
        %1991 = vmatmul.mubr.f32.gmra.mxu0 %v707
        %v1992 = vpop.f32.mrf.mxu0
        %v1993 = vadd.f32 0.0, %v1992
        %v1994 = vpop.f32.mrf.mxu0
        %v1995 = vadd.f32 0.0, %v1994
        %1996 = vmatprep.mubr.f32.mxu0 0.0
        %1997 = vmatmul.mubr.f32.gmra.mxu0 %v710
        %v1998 = vpop.f32.mrf.mxu0
        %v1999 = vadd.f32 0.0, %v1998
        %v2000 = vpop.f32.mrf.mxu0
        %v2001 = vadd.f32 0.0, %v2000
        %2002 = vdwg.mxu0
        %v2003 = vmin.f32 %v788, %v980
        %v2004 = vmin.f32 %v790, %v982
        %v2005 = vmin.f32 %v1429, %v1621
        %v2006 = vmin.f32 %v1431, %v1623
        %v2007 = vmin.f32 %v794, %v986
        %v2008 = vmin.f32 %v796, %v988
        %v2009 = vmin.f32 %v1435, %v1627
        %v2010 = vmin.f32 %v1437, %v1629
        %v2011 = vmin.f32 %v800, %v992
        %v2012 = vmin.f32 %v802, %v994
        %v2013 = vmin.f32 %v1441, %v1633
        %v2014 = vmin.f32 %v1443, %v1635
        %v2015 = vmin.f32 %v806, %v998
        %v2016 = vmin.f32 %v808, %v1000
        %v2017 = vmin.f32 %v1447, %v1639
        %v2018 = vmin.f32 %v1449, %v1641
        %v2019 = vmin.f32 %v812, %v1004
        %v2020 = vmin.f32 %v814, %v1006
        %v2021 = vmin.f32 %v1453, %v1645
        %v2022 = vmin.f32 %v1455, %v1647
        %v2023 = vmin.f32 %v818, %v1010
        %v2024 = vmin.f32 %v820, %v1012
        %v2025 = vmin.f32 %v1459, %v1651
        %v2026 = vmin.f32 %v1461, %v1653
        %v2027 = vmin.f32 %v824, %v1016
        %v2028 = vmin.f32 %v826, %v1018
        %v2029 = vmin.f32 %v1465, %v1657
        %v2030 = vmin.f32 %v1467, %v1659
        %v2031 = vmin.f32 %v830, %v1022
        %v2032 = vmin.f32 %v832, %v1024
        %v2033 = vmin.f32 %v1471, %v1663
        %v2034 = vmin.f32 %v1473, %v1665
        %v2035 = vmin.f32 %v836, %v1028
        %v2036 = vmin.f32 %v838, %v1030
        %v2037 = vmin.f32 %v1477, %v1669
        %v2038 = vmin.f32 %v1479, %v1671
        %v2039 = vmin.f32 %v842, %v1034
        %v2040 = vmin.f32 %v844, %v1036
        %v2041 = vmin.f32 %v1483, %v1675
        %v2042 = vmin.f32 %v1485, %v1677
        %v2043 = vmin.f32 %v848, %v1040
        %v2044 = vmin.f32 %v850, %v1042
        %v2045 = vmin.f32 %v1489, %v1681
        %v2046 = vmin.f32 %v1491, %v1683
        %v2047 = vmin.f32 %v854, %v1046
        %v2048 = vmin.f32 %v856, %v1048
        %v2049 = vmin.f32 %v1495, %v1687
        %v2050 = vmin.f32 %v1497, %v1689
        %v2051 = vmin.f32 %v860, %v1052
        %v2052 = vmin.f32 %v862, %v1054
        %v2053 = vmin.f32 %v1501, %v1693
        %v2054 = vmin.f32 %v1503, %v1695
        %v2055 = vmin.f32 %v866, %v1058
        %v2056 = vmin.f32 %v868, %v1060
        %v2057 = vmin.f32 %v1507, %v1699
        %v2058 = vmin.f32 %v1509, %v1701
        %v2059 = vmin.f32 %v872, %v1064
        %v2060 = vmin.f32 %v874, %v1066
        %v2061 = vmin.f32 %v1513, %v1705
        %v2062 = vmin.f32 %v1515, %v1707
        %v2063 = vmin.f32 %v878, %v1070
        %v2064 = vmin.f32 %v880, %v1072
        %v2065 = vmin.f32 %v1519, %v1711
        %v2066 = vmin.f32 %v1521, %v1713
        %v2067 = vmin.f32 %v884, %v1076
        %v2068 = vmin.f32 %v886, %v1078
        %v2069 = vmin.f32 %v1525, %v1717
        %v2070 = vmin.f32 %v1527, %v1719
        %v2071 = vmin.f32 %v890, %v1082
        %v2072 = vmin.f32 %v892, %v1084
        %v2073 = vmin.f32 %v1531, %v1723
        %v2074 = vmin.f32 %v1533, %v1725
        %v2075 = vmin.f32 %v896, %v1088
        %v2076 = vmin.f32 %v898, %v1090
        %v2077 = vmin.f32 %v1537, %v1729
        %v2078 = vmin.f32 %v1539, %v1731
        %v2079 = vmin.f32 %v902, %v1094
        %v2080 = vmin.f32 %v904, %v1096
        %v2081 = vmin.f32 %v1543, %v1735
        %v2082 = vmin.f32 %v1545, %v1737
        %v2083 = vmin.f32 %v908, %v1100
        %v2084 = vmin.f32 %v910, %v1102
        %v2085 = vmin.f32 %v1549, %v1741
        %v2086 = vmin.f32 %v1551, %v1743
        %v2087 = vmin.f32 %v914, %v1106
        %v2088 = vmin.f32 %v916, %v1108
        %v2089 = vmin.f32 %v1555, %v1747
        %v2090 = vmin.f32 %v1557, %v1749
        %v2091 = vmin.f32 %v920, %v1112
        %v2092 = vmin.f32 %v922, %v1114
        %v2093 = vmin.f32 %v1561, %v1753
        %v2094 = vmin.f32 %v1563, %v1755
        %v2095 = vmin.f32 %v926, %v1118
        %v2096 = vmin.f32 %v928, %v1120
        %v2097 = vmin.f32 %v1567, %v1759
        %v2098 = vmin.f32 %v1569, %v1761
        %v2099 = vmin.f32 %v932, %v1124
        %v2100 = vmin.f32 %v934, %v1126
        %v2101 = vmin.f32 %v1573, %v1765
        %v2102 = vmin.f32 %v1575, %v1767
        %v2103 = vmin.f32 %v938, %v1130
        %v2104 = vmin.f32 %v940, %v1132
        %v2105 = vmin.f32 %v1579, %v1771
        %v2106 = vmin.f32 %v1581, %v1773
        %v2107 = vmin.f32 %v944, %v1136
        %v2108 = vmin.f32 %v946, %v1138
        %v2109 = vmin.f32 %v1585, %v1777
        %v2110 = vmin.f32 %v1587, %v1779
        %v2111 = vmin.f32 %v950, %v1142
        %v2112 = vmin.f32 %v952, %v1144
        %v2113 = vmin.f32 %v1591, %v1783
        %v2114 = vmin.f32 %v1593, %v1785
        %v2115 = vmin.f32 %v956, %v1148
        %v2116 = vmin.f32 %v958, %v1150
        %v2117 = vmin.f32 %v1597, %v1789
        %v2118 = vmin.f32 %v1599, %v1791
        %v2119 = vmin.f32 %v962, %v1154
        %v2120 = vmin.f32 %v964, %v1156
        %v2121 = vmin.f32 %v1603, %v1795
        %v2122 = vmin.f32 %v1605, %v1797
        %v2123 = vmin.f32 %v968, %v1160
        %v2124 = vmin.f32 %v970, %v1162
        %v2125 = vmin.f32 %v1609, %v1801
        %v2126 = vmin.f32 %v1611, %v1803
        %v2127 = vmin.f32 %v974, %v1166
        %v2128 = vmin.f32 %v976, %v1168
        %v2129 = vmin.f32 %v1615, %v1807
        %v2130 = vmin.f32 %v1617, %v1809
        %v2131 = vsub.f32 1.0, %v788
        %v2132 = vsub.f32 1.0, %v790
        %v2133 = vsub.f32 1.0, %v1429
        %v2134 = vsub.f32 1.0, %v1431
        %v2135 = vsub.f32 1.0, %v794
        %v2136 = vsub.f32 1.0, %v796
        %v2137 = vsub.f32 1.0, %v1435
        %v2138 = vsub.f32 1.0, %v1437
        %v2139 = vsub.f32 1.0, %v800
        %v2140 = vsub.f32 1.0, %v802
        %v2141 = vsub.f32 1.0, %v1441
        %v2142 = vsub.f32 1.0, %v1443
        %v2143 = vsub.f32 1.0, %v806
        %v2144 = vsub.f32 1.0, %v808
        %v2145 = vsub.f32 1.0, %v1447
        %v2146 = vsub.f32 1.0, %v1449
        %v2147 = vsub.f32 1.0, %v812
        %v2148 = vsub.f32 1.0, %v814
        %v2149 = vsub.f32 1.0, %v1453
        %v2150 = vsub.f32 1.0, %v1455
        %v2151 = vsub.f32 1.0, %v818
        %v2152 = vsub.f32 1.0, %v820
        %v2153 = vsub.f32 1.0, %v1459
        %v2154 = vsub.f32 1.0, %v1461
        %v2155 = vsub.f32 1.0, %v824
        %v2156 = vsub.f32 1.0, %v826
        %v2157 = vsub.f32 1.0, %v1465
        %v2158 = vsub.f32 1.0, %v1467
        %v2159 = vsub.f32 1.0, %v830
        %v2160 = vsub.f32 1.0, %v832
        %v2161 = vsub.f32 1.0, %v1471
        %v2162 = vsub.f32 1.0, %v1473
        %v2163 = vsub.f32 1.0, %v836
        %v2164 = vsub.f32 1.0, %v838
        %v2165 = vsub.f32 1.0, %v1477
        %v2166 = vsub.f32 1.0, %v1479
        %v2167 = vsub.f32 1.0, %v842
        %v2168 = vsub.f32 1.0, %v844
        %v2169 = vsub.f32 1.0, %v1483
        %v2170 = vsub.f32 1.0, %v1485
        %v2171 = vsub.f32 1.0, %v848
        %v2172 = vsub.f32 1.0, %v850
        %v2173 = vsub.f32 1.0, %v1489
        %v2174 = vsub.f32 1.0, %v1491
        %v2175 = vsub.f32 1.0, %v854
        %v2176 = vsub.f32 1.0, %v856
        %v2177 = vsub.f32 1.0, %v1495
        %v2178 = vsub.f32 1.0, %v1497
        %v2179 = vsub.f32 1.0, %v860
        %v2180 = vsub.f32 1.0, %v862
        %v2181 = vsub.f32 1.0, %v1501
        %v2182 = vsub.f32 1.0, %v1503
        %v2183 = vsub.f32 1.0, %v866
        %v2184 = vsub.f32 1.0, %v868
        %v2185 = vsub.f32 1.0, %v1507
        %v2186 = vsub.f32 1.0, %v1509
        %v2187 = vsub.f32 1.0, %v872
        %v2188 = vsub.f32 1.0, %v874
        %v2189 = vsub.f32 1.0, %v1513
        %v2190 = vsub.f32 1.0, %v1515
        %v2191 = vsub.f32 1.0, %v878
        %v2192 = vsub.f32 1.0, %v880
        %v2193 = vsub.f32 1.0, %v1519
        %v2194 = vsub.f32 1.0, %v1521
        %v2195 = vsub.f32 1.0, %v884
        %v2196 = vsub.f32 1.0, %v886
        %v2197 = vsub.f32 1.0, %v1525
        %v2198 = vsub.f32 1.0, %v1527
        %v2199 = vsub.f32 1.0, %v890
        %v2200 = vsub.f32 1.0, %v892
        %v2201 = vsub.f32 1.0, %v1531
        %v2202 = vsub.f32 1.0, %v1533
        %v2203 = vsub.f32 1.0, %v896
        %v2204 = vsub.f32 1.0, %v898
        %v2205 = vsub.f32 1.0, %v1537
        %v2206 = vsub.f32 1.0, %v1539
        %v2207 = vsub.f32 1.0, %v902
        %v2208 = vsub.f32 1.0, %v904
        %v2209 = vsub.f32 1.0, %v1543
        %v2210 = vsub.f32 1.0, %v1545
        %v2211 = vsub.f32 1.0, %v908
        %v2212 = vsub.f32 1.0, %v910
        %v2213 = vsub.f32 1.0, %v1549
        %v2214 = vsub.f32 1.0, %v1551
        %v2215 = vsub.f32 1.0, %v914
        %v2216 = vsub.f32 1.0, %v916
        %v2217 = vsub.f32 1.0, %v1555
        %v2218 = vsub.f32 1.0, %v1557
        %v2219 = vsub.f32 1.0, %v920
        %v2220 = vsub.f32 1.0, %v922
        %v2221 = vsub.f32 1.0, %v1561
        %v2222 = vsub.f32 1.0, %v1563
        %v2223 = vsub.f32 1.0, %v926
        %v2224 = vsub.f32 1.0, %v928
        %v2225 = vsub.f32 1.0, %v1567
        %v2226 = vsub.f32 1.0, %v1569
        %v2227 = vsub.f32 1.0, %v932
        %v2228 = vsub.f32 1.0, %v934
        %v2229 = vsub.f32 1.0, %v1573
        %v2230 = vsub.f32 1.0, %v1575
        %v2231 = vsub.f32 1.0, %v938
        %v2232 = vsub.f32 1.0, %v940
        %v2233 = vsub.f32 1.0, %v1579
        %v2234 = vsub.f32 1.0, %v1581
        %v2235 = vsub.f32 1.0, %v944
        %v2236 = vsub.f32 1.0, %v946
        %v2237 = vsub.f32 1.0, %v1585
        %v2238 = vsub.f32 1.0, %v1587
        %v2239 = vsub.f32 1.0, %v950
        %v2240 = vsub.f32 1.0, %v952
        %v2241 = vsub.f32 1.0, %v1591
        %v2242 = vsub.f32 1.0, %v1593
        %v2243 = vsub.f32 1.0, %v956
        %v2244 = vsub.f32 1.0, %v958
        %v2245 = vsub.f32 1.0, %v1597
        %v2246 = vsub.f32 1.0, %v1599
        %v2247 = vsub.f32 1.0, %v962
        %v2248 = vsub.f32 1.0, %v964
        %v2249 = vsub.f32 1.0, %v1603
        %v2250 = vsub.f32 1.0, %v1605
        %v2251 = vsub.f32 1.0, %v968
        %v2252 = vsub.f32 1.0, %v970
        %v2253 = vsub.f32 1.0, %v1609
        %v2254 = vsub.f32 1.0, %v1611
        %v2255 = vsub.f32 1.0, %v974
        %v2256 = vsub.f32 1.0, %v976
        %v2257 = vsub.f32 1.0, %v1615
        %v2258 = vsub.f32 1.0, %v1617
        %v2259 = vsub.f32 %v2131, %v980
        %v2260 = vsub.f32 %v2132, %v982
        %v2261 = vsub.f32 %v2133, %v1621
        %v2262 = vsub.f32 %v2134, %v1623
        %v2263 = vsub.f32 %v2135, %v986
        %v2264 = vsub.f32 %v2136, %v988
        %v2265 = vsub.f32 %v2137, %v1627
        %v2266 = vsub.f32 %v2138, %v1629
        %v2267 = vsub.f32 %v2139, %v992
        %v2268 = vsub.f32 %v2140, %v994
        %v2269 = vsub.f32 %v2141, %v1633
        %v2270 = vsub.f32 %v2142, %v1635
        %v2271 = vsub.f32 %v2143, %v998
        %v2272 = vsub.f32 %v2144, %v1000
        %v2273 = vsub.f32 %v2145, %v1639
        %v2274 = vsub.f32 %v2146, %v1641
        %v2275 = vsub.f32 %v2147, %v1004
        %v2276 = vsub.f32 %v2148, %v1006
        %v2277 = vsub.f32 %v2149, %v1645
        %v2278 = vsub.f32 %v2150, %v1647
        %v2279 = vsub.f32 %v2151, %v1010
        %v2280 = vsub.f32 %v2152, %v1012
        %v2281 = vsub.f32 %v2153, %v1651
        %v2282 = vsub.f32 %v2154, %v1653
        %v2283 = vsub.f32 %v2155, %v1016
        %v2284 = vsub.f32 %v2156, %v1018
        %v2285 = vsub.f32 %v2157, %v1657
        %v2286 = vsub.f32 %v2158, %v1659
        %v2287 = vsub.f32 %v2159, %v1022
        %v2288 = vsub.f32 %v2160, %v1024
        %v2289 = vsub.f32 %v2161, %v1663
        %v2290 = vsub.f32 %v2162, %v1665
        %v2291 = vsub.f32 %v2163, %v1028
        %v2292 = vsub.f32 %v2164, %v1030
        %v2293 = vsub.f32 %v2165, %v1669
        %v2294 = vsub.f32 %v2166, %v1671
        %v2295 = vsub.f32 %v2167, %v1034
        %v2296 = vsub.f32 %v2168, %v1036
        %v2297 = vsub.f32 %v2169, %v1675
        %v2298 = vsub.f32 %v2170, %v1677
        %v2299 = vsub.f32 %v2171, %v1040
        %v2300 = vsub.f32 %v2172, %v1042
        %v2301 = vsub.f32 %v2173, %v1681
        %v2302 = vsub.f32 %v2174, %v1683
        %v2303 = vsub.f32 %v2175, %v1046
        %v2304 = vsub.f32 %v2176, %v1048
        %v2305 = vsub.f32 %v2177, %v1687
        %v2306 = vsub.f32 %v2178, %v1689
        %v2307 = vsub.f32 %v2179, %v1052
        %v2308 = vsub.f32 %v2180, %v1054
        %v2309 = vsub.f32 %v2181, %v1693
        %v2310 = vsub.f32 %v2182, %v1695
        %v2311 = vsub.f32 %v2183, %v1058
        %v2312 = vsub.f32 %v2184, %v1060
        %v2313 = vsub.f32 %v2185, %v1699
        %v2314 = vsub.f32 %v2186, %v1701
        %v2315 = vsub.f32 %v2187, %v1064
        %v2316 = vsub.f32 %v2188, %v1066
        %v2317 = vsub.f32 %v2189, %v1705
        %v2318 = vsub.f32 %v2190, %v1707
        %v2319 = vsub.f32 %v2191, %v1070
        %v2320 = vsub.f32 %v2192, %v1072
        %v2321 = vsub.f32 %v2193, %v1711
        %v2322 = vsub.f32 %v2194, %v1713
        %v2323 = vsub.f32 %v2195, %v1076
        %v2324 = vsub.f32 %v2196, %v1078
        %v2325 = vsub.f32 %v2197, %v1717
        %v2326 = vsub.f32 %v2198, %v1719
        %v2327 = vsub.f32 %v2199, %v1082
        %v2328 = vsub.f32 %v2200, %v1084
        %v2329 = vsub.f32 %v2201, %v1723
        %v2330 = vsub.f32 %v2202, %v1725
        %v2331 = vsub.f32 %v2203, %v1088
        %v2332 = vsub.f32 %v2204, %v1090
        %v2333 = vsub.f32 %v2205, %v1729
        %v2334 = vsub.f32 %v2206, %v1731
        %v2335 = vsub.f32 %v2207, %v1094
        %v2336 = vsub.f32 %v2208, %v1096
        %v2337 = vsub.f32 %v2209, %v1735
        %v2338 = vsub.f32 %v2210, %v1737
        %v2339 = vsub.f32 %v2211, %v1100
        %v2340 = vsub.f32 %v2212, %v1102
        %v2341 = vsub.f32 %v2213, %v1741
        %v2342 = vsub.f32 %v2214, %v1743
        %v2343 = vsub.f32 %v2215, %v1106
        %v2344 = vsub.f32 %v2216, %v1108
        %v2345 = vsub.f32 %v2217, %v1747
        %v2346 = vsub.f32 %v2218, %v1749
        %v2347 = vsub.f32 %v2219, %v1112
        %v2348 = vsub.f32 %v2220, %v1114
        %v2349 = vsub.f32 %v2221, %v1753
        %v2350 = vsub.f32 %v2222, %v1755
        %v2351 = vsub.f32 %v2223, %v1118
        %v2352 = vsub.f32 %v2224, %v1120
        %v2353 = vsub.f32 %v2225, %v1759
        %v2354 = vsub.f32 %v2226, %v1761
        %v2355 = vsub.f32 %v2227, %v1124
        %v2356 = vsub.f32 %v2228, %v1126
        %v2357 = vsub.f32 %v2229, %v1765
        %v2358 = vsub.f32 %v2230, %v1767
        %v2359 = vsub.f32 %v2231, %v1130
        %v2360 = vsub.f32 %v2232, %v1132
        %v2361 = vsub.f32 %v2233, %v1771
        %v2362 = vsub.f32 %v2234, %v1773
        %v2363 = vsub.f32 %v2235, %v1136
        %v2364 = vsub.f32 %v2236, %v1138
        %v2365 = vsub.f32 %v2237, %v1777
        %v2366 = vsub.f32 %v2238, %v1779
        %v2367 = vsub.f32 %v2239, %v1142
        %v2368 = vsub.f32 %v2240, %v1144
        %v2369 = vsub.f32 %v2241, %v1783
        %v2370 = vsub.f32 %v2242, %v1785
        %v2371 = vsub.f32 %v2243, %v1148
        %v2372 = vsub.f32 %v2244, %v1150
        %v2373 = vsub.f32 %v2245, %v1789
        %v2374 = vsub.f32 %v2246, %v1791
        %v2375 = vsub.f32 %v2247, %v1154
        %v2376 = vsub.f32 %v2248, %v1156
        %v2377 = vsub.f32 %v2249, %v1795
        %v2378 = vsub.f32 %v2250, %v1797
        %v2379 = vsub.f32 %v2251, %v1160
        %v2380 = vsub.f32 %v2252, %v1162
        %v2381 = vsub.f32 %v2253, %v1801
        %v2382 = vsub.f32 %v2254, %v1803
        %v2383 = vsub.f32 %v2255, %v1166
        %v2384 = vsub.f32 %v2256, %v1168
        %v2385 = vsub.f32 %v2257, %v1807
        %v2386 = vsub.f32 %v2258, %v1809
        %v2387 = vmin.f32 %v2003, %v2259
        %v2388 = vmin.f32 %v2004, %v2260
        %v2389 = vmin.f32 %v2005, %v2261
        %v2390 = vmin.f32 %v2006, %v2262
        %v2391 = vmin.f32 %v2007, %v2263
        %v2392 = vmin.f32 %v2008, %v2264
        %v2393 = vmin.f32 %v2009, %v2265
        %v2394 = vmin.f32 %v2010, %v2266
        %v2395 = vmin.f32 %v2011, %v2267
        %v2396 = vmin.f32 %v2012, %v2268
        %v2397 = vmin.f32 %v2013, %v2269
        %v2398 = vmin.f32 %v2014, %v2270
        %v2399 = vmin.f32 %v2015, %v2271
        %v2400 = vmin.f32 %v2016, %v2272
        %v2401 = vmin.f32 %v2017, %v2273
        %v2402 = vmin.f32 %v2018, %v2274
        %v2403 = vmin.f32 %v2019, %v2275
        %v2404 = vmin.f32 %v2020, %v2276
        %v2405 = vmin.f32 %v2021, %v2277
        %v2406 = vmin.f32 %v2022, %v2278
        %v2407 = vmin.f32 %v2023, %v2279
        %v2408 = vmin.f32 %v2024, %v2280
        %v2409 = vmin.f32 %v2025, %v2281
        %v2410 = vmin.f32 %v2026, %v2282
        %v2411 = vmin.f32 %v2027, %v2283
        %v2412 = vmin.f32 %v2028, %v2284
        %v2413 = vmin.f32 %v2029, %v2285
        %v2414 = vmin.f32 %v2030, %v2286
        %v2415 = vmin.f32 %v2031, %v2287
        %v2416 = vmin.f32 %v2032, %v2288
        %v2417 = vmin.f32 %v2033, %v2289
        %v2418 = vmin.f32 %v2034, %v2290
        %v2419 = vmin.f32 %v2035, %v2291
        %v2420 = vmin.f32 %v2036, %v2292
        %v2421 = vmin.f32 %v2037, %v2293
        %v2422 = vmin.f32 %v2038, %v2294
        %v2423 = vmin.f32 %v2039, %v2295
        %v2424 = vmin.f32 %v2040, %v2296
        %v2425 = vmin.f32 %v2041, %v2297
        %v2426 = vmin.f32 %v2042, %v2298
        %v2427 = vmin.f32 %v2043, %v2299
        %v2428 = vmin.f32 %v2044, %v2300
        %v2429 = vmin.f32 %v2045, %v2301
        %v2430 = vmin.f32 %v2046, %v2302
        %v2431 = vmin.f32 %v2047, %v2303
        %v2432 = vmin.f32 %v2048, %v2304
        %v2433 = vmin.f32 %v2049, %v2305
        %v2434 = vmin.f32 %v2050, %v2306
        %v2435 = vmin.f32 %v2051, %v2307
        %v2436 = vmin.f32 %v2052, %v2308
        %v2437 = vmin.f32 %v2053, %v2309
        %v2438 = vmin.f32 %v2054, %v2310
        %v2439 = vmin.f32 %v2055, %v2311
        %v2440 = vmin.f32 %v2056, %v2312
        %v2441 = vmin.f32 %v2057, %v2313
        %v2442 = vmin.f32 %v2058, %v2314
        %v2443 = vmin.f32 %v2059, %v2315
        %v2444 = vmin.f32 %v2060, %v2316
        %v2445 = vmin.f32 %v2061, %v2317
        %v2446 = vmin.f32 %v2062, %v2318
        %v2447 = vmin.f32 %v2063, %v2319
        %v2448 = vmin.f32 %v2064, %v2320
        %v2449 = vmin.f32 %v2065, %v2321
        %v2450 = vmin.f32 %v2066, %v2322
        %v2451 = vmin.f32 %v2067, %v2323
        %v2452 = vmin.f32 %v2068, %v2324
        %v2453 = vmin.f32 %v2069, %v2325
        %v2454 = vmin.f32 %v2070, %v2326
        %v2455 = vmin.f32 %v2071, %v2327
        %v2456 = vmin.f32 %v2072, %v2328
        %v2457 = vmin.f32 %v2073, %v2329
        %v2458 = vmin.f32 %v2074, %v2330
        %v2459 = vmin.f32 %v2075, %v2331
        %v2460 = vmin.f32 %v2076, %v2332
        %v2461 = vmin.f32 %v2077, %v2333
        %v2462 = vmin.f32 %v2078, %v2334
        %v2463 = vmin.f32 %v2079, %v2335
        %v2464 = vmin.f32 %v2080, %v2336
        %v2465 = vmin.f32 %v2081, %v2337
        %v2466 = vmin.f32 %v2082, %v2338
        %v2467 = vmin.f32 %v2083, %v2339
        %v2468 = vmin.f32 %v2084, %v2340
        %v2469 = vmin.f32 %v2085, %v2341
        %v2470 = vmin.f32 %v2086, %v2342
        %v2471 = vmin.f32 %v2087, %v2343
        %v2472 = vmin.f32 %v2088, %v2344
        %v2473 = vmin.f32 %v2089, %v2345
        %v2474 = vmin.f32 %v2090, %v2346
        %v2475 = vmin.f32 %v2091, %v2347
        %v2476 = vmin.f32 %v2092, %v2348
        %v2477 = vmin.f32 %v2093, %v2349
        %v2478 = vmin.f32 %v2094, %v2350
        %v2479 = vmin.f32 %v2095, %v2351
        %v2480 = vmin.f32 %v2096, %v2352
        %v2481 = vmin.f32 %v2097, %v2353
        %v2482 = vmin.f32 %v2098, %v2354
        %v2483 = vmin.f32 %v2099, %v2355
        %v2484 = vmin.f32 %v2100, %v2356
        %v2485 = vmin.f32 %v2101, %v2357
        %v2486 = vmin.f32 %v2102, %v2358
        %v2487 = vmin.f32 %v2103, %v2359
        %v2488 = vmin.f32 %v2104, %v2360
        %v2489 = vmin.f32 %v2105, %v2361
        %v2490 = vmin.f32 %v2106, %v2362
        %v2491 = vmin.f32 %v2107, %v2363
        %v2492 = vmin.f32 %v2108, %v2364
        %v2493 = vmin.f32 %v2109, %v2365
        %v2494 = vmin.f32 %v2110, %v2366
        %v2495 = vmin.f32 %v2111, %v2367
        %v2496 = vmin.f32 %v2112, %v2368
        %v2497 = vmin.f32 %v2113, %v2369
        %v2498 = vmin.f32 %v2114, %v2370
        %v2499 = vmin.f32 %v2115, %v2371
        %v2500 = vmin.f32 %v2116, %v2372
        %v2501 = vmin.f32 %v2117, %v2373
        %v2502 = vmin.f32 %v2118, %v2374
        %v2503 = vmin.f32 %v2119, %v2375
        %v2504 = vmin.f32 %v2120, %v2376
        %v2505 = vmin.f32 %v2121, %v2377
        %v2506 = vmin.f32 %v2122, %v2378
        %v2507 = vmin.f32 %v2123, %v2379
        %v2508 = vmin.f32 %v2124, %v2380
        %v2509 = vmin.f32 %v2125, %v2381
        %v2510 = vmin.f32 %v2126, %v2382
        %v2511 = vmin.f32 %v2127, %v2383
        %v2512 = vmin.f32 %v2128, %v2384
        %v2513 = vmin.f32 %v2129, %v2385
        %v2514 = vmin.f32 %v2130, %v2386
        %vm2515 = vcmp.ge.f32.partialorder %v2387, 0.0
        %vm2516 = vcmp.ge.f32.partialorder %v2388, 0.0
        %vm2517 = vcmp.ge.f32.partialorder %v2389, 0.0
        %vm2518 = vcmp.ge.f32.partialorder %v2390, 0.0
        %vm2519 = vcmp.ge.f32.partialorder %v2391, 0.0
        %vm2520 = vcmp.ge.f32.partialorder %v2392, 0.0
        %vm2521 = vcmp.ge.f32.partialorder %v2393, 0.0
        %vm2522 = vcmp.ge.f32.partialorder %v2394, 0.0
        %vm2523 = vcmp.ge.f32.partialorder %v2395, 0.0
        %vm2524 = vcmp.ge.f32.partialorder %v2396, 0.0
        %vm2525 = vcmp.ge.f32.partialorder %v2397, 0.0
        %vm2526 = vcmp.ge.f32.partialorder %v2398, 0.0
        %vm2527 = vcmp.ge.f32.partialorder %v2399, 0.0
        %vm2528 = vcmp.ge.f32.partialorder %v2400, 0.0
        %vm2529 = vcmp.ge.f32.partialorder %v2401, 0.0
        %vm2530 = vcmp.ge.f32.partialorder %v2402, 0.0
        %vm2531 = vcmp.ge.f32.partialorder %v2403, 0.0
        %vm2532 = vcmp.ge.f32.partialorder %v2404, 0.0
        %vm2533 = vcmp.ge.f32.partialorder %v2405, 0.0
        %vm2534 = vcmp.ge.f32.partialorder %v2406, 0.0
        %vm2535 = vcmp.ge.f32.partialorder %v2407, 0.0
        %vm2536 = vcmp.ge.f32.partialorder %v2408, 0.0
        %vm2537 = vcmp.ge.f32.partialorder %v2409, 0.0
        %vm2538 = vcmp.ge.f32.partialorder %v2410, 0.0
        %vm2539 = vcmp.ge.f32.partialorder %v2411, 0.0
        %vm2540 = vcmp.ge.f32.partialorder %v2412, 0.0
        %vm2541 = vcmp.ge.f32.partialorder %v2413, 0.0
        %vm2542 = vcmp.ge.f32.partialorder %v2414, 0.0
        %vm2543 = vcmp.ge.f32.partialorder %v2415, 0.0
        %vm2544 = vcmp.ge.f32.partialorder %v2416, 0.0
        %vm2545 = vcmp.ge.f32.partialorder %v2417, 0.0
        %vm2546 = vcmp.ge.f32.partialorder %v2418, 0.0
        %vm2547 = vcmp.ge.f32.partialorder %v2419, 0.0
        %vm2548 = vcmp.ge.f32.partialorder %v2420, 0.0
        %vm2549 = vcmp.ge.f32.partialorder %v2421, 0.0
        %vm2550 = vcmp.ge.f32.partialorder %v2422, 0.0
        %vm2551 = vcmp.ge.f32.partialorder %v2423, 0.0
        %vm2552 = vcmp.ge.f32.partialorder %v2424, 0.0
        %vm2553 = vcmp.ge.f32.partialorder %v2425, 0.0
        %vm2554 = vcmp.ge.f32.partialorder %v2426, 0.0
        %vm2555 = vcmp.ge.f32.partialorder %v2427, 0.0
        %vm2556 = vcmp.ge.f32.partialorder %v2428, 0.0
        %vm2557 = vcmp.ge.f32.partialorder %v2429, 0.0
        %vm2558 = vcmp.ge.f32.partialorder %v2430, 0.0
        %vm2559 = vcmp.ge.f32.partialorder %v2431, 0.0
        %vm2560 = vcmp.ge.f32.partialorder %v2432, 0.0
        %vm2561 = vcmp.ge.f32.partialorder %v2433, 0.0
        %vm2562 = vcmp.ge.f32.partialorder %v2434, 0.0
        %vm2563 = vcmp.ge.f32.partialorder %v2435, 0.0
        %vm2564 = vcmp.ge.f32.partialorder %v2436, 0.0
        %vm2565 = vcmp.ge.f32.partialorder %v2437, 0.0
        %vm2566 = vcmp.ge.f32.partialorder %v2438, 0.0
        %vm2567 = vcmp.ge.f32.partialorder %v2439, 0.0
        %vm2568 = vcmp.ge.f32.partialorder %v2440, 0.0
        %vm2569 = vcmp.ge.f32.partialorder %v2441, 0.0
        %vm2570 = vcmp.ge.f32.partialorder %v2442, 0.0
        %vm2571 = vcmp.ge.f32.partialorder %v2443, 0.0
        %vm2572 = vcmp.ge.f32.partialorder %v2444, 0.0
        %vm2573 = vcmp.ge.f32.partialorder %v2445, 0.0
        %vm2574 = vcmp.ge.f32.partialorder %v2446, 0.0
        %vm2575 = vcmp.ge.f32.partialorder %v2447, 0.0
        %vm2576 = vcmp.ge.f32.partialorder %v2448, 0.0
        %vm2577 = vcmp.ge.f32.partialorder %v2449, 0.0
        %vm2578 = vcmp.ge.f32.partialorder %v2450, 0.0
        %vm2579 = vcmp.ge.f32.partialorder %v2451, 0.0
        %vm2580 = vcmp.ge.f32.partialorder %v2452, 0.0
        %vm2581 = vcmp.ge.f32.partialorder %v2453, 0.0
        %vm2582 = vcmp.ge.f32.partialorder %v2454, 0.0
        %vm2583 = vcmp.ge.f32.partialorder %v2455, 0.0
        %vm2584 = vcmp.ge.f32.partialorder %v2456, 0.0
        %vm2585 = vcmp.ge.f32.partialorder %v2457, 0.0
        %vm2586 = vcmp.ge.f32.partialorder %v2458, 0.0
        %vm2587 = vcmp.ge.f32.partialorder %v2459, 0.0
        %vm2588 = vcmp.ge.f32.partialorder %v2460, 0.0
        %vm2589 = vcmp.ge.f32.partialorder %v2461, 0.0
        %vm2590 = vcmp.ge.f32.partialorder %v2462, 0.0
        %vm2591 = vcmp.ge.f32.partialorder %v2463, 0.0
        %vm2592 = vcmp.ge.f32.partialorder %v2464, 0.0
        %vm2593 = vcmp.ge.f32.partialorder %v2465, 0.0
        %vm2594 = vcmp.ge.f32.partialorder %v2466, 0.0
        %vm2595 = vcmp.ge.f32.partialorder %v2467, 0.0
        %vm2596 = vcmp.ge.f32.partialorder %v2468, 0.0
        %vm2597 = vcmp.ge.f32.partialorder %v2469, 0.0
        %vm2598 = vcmp.ge.f32.partialorder %v2470, 0.0
        %vm2599 = vcmp.ge.f32.partialorder %v2471, 0.0
        %vm2600 = vcmp.ge.f32.partialorder %v2472, 0.0
        %vm2601 = vcmp.ge.f32.partialorder %v2473, 0.0
        %vm2602 = vcmp.ge.f32.partialorder %v2474, 0.0
        %vm2603 = vcmp.ge.f32.partialorder %v2475, 0.0
        %vm2604 = vcmp.ge.f32.partialorder %v2476, 0.0
        %vm2605 = vcmp.ge.f32.partialorder %v2477, 0.0
        %vm2606 = vcmp.ge.f32.partialorder %v2478, 0.0
        %vm2607 = vcmp.ge.f32.partialorder %v2479, 0.0
        %vm2608 = vcmp.ge.f32.partialorder %v2480, 0.0
        %vm2609 = vcmp.ge.f32.partialorder %v2481, 0.0
        %vm2610 = vcmp.ge.f32.partialorder %v2482, 0.0
        %vm2611 = vcmp.ge.f32.partialorder %v2483, 0.0
        %vm2612 = vcmp.ge.f32.partialorder %v2484, 0.0
        %vm2613 = vcmp.ge.f32.partialorder %v2485, 0.0
        %vm2614 = vcmp.ge.f32.partialorder %v2486, 0.0
        %vm2615 = vcmp.ge.f32.partialorder %v2487, 0.0
        %vm2616 = vcmp.ge.f32.partialorder %v2488, 0.0
        %vm2617 = vcmp.ge.f32.partialorder %v2489, 0.0
        %vm2618 = vcmp.ge.f32.partialorder %v2490, 0.0
        %vm2619 = vcmp.ge.f32.partialorder %v2491, 0.0
        %vm2620 = vcmp.ge.f32.partialorder %v2492, 0.0
        %vm2621 = vcmp.ge.f32.partialorder %v2493, 0.0
        %vm2622 = vcmp.ge.f32.partialorder %v2494, 0.0
        %vm2623 = vcmp.ge.f32.partialorder %v2495, 0.0
        %vm2624 = vcmp.ge.f32.partialorder %v2496, 0.0
        %vm2625 = vcmp.ge.f32.partialorder %v2497, 0.0
        %vm2626 = vcmp.ge.f32.partialorder %v2498, 0.0
        %vm2627 = vcmp.ge.f32.partialorder %v2499, 0.0
        %vm2628 = vcmp.ge.f32.partialorder %v2500, 0.0
        %vm2629 = vcmp.ge.f32.partialorder %v2501, 0.0
        %vm2630 = vcmp.ge.f32.partialorder %v2502, 0.0
        %vm2631 = vcmp.ge.f32.partialorder %v2503, 0.0
        %vm2632 = vcmp.ge.f32.partialorder %v2504, 0.0
        %vm2633 = vcmp.ge.f32.partialorder %v2505, 0.0
        %vm2634 = vcmp.ge.f32.partialorder %v2506, 0.0
        %vm2635 = vcmp.ge.f32.partialorder %v2507, 0.0
        %vm2636 = vcmp.ge.f32.partialorder %v2508, 0.0
        %vm2637 = vcmp.ge.f32.partialorder %v2509, 0.0
        %vm2638 = vcmp.ge.f32.partialorder %v2510, 0.0
        %vm2639 = vcmp.ge.f32.partialorder %v2511, 0.0
        %vm2640 = vcmp.ge.f32.partialorder %v2512, 0.0
        %vm2641 = vcmp.ge.f32.partialorder %v2513, 0.0
        %vm2642 = vcmp.ge.f32.partialorder %v2514, 0.0
        %vm2643 = vcmp.ge.f32.partialorder %v1172, 0.0
        %vm2644 = vcmp.ge.f32.partialorder %v1174, 0.0
        %vm2645 = vcmp.ge.f32.partialorder %v1813, 0.0
        %vm2646 = vcmp.ge.f32.partialorder %v1815, 0.0
        %vm2647 = vcmp.ge.f32.partialorder %v1178, 0.0
        %vm2648 = vcmp.ge.f32.partialorder %v1180, 0.0
        %vm2649 = vcmp.ge.f32.partialorder %v1819, 0.0
        %vm2650 = vcmp.ge.f32.partialorder %v1821, 0.0
        %vm2651 = vcmp.ge.f32.partialorder %v1184, 0.0
        %vm2652 = vcmp.ge.f32.partialorder %v1186, 0.0
        %vm2653 = vcmp.ge.f32.partialorder %v1825, 0.0
        %vm2654 = vcmp.ge.f32.partialorder %v1827, 0.0
        %vm2655 = vcmp.ge.f32.partialorder %v1190, 0.0
        %vm2656 = vcmp.ge.f32.partialorder %v1192, 0.0
        %vm2657 = vcmp.ge.f32.partialorder %v1831, 0.0
        %vm2658 = vcmp.ge.f32.partialorder %v1833, 0.0
        %vm2659 = vcmp.ge.f32.partialorder %v1196, 0.0
        %vm2660 = vcmp.ge.f32.partialorder %v1198, 0.0
        %vm2661 = vcmp.ge.f32.partialorder %v1837, 0.0
        %vm2662 = vcmp.ge.f32.partialorder %v1839, 0.0
        %vm2663 = vcmp.ge.f32.partialorder %v1202, 0.0
        %vm2664 = vcmp.ge.f32.partialorder %v1204, 0.0
        %vm2665 = vcmp.ge.f32.partialorder %v1843, 0.0
        %vm2666 = vcmp.ge.f32.partialorder %v1845, 0.0
        %vm2667 = vcmp.ge.f32.partialorder %v1208, 0.0
        %vm2668 = vcmp.ge.f32.partialorder %v1210, 0.0
        %vm2669 = vcmp.ge.f32.partialorder %v1849, 0.0
        %vm2670 = vcmp.ge.f32.partialorder %v1851, 0.0
        %vm2671 = vcmp.ge.f32.partialorder %v1214, 0.0
        %vm2672 = vcmp.ge.f32.partialorder %v1216, 0.0
        %vm2673 = vcmp.ge.f32.partialorder %v1855, 0.0
        %vm2674 = vcmp.ge.f32.partialorder %v1857, 0.0
        %vm2675 = vcmp.ge.f32.partialorder %v1220, 0.0
        %vm2676 = vcmp.ge.f32.partialorder %v1222, 0.0
        %vm2677 = vcmp.ge.f32.partialorder %v1861, 0.0
        %vm2678 = vcmp.ge.f32.partialorder %v1863, 0.0
        %vm2679 = vcmp.ge.f32.partialorder %v1226, 0.0
        %vm2680 = vcmp.ge.f32.partialorder %v1228, 0.0
        %vm2681 = vcmp.ge.f32.partialorder %v1867, 0.0
        %vm2682 = vcmp.ge.f32.partialorder %v1869, 0.0
        %vm2683 = vcmp.ge.f32.partialorder %v1232, 0.0
        %vm2684 = vcmp.ge.f32.partialorder %v1234, 0.0
        %vm2685 = vcmp.ge.f32.partialorder %v1873, 0.0
        %vm2686 = vcmp.ge.f32.partialorder %v1875, 0.0
        %vm2687 = vcmp.ge.f32.partialorder %v1238, 0.0
        %vm2688 = vcmp.ge.f32.partialorder %v1240, 0.0
        %vm2689 = vcmp.ge.f32.partialorder %v1879, 0.0
        %vm2690 = vcmp.ge.f32.partialorder %v1881, 0.0
        %vm2691 = vcmp.ge.f32.partialorder %v1244, 0.0
        %vm2692 = vcmp.ge.f32.partialorder %v1246, 0.0
        %vm2693 = vcmp.ge.f32.partialorder %v1885, 0.0
        %vm2694 = vcmp.ge.f32.partialorder %v1887, 0.0
        %vm2695 = vcmp.ge.f32.partialorder %v1250, 0.0
        %vm2696 = vcmp.ge.f32.partialorder %v1252, 0.0
        %vm2697 = vcmp.ge.f32.partialorder %v1891, 0.0
        %vm2698 = vcmp.ge.f32.partialorder %v1893, 0.0
        %vm2699 = vcmp.ge.f32.partialorder %v1256, 0.0
        %vm2700 = vcmp.ge.f32.partialorder %v1258, 0.0
        %vm2701 = vcmp.ge.f32.partialorder %v1897, 0.0
        %vm2702 = vcmp.ge.f32.partialorder %v1899, 0.0
        %vm2703 = vcmp.ge.f32.partialorder %v1262, 0.0
        %vm2704 = vcmp.ge.f32.partialorder %v1264, 0.0
        %vm2705 = vcmp.ge.f32.partialorder %v1903, 0.0
        %vm2706 = vcmp.ge.f32.partialorder %v1905, 0.0
        %vm2707 = vcmp.ge.f32.partialorder %v1268, 0.0
        %vm2708 = vcmp.ge.f32.partialorder %v1270, 0.0
        %vm2709 = vcmp.ge.f32.partialorder %v1909, 0.0
        %vm2710 = vcmp.ge.f32.partialorder %v1911, 0.0
        %vm2711 = vcmp.ge.f32.partialorder %v1274, 0.0
        %vm2712 = vcmp.ge.f32.partialorder %v1276, 0.0
        %vm2713 = vcmp.ge.f32.partialorder %v1915, 0.0
        %vm2714 = vcmp.ge.f32.partialorder %v1917, 0.0
        %vm2715 = vcmp.ge.f32.partialorder %v1280, 0.0
        %vm2716 = vcmp.ge.f32.partialorder %v1282, 0.0
        %vm2717 = vcmp.ge.f32.partialorder %v1921, 0.0
        %vm2718 = vcmp.ge.f32.partialorder %v1923, 0.0
        %vm2719 = vcmp.ge.f32.partialorder %v1286, 0.0
        %vm2720 = vcmp.ge.f32.partialorder %v1288, 0.0
        %vm2721 = vcmp.ge.f32.partialorder %v1927, 0.0
        %vm2722 = vcmp.ge.f32.partialorder %v1929, 0.0
        %vm2723 = vcmp.ge.f32.partialorder %v1292, 0.0
        %vm2724 = vcmp.ge.f32.partialorder %v1294, 0.0
        %vm2725 = vcmp.ge.f32.partialorder %v1933, 0.0
        %vm2726 = vcmp.ge.f32.partialorder %v1935, 0.0
        %vm2727 = vcmp.ge.f32.partialorder %v1298, 0.0
        %vm2728 = vcmp.ge.f32.partialorder %v1300, 0.0
        %vm2729 = vcmp.ge.f32.partialorder %v1939, 0.0
        %vm2730 = vcmp.ge.f32.partialorder %v1941, 0.0
        %vm2731 = vcmp.ge.f32.partialorder %v1304, 0.0
        %vm2732 = vcmp.ge.f32.partialorder %v1306, 0.0
        %vm2733 = vcmp.ge.f32.partialorder %v1945, 0.0
        %vm2734 = vcmp.ge.f32.partialorder %v1947, 0.0
        %vm2735 = vcmp.ge.f32.partialorder %v1310, 0.0
        %vm2736 = vcmp.ge.f32.partialorder %v1312, 0.0
        %vm2737 = vcmp.ge.f32.partialorder %v1951, 0.0
        %vm2738 = vcmp.ge.f32.partialorder %v1953, 0.0
        %vm2739 = vcmp.ge.f32.partialorder %v1316, 0.0
        %vm2740 = vcmp.ge.f32.partialorder %v1318, 0.0
        %vm2741 = vcmp.ge.f32.partialorder %v1957, 0.0
        %vm2742 = vcmp.ge.f32.partialorder %v1959, 0.0
        %vm2743 = vcmp.ge.f32.partialorder %v1322, 0.0
        %vm2744 = vcmp.ge.f32.partialorder %v1324, 0.0
        %vm2745 = vcmp.ge.f32.partialorder %v1963, 0.0
        %vm2746 = vcmp.ge.f32.partialorder %v1965, 0.0
        %vm2747 = vcmp.ge.f32.partialorder %v1328, 0.0
        %vm2748 = vcmp.ge.f32.partialorder %v1330, 0.0
        %vm2749 = vcmp.ge.f32.partialorder %v1969, 0.0
        %vm2750 = vcmp.ge.f32.partialorder %v1971, 0.0
        %vm2751 = vcmp.ge.f32.partialorder %v1334, 0.0
        %vm2752 = vcmp.ge.f32.partialorder %v1336, 0.0
        %vm2753 = vcmp.ge.f32.partialorder %v1975, 0.0
        %vm2754 = vcmp.ge.f32.partialorder %v1977, 0.0
        %vm2755 = vcmp.ge.f32.partialorder %v1340, 0.0
        %vm2756 = vcmp.ge.f32.partialorder %v1342, 0.0
        %vm2757 = vcmp.ge.f32.partialorder %v1981, 0.0
        %vm2758 = vcmp.ge.f32.partialorder %v1983, 0.0
        %vm2759 = vcmp.ge.f32.partialorder %v1346, 0.0
        %vm2760 = vcmp.ge.f32.partialorder %v1348, 0.0
        %vm2761 = vcmp.ge.f32.partialorder %v1987, 0.0
        %vm2762 = vcmp.ge.f32.partialorder %v1989, 0.0
        %vm2763 = vcmp.ge.f32.partialorder %v1352, 0.0
        %vm2764 = vcmp.ge.f32.partialorder %v1354, 0.0
        %vm2765 = vcmp.ge.f32.partialorder %v1993, 0.0
        %vm2766 = vcmp.ge.f32.partialorder %v1995, 0.0
        %vm2767 = vcmp.ge.f32.partialorder %v1358, 0.0
        %vm2768 = vcmp.ge.f32.partialorder %v1360, 0.0
        %vm2769 = vcmp.ge.f32.partialorder %v1999, 0.0
        %vm2770 = vcmp.ge.f32.partialorder %v2001, 0.0
        %vm2771 = vmand %vm2515, %vm2643
        %vm2772 = vmand %vm2516, %vm2644
        %vm2773 = vmand %vm2517, %vm2645
        %vm2774 = vmand %vm2518, %vm2646
        %vm2775 = vmand %vm2519, %vm2647
        %vm2776 = vmand %vm2520, %vm2648
        %vm2777 = vmand %vm2521, %vm2649
        %vm2778 = vmand %vm2522, %vm2650
        %vm2779 = vmand %vm2523, %vm2651
        %vm2780 = vmand %vm2524, %vm2652
        %vm2781 = vmand %vm2525, %vm2653
        %vm2782 = vmand %vm2526, %vm2654
        %vm2783 = vmand %vm2527, %vm2655
        %vm2784 = vmand %vm2528, %vm2656
        %vm2785 = vmand %vm2529, %vm2657
        %vm2786 = vmand %vm2530, %vm2658
        %vm2787 = vmand %vm2531, %vm2659
        %vm2788 = vmand %vm2532, %vm2660
        %vm2789 = vmand %vm2533, %vm2661
        %vm2790 = vmand %vm2534, %vm2662
        %vm2791 = vmand %vm2535, %vm2663
        %vm2792 = vmand %vm2536, %vm2664
        %vm2793 = vmand %vm2537, %vm2665
        %vm2794 = vmand %vm2538, %vm2666
        %vm2795 = vmand %vm2539, %vm2667
        %vm2796 = vmand %vm2540, %vm2668
        %vm2797 = vmand %vm2541, %vm2669
        %vm2798 = vmand %vm2542, %vm2670
        %vm2799 = vmand %vm2543, %vm2671
        %vm2800 = vmand %vm2544, %vm2672
        %vm2801 = vmand %vm2545, %vm2673
        %vm2802 = vmand %vm2546, %vm2674
        %vm2803 = vmand %vm2547, %vm2675
        %vm2804 = vmand %vm2548, %vm2676
        %vm2805 = vmand %vm2549, %vm2677
        %vm2806 = vmand %vm2550, %vm2678
        %vm2807 = vmand %vm2551, %vm2679
        %vm2808 = vmand %vm2552, %vm2680
        %vm2809 = vmand %vm2553, %vm2681
        %vm2810 = vmand %vm2554, %vm2682
        %vm2811 = vmand %vm2555, %vm2683
        %vm2812 = vmand %vm2556, %vm2684
        %vm2813 = vmand %vm2557, %vm2685
        %vm2814 = vmand %vm2558, %vm2686
        %vm2815 = vmand %vm2559, %vm2687
        %vm2816 = vmand %vm2560, %vm2688
        %vm2817 = vmand %vm2561, %vm2689
        %vm2818 = vmand %vm2562, %vm2690
        %vm2819 = vmand %vm2563, %vm2691
        %vm2820 = vmand %vm2564, %vm2692
        %vm2821 = vmand %vm2565, %vm2693
        %vm2822 = vmand %vm2566, %vm2694
        %vm2823 = vmand %vm2567, %vm2695
        %vm2824 = vmand %vm2568, %vm2696
        %vm2825 = vmand %vm2569, %vm2697
        %vm2826 = vmand %vm2570, %vm2698
        %vm2827 = vmand %vm2571, %vm2699
        %vm2828 = vmand %vm2572, %vm2700
        %vm2829 = vmand %vm2573, %vm2701
        %vm2830 = vmand %vm2574, %vm2702
        %vm2831 = vmand %vm2575, %vm2703
        %vm2832 = vmand %vm2576, %vm2704
        %vm2833 = vmand %vm2577, %vm2705
        %vm2834 = vmand %vm2578, %vm2706
        %vm2835 = vmand %vm2579, %vm2707
        %vm2836 = vmand %vm2580, %vm2708
        %vm2837 = vmand %vm2581, %vm2709
        %vm2838 = vmand %vm2582, %vm2710
        %vm2839 = vmand %vm2583, %vm2711
        %vm2840 = vmand %vm2584, %vm2712
        %vm2841 = vmand %vm2585, %vm2713
        %vm2842 = vmand %vm2586, %vm2714
        %vm2843 = vmand %vm2587, %vm2715
        %vm2844 = vmand %vm2588, %vm2716
        %vm2845 = vmand %vm2589, %vm2717
        %vm2846 = vmand %vm2590, %vm2718
        %vm2847 = vmand %vm2591, %vm2719
        %vm2848 = vmand %vm2592, %vm2720
        %vm2849 = vmand %vm2593, %vm2721
        %vm2850 = vmand %vm2594, %vm2722
        %vm2851 = vmand %vm2595, %vm2723
        %vm2852 = vmand %vm2596, %vm2724
        %vm2853 = vmand %vm2597, %vm2725
        %vm2854 = vmand %vm2598, %vm2726
        %vm2855 = vmand %vm2599, %vm2727
        %vm2856 = vmand %vm2600, %vm2728
        %vm2857 = vmand %vm2601, %vm2729
        %vm2858 = vmand %vm2602, %vm2730
        %vm2859 = vmand %vm2603, %vm2731
        %vm2860 = vmand %vm2604, %vm2732
        %vm2861 = vmand %vm2605, %vm2733
        %vm2862 = vmand %vm2606, %vm2734
        %vm2863 = vmand %vm2607, %vm2735
        %vm2864 = vmand %vm2608, %vm2736
        %vm2865 = vmand %vm2609, %vm2737
        %vm2866 = vmand %vm2610, %vm2738
        %vm2867 = vmand %vm2611, %vm2739
        %vm2868 = vmand %vm2612, %vm2740
        %vm2869 = vmand %vm2613, %vm2741
        %vm2870 = vmand %vm2614, %vm2742
        %vm2871 = vmand %vm2615, %vm2743
        %vm2872 = vmand %vm2616, %vm2744
        %vm2873 = vmand %vm2617, %vm2745
        %vm2874 = vmand %vm2618, %vm2746
        %vm2875 = vmand %vm2619, %vm2747
        %vm2876 = vmand %vm2620, %vm2748
        %vm2877 = vmand %vm2621, %vm2749
        %vm2878 = vmand %vm2622, %vm2750
        %vm2879 = vmand %vm2623, %vm2751
        %vm2880 = vmand %vm2624, %vm2752
        %vm2881 = vmand %vm2625, %vm2753
        %vm2882 = vmand %vm2626, %vm2754
        %vm2883 = vmand %vm2627, %vm2755
        %vm2884 = vmand %vm2628, %vm2756
        %vm2885 = vmand %vm2629, %vm2757
        %vm2886 = vmand %vm2630, %vm2758
        %vm2887 = vmand %vm2631, %vm2759
        %vm2888 = vmand %vm2632, %vm2760
        %vm2889 = vmand %vm2633, %vm2761
        %vm2890 = vmand %vm2634, %vm2762
        %vm2891 = vmand %vm2635, %vm2763
        %vm2892 = vmand %vm2636, %vm2764
        %vm2893 = vmand %vm2637, %vm2765
        %vm2894 = vmand %vm2638, %vm2766
        %vm2895 = vmand %vm2639, %vm2767
        %vm2896 = vmand %vm2640, %vm2768
        %vm2897 = vmand %vm2641, %vm2769
        %vm2898 = vmand %vm2642, %vm2770
        %v2899 = vand.u32 2147483647, %v1172
        %v2900 = vand.u32 2147483647, %v1174
        %v2901 = vand.u32 2147483647, %v1813
        %v2902 = vand.u32 2147483647, %v1815
        %v2903 = vand.u32 2147483647, %v1178
        %v2904 = vand.u32 2147483647, %v1180
        %v2905 = vand.u32 2147483647, %v1819
        %v2906 = vand.u32 2147483647, %v1821
        %v2907 = vand.u32 2147483647, %v1184
        %v2908 = vand.u32 2147483647, %v1186
        %v2909 = vand.u32 2147483647, %v1825
        %v2910 = vand.u32 2147483647, %v1827
        %v2911 = vand.u32 2147483647, %v1190
        %v2912 = vand.u32 2147483647, %v1192
        %v2913 = vand.u32 2147483647, %v1831
        %v2914 = vand.u32 2147483647, %v1833
        %v2915 = vand.u32 2147483647, %v1196
        %v2916 = vand.u32 2147483647, %v1198
        %v2917 = vand.u32 2147483647, %v1837
        %v2918 = vand.u32 2147483647, %v1839
        %v2919 = vand.u32 2147483647, %v1202
        %v2920 = vand.u32 2147483647, %v1204
        %v2921 = vand.u32 2147483647, %v1843
        %v2922 = vand.u32 2147483647, %v1845
        %v2923 = vand.u32 2147483647, %v1208
        %v2924 = vand.u32 2147483647, %v1210
        %v2925 = vand.u32 2147483647, %v1849
        %v2926 = vand.u32 2147483647, %v1851
        %v2927 = vand.u32 2147483647, %v1214
        %v2928 = vand.u32 2147483647, %v1216
        %v2929 = vand.u32 2147483647, %v1855
        %v2930 = vand.u32 2147483647, %v1857
        %v2931 = vand.u32 2147483647, %v1220
        %v2932 = vand.u32 2147483647, %v1222
        %v2933 = vand.u32 2147483647, %v1861
        %v2934 = vand.u32 2147483647, %v1863
        %v2935 = vand.u32 2147483647, %v1226
        %v2936 = vand.u32 2147483647, %v1228
        %v2937 = vand.u32 2147483647, %v1867
        %v2938 = vand.u32 2147483647, %v1869
        %v2939 = vand.u32 2147483647, %v1232
        %v2940 = vand.u32 2147483647, %v1234
        %v2941 = vand.u32 2147483647, %v1873
        %v2942 = vand.u32 2147483647, %v1875
        %v2943 = vand.u32 2147483647, %v1238
        %v2944 = vand.u32 2147483647, %v1240
        %v2945 = vand.u32 2147483647, %v1879
        %v2946 = vand.u32 2147483647, %v1881
        %v2947 = vand.u32 2147483647, %v1244
        %v2948 = vand.u32 2147483647, %v1246
        %v2949 = vand.u32 2147483647, %v1885
        %v2950 = vand.u32 2147483647, %v1887
        %v2951 = vand.u32 2147483647, %v1250
        %v2952 = vand.u32 2147483647, %v1252
        %v2953 = vand.u32 2147483647, %v1891
        %v2954 = vand.u32 2147483647, %v1893
        %v2955 = vand.u32 2147483647, %v1256
        %v2956 = vand.u32 2147483647, %v1258
        %v2957 = vand.u32 2147483647, %v1897
        %v2958 = vand.u32 2147483647, %v1899
        %v2959 = vand.u32 2147483647, %v1262
        %v2960 = vand.u32 2147483647, %v1264
        %v2961 = vand.u32 2147483647, %v1903
        %v2962 = vand.u32 2147483647, %v1905
        %v2963 = vand.u32 2147483647, %v1268
        %v2964 = vand.u32 2147483647, %v1270
        %v2965 = vand.u32 2147483647, %v1909
        %v2966 = vand.u32 2147483647, %v1911
        %v2967 = vand.u32 2147483647, %v1274
        %v2968 = vand.u32 2147483647, %v1276
        %v2969 = vand.u32 2147483647, %v1915
        %v2970 = vand.u32 2147483647, %v1917
        %v2971 = vand.u32 2147483647, %v1280
        %v2972 = vand.u32 2147483647, %v1282
        %v2973 = vand.u32 2147483647, %v1921
        %v2974 = vand.u32 2147483647, %v1923
        %v2975 = vand.u32 2147483647, %v1286
        %v2976 = vand.u32 2147483647, %v1288
        %v2977 = vand.u32 2147483647, %v1927
        %v2978 = vand.u32 2147483647, %v1929
        %v2979 = vand.u32 2147483647, %v1292
        %v2980 = vand.u32 2147483647, %v1294
        %v2981 = vand.u32 2147483647, %v1933
        %v2982 = vand.u32 2147483647, %v1935
        %v2983 = vand.u32 2147483647, %v1298
        %v2984 = vand.u32 2147483647, %v1300
        %v2985 = vand.u32 2147483647, %v1939
        %v2986 = vand.u32 2147483647, %v1941
        %v2987 = vand.u32 2147483647, %v1304
        %v2988 = vand.u32 2147483647, %v1306
        %v2989 = vand.u32 2147483647, %v1945
        %v2990 = vand.u32 2147483647, %v1947
        %v2991 = vand.u32 2147483647, %v1310
        %v2992 = vand.u32 2147483647, %v1312
        %v2993 = vand.u32 2147483647, %v1951
        %v2994 = vand.u32 2147483647, %v1953
        %v2995 = vand.u32 2147483647, %v1316
        %v2996 = vand.u32 2147483647, %v1318
        %v2997 = vand.u32 2147483647, %v1957
        %v2998 = vand.u32 2147483647, %v1959
        %v2999 = vand.u32 2147483647, %v1322
        %v3000 = vand.u32 2147483647, %v1324
        %v3001 = vand.u32 2147483647, %v1963
        %v3002 = vand.u32 2147483647, %v1965
        %v3003 = vand.u32 2147483647, %v1328
        %v3004 = vand.u32 2147483647, %v1330
        %v3005 = vand.u32 2147483647, %v1969
        %v3006 = vand.u32 2147483647, %v1971
        %v3007 = vand.u32 2147483647, %v1334
        %v3008 = vand.u32 2147483647, %v1336
        %v3009 = vand.u32 2147483647, %v1975
        %v3010 = vand.u32 2147483647, %v1977
        %v3011 = vand.u32 2147483647, %v1340
        %v3012 = vand.u32 2147483647, %v1342
        %v3013 = vand.u32 2147483647, %v1981
        %v3014 = vand.u32 2147483647, %v1983
        %v3015 = vand.u32 2147483647, %v1346
        %v3016 = vand.u32 2147483647, %v1348
        %v3017 = vand.u32 2147483647, %v1987
        %v3018 = vand.u32 2147483647, %v1989
        %v3019 = vand.u32 2147483647, %v1352
        %v3020 = vand.u32 2147483647, %v1354
        %v3021 = vand.u32 2147483647, %v1993
        %v3022 = vand.u32 2147483647, %v1995
        %v3023 = vand.u32 2147483647, %v1358
        %v3024 = vand.u32 2147483647, %v1360
        %v3025 = vand.u32 2147483647, %v1999
        %v3026 = vand.u32 2147483647, %v2001
        %v3027 = vsel %vm2771, %v2899, 1000000.0
        %v3028 = vsel %vm2772, %v2900, 1000000.0
        %v3029 = vsel %vm2773, %v2901, 1000000.0
        %v3030 = vsel %vm2774, %v2902, 1000000.0
        %v3031 = vsel %vm2775, %v2903, 1000000.0
        %v3032 = vsel %vm2776, %v2904, 1000000.0
        %v3033 = vsel %vm2777, %v2905, 1000000.0
        %v3034 = vsel %vm2778, %v2906, 1000000.0
        %v3035 = vsel %vm2779, %v2907, 1000000.0
        %v3036 = vsel %vm2780, %v2908, 1000000.0
        %v3037 = vsel %vm2781, %v2909, 1000000.0
        %v3038 = vsel %vm2782, %v2910, 1000000.0
        %v3039 = vsel %vm2783, %v2911, 1000000.0
        %v3040 = vsel %vm2784, %v2912, 1000000.0
        %v3041 = vsel %vm2785, %v2913, 1000000.0
        %v3042 = vsel %vm2786, %v2914, 1000000.0
        %v3043 = vsel %vm2787, %v2915, 1000000.0
        %v3044 = vsel %vm2788, %v2916, 1000000.0
        %v3045 = vsel %vm2789, %v2917, 1000000.0
        %v3046 = vsel %vm2790, %v2918, 1000000.0
        %v3047 = vsel %vm2791, %v2919, 1000000.0
        %v3048 = vsel %vm2792, %v2920, 1000000.0
        %v3049 = vsel %vm2793, %v2921, 1000000.0
        %v3050 = vsel %vm2794, %v2922, 1000000.0
        %v3051 = vsel %vm2795, %v2923, 1000000.0
        %v3052 = vsel %vm2796, %v2924, 1000000.0
        %v3053 = vsel %vm2797, %v2925, 1000000.0
        %v3054 = vsel %vm2798, %v2926, 1000000.0
        %v3055 = vsel %vm2799, %v2927, 1000000.0
        %v3056 = vsel %vm2800, %v2928, 1000000.0
        %v3057 = vsel %vm2801, %v2929, 1000000.0
        %v3058 = vsel %vm2802, %v2930, 1000000.0
        %v3059 = vsel %vm2803, %v2931, 1000000.0
        %v3060 = vsel %vm2804, %v2932, 1000000.0
        %v3061 = vsel %vm2805, %v2933, 1000000.0
        %v3062 = vsel %vm2806, %v2934, 1000000.0
        %v3063 = vsel %vm2807, %v2935, 1000000.0
        %v3064 = vsel %vm2808, %v2936, 1000000.0
        %v3065 = vsel %vm2809, %v2937, 1000000.0
        %v3066 = vsel %vm2810, %v2938, 1000000.0
        %v3067 = vsel %vm2811, %v2939, 1000000.0
        %v3068 = vsel %vm2812, %v2940, 1000000.0
        %v3069 = vsel %vm2813, %v2941, 1000000.0
        %v3070 = vsel %vm2814, %v2942, 1000000.0
        %v3071 = vsel %vm2815, %v2943, 1000000.0
        %v3072 = vsel %vm2816, %v2944, 1000000.0
        %v3073 = vsel %vm2817, %v2945, 1000000.0
        %v3074 = vsel %vm2818, %v2946, 1000000.0
        %v3075 = vsel %vm2819, %v2947, 1000000.0
        %v3076 = vsel %vm2820, %v2948, 1000000.0
        %v3077 = vsel %vm2821, %v2949, 1000000.0
        %v3078 = vsel %vm2822, %v2950, 1000000.0
        %v3079 = vsel %vm2823, %v2951, 1000000.0
        %v3080 = vsel %vm2824, %v2952, 1000000.0
        %v3081 = vsel %vm2825, %v2953, 1000000.0
        %v3082 = vsel %vm2826, %v2954, 1000000.0
        %v3083 = vsel %vm2827, %v2955, 1000000.0
        %v3084 = vsel %vm2828, %v2956, 1000000.0
        %v3085 = vsel %vm2829, %v2957, 1000000.0
        %v3086 = vsel %vm2830, %v2958, 1000000.0
        %v3087 = vsel %vm2831, %v2959, 1000000.0
        %v3088 = vsel %vm2832, %v2960, 1000000.0
        %v3089 = vsel %vm2833, %v2961, 1000000.0
        %v3090 = vsel %vm2834, %v2962, 1000000.0
        %v3091 = vsel %vm2835, %v2963, 1000000.0
        %v3092 = vsel %vm2836, %v2964, 1000000.0
        %v3093 = vsel %vm2837, %v2965, 1000000.0
        %v3094 = vsel %vm2838, %v2966, 1000000.0
        %v3095 = vsel %vm2839, %v2967, 1000000.0
        %v3096 = vsel %vm2840, %v2968, 1000000.0
        %v3097 = vsel %vm2841, %v2969, 1000000.0
        %v3098 = vsel %vm2842, %v2970, 1000000.0
        %v3099 = vsel %vm2843, %v2971, 1000000.0
        %v3100 = vsel %vm2844, %v2972, 1000000.0
        %v3101 = vsel %vm2845, %v2973, 1000000.0
        %v3102 = vsel %vm2846, %v2974, 1000000.0
        %v3103 = vsel %vm2847, %v2975, 1000000.0
        %v3104 = vsel %vm2848, %v2976, 1000000.0
        %v3105 = vsel %vm2849, %v2977, 1000000.0
        %v3106 = vsel %vm2850, %v2978, 1000000.0
        %v3107 = vsel %vm2851, %v2979, 1000000.0
        %v3108 = vsel %vm2852, %v2980, 1000000.0
        %v3109 = vsel %vm2853, %v2981, 1000000.0
        %v3110 = vsel %vm2854, %v2982, 1000000.0
        %v3111 = vsel %vm2855, %v2983, 1000000.0
        %v3112 = vsel %vm2856, %v2984, 1000000.0
        %v3113 = vsel %vm2857, %v2985, 1000000.0
        %v3114 = vsel %vm2858, %v2986, 1000000.0
        %v3115 = vsel %vm2859, %v2987, 1000000.0
        %v3116 = vsel %vm2860, %v2988, 1000000.0
        %v3117 = vsel %vm2861, %v2989, 1000000.0
        %v3118 = vsel %vm2862, %v2990, 1000000.0
        %v3119 = vsel %vm2863, %v2991, 1000000.0
        %v3120 = vsel %vm2864, %v2992, 1000000.0
        %v3121 = vsel %vm2865, %v2993, 1000000.0
        %v3122 = vsel %vm2866, %v2994, 1000000.0
        %v3123 = vsel %vm2867, %v2995, 1000000.0
        %v3124 = vsel %vm2868, %v2996, 1000000.0
        %v3125 = vsel %vm2869, %v2997, 1000000.0
        %v3126 = vsel %vm2870, %v2998, 1000000.0
        %v3127 = vsel %vm2871, %v2999, 1000000.0
        %v3128 = vsel %vm2872, %v3000, 1000000.0
        %v3129 = vsel %vm2873, %v3001, 1000000.0
        %v3130 = vsel %vm2874, %v3002, 1000000.0
        %v3131 = vsel %vm2875, %v3003, 1000000.0
        %v3132 = vsel %vm2876, %v3004, 1000000.0
        %v3133 = vsel %vm2877, %v3005, 1000000.0
        %v3134 = vsel %vm2878, %v3006, 1000000.0
        %v3135 = vsel %vm2879, %v3007, 1000000.0
        %v3136 = vsel %vm2880, %v3008, 1000000.0
        %v3137 = vsel %vm2881, %v3009, 1000000.0
        %v3138 = vsel %vm2882, %v3010, 1000000.0
        %v3139 = vsel %vm2883, %v3011, 1000000.0
        %v3140 = vsel %vm2884, %v3012, 1000000.0
        %v3141 = vsel %vm2885, %v3013, 1000000.0
        %v3142 = vsel %vm2886, %v3014, 1000000.0
        %v3143 = vsel %vm2887, %v3015, 1000000.0
        %v3144 = vsel %vm2888, %v3016, 1000000.0
        %v3145 = vsel %vm2889, %v3017, 1000000.0
        %v3146 = vsel %vm2890, %v3018, 1000000.0
        %v3147 = vsel %vm2891, %v3019, 1000000.0
        %v3148 = vsel %vm2892, %v3020, 1000000.0
        %v3149 = vsel %vm2893, %v3021, 1000000.0
        %v3150 = vsel %vm2894, %v3022, 1000000.0
        %v3151 = vsel %vm2895, %v3023, 1000000.0
        %v3152 = vsel %vm2896, %v3024, 1000000.0
        %v3153 = vsel %vm2897, %v3025, 1000000.0
        %v3154 = vsel %vm2898, %v3026, 1000000.0
        %v3155 = vlaneseq
        %v3156 = vshrl.u32 %v3155, 7
        %v3157 = vadd.s32 %v3156, 8
        %v3158 = vadd.s32 %v3156, 16
        %v3159 = vadd.s32 %v3156, 24
        %v3160 = vadd.s32 %v3156, 32
        %v3161 = vadd.s32 %v3156, 40
        %v3162 = vadd.s32 %v3156, 48
        %v3163 = vadd.s32 %v3156, 56
        %v3164 = vadd.s32 %v3156, 64
        %v3165 = vadd.s32 %v3156, 72
        %v3166 = vadd.s32 %v3156, 80
        %v3167 = vadd.s32 %v3156, 88
        %v3168 = vadd.s32 %v3156, 96
        %v3169 = vadd.s32 %v3156, 104
        %v3170 = vadd.s32 %v3156, 112
        %v3171 = vadd.s32 %v3156, 120
        %v3172 = vadd.s32 %v3156, 128
        %v3173 = vadd.s32 %v3156, 136
        %v3174 = vadd.s32 %v3156, 144
        %v3175 = vadd.s32 %v3156, 152
        %v3176 = vadd.s32 %v3156, 160
        %v3177 = vadd.s32 %v3156, 168
        %v3178 = vadd.s32 %v3156, 176
        %v3179 = vadd.s32 %v3156, 184
        %v3180 = vadd.s32 %v3156, 192
        %v3181 = vadd.s32 %v3156, 200
        %v3182 = vadd.s32 %v3156, 208
        %v3183 = vadd.s32 %v3156, 216
        %v3184 = vadd.s32 %v3156, 224
        %v3185 = vadd.s32 %v3156, 232
        %v3186 = vadd.s32 %v3156, 240
        %v3187 = vadd.s32 %v3156, 248
        %v3316 = vand.u32 %v3027, 4294967040
        %v3317 = vand.u32 %v3028, 4294967040
        %v3318 = vand.u32 %v3029, 4294967040
        %v3319 = vand.u32 %v3030, 4294967040
        %v3320 = vand.u32 %v3031, 4294967040
        %v3321 = vand.u32 %v3032, 4294967040
        %v3322 = vand.u32 %v3033, 4294967040
        %v3323 = vand.u32 %v3034, 4294967040
        %v3324 = vand.u32 %v3035, 4294967040
        %v3325 = vand.u32 %v3036, 4294967040
        %v3326 = vand.u32 %v3037, 4294967040
        %v3327 = vand.u32 %v3038, 4294967040
        %v3328 = vand.u32 %v3039, 4294967040
        %v3329 = vand.u32 %v3040, 4294967040
        %v3330 = vand.u32 %v3041, 4294967040
        %v3331 = vand.u32 %v3042, 4294967040
        %v3332 = vand.u32 %v3043, 4294967040
        %v3333 = vand.u32 %v3044, 4294967040
        %v3334 = vand.u32 %v3045, 4294967040
        %v3335 = vand.u32 %v3046, 4294967040
        %v3336 = vand.u32 %v3047, 4294967040
        %v3337 = vand.u32 %v3048, 4294967040
        %v3338 = vand.u32 %v3049, 4294967040
        %v3339 = vand.u32 %v3050, 4294967040
        %v3340 = vand.u32 %v3051, 4294967040
        %v3341 = vand.u32 %v3052, 4294967040
        %v3342 = vand.u32 %v3053, 4294967040
        %v3343 = vand.u32 %v3054, 4294967040
        %v3344 = vand.u32 %v3055, 4294967040
        %v3345 = vand.u32 %v3056, 4294967040
        %v3346 = vand.u32 %v3057, 4294967040
        %v3347 = vand.u32 %v3058, 4294967040
        %v3348 = vand.u32 %v3059, 4294967040
        %v3349 = vand.u32 %v3060, 4294967040
        %v3350 = vand.u32 %v3061, 4294967040
        %v3351 = vand.u32 %v3062, 4294967040
        %v3352 = vand.u32 %v3063, 4294967040
        %v3353 = vand.u32 %v3064, 4294967040
        %v3354 = vand.u32 %v3065, 4294967040
        %v3355 = vand.u32 %v3066, 4294967040
        %v3356 = vand.u32 %v3067, 4294967040
        %v3357 = vand.u32 %v3068, 4294967040
        %v3358 = vand.u32 %v3069, 4294967040
        %v3359 = vand.u32 %v3070, 4294967040
        %v3360 = vand.u32 %v3071, 4294967040
        %v3361 = vand.u32 %v3072, 4294967040
        %v3362 = vand.u32 %v3073, 4294967040
        %v3363 = vand.u32 %v3074, 4294967040
        %v3364 = vand.u32 %v3075, 4294967040
        %v3365 = vand.u32 %v3076, 4294967040
        %v3366 = vand.u32 %v3077, 4294967040
        %v3367 = vand.u32 %v3078, 4294967040
        %v3368 = vand.u32 %v3079, 4294967040
        %v3369 = vand.u32 %v3080, 4294967040
        %v3370 = vand.u32 %v3081, 4294967040
        %v3371 = vand.u32 %v3082, 4294967040
        %v3372 = vand.u32 %v3083, 4294967040
        %v3373 = vand.u32 %v3084, 4294967040
        %v3374 = vand.u32 %v3085, 4294967040
        %v3375 = vand.u32 %v3086, 4294967040
        %v3376 = vand.u32 %v3087, 4294967040
        %v3377 = vand.u32 %v3088, 4294967040
        %v3378 = vand.u32 %v3089, 4294967040
        %v3379 = vand.u32 %v3090, 4294967040
        %v3380 = vand.u32 %v3091, 4294967040
        %v3381 = vand.u32 %v3092, 4294967040
        %v3382 = vand.u32 %v3093, 4294967040
        %v3383 = vand.u32 %v3094, 4294967040
        %v3384 = vand.u32 %v3095, 4294967040
        %v3385 = vand.u32 %v3096, 4294967040
        %v3386 = vand.u32 %v3097, 4294967040
        %v3387 = vand.u32 %v3098, 4294967040
        %v3388 = vand.u32 %v3099, 4294967040
        %v3389 = vand.u32 %v3100, 4294967040
        %v3390 = vand.u32 %v3101, 4294967040
        %v3391 = vand.u32 %v3102, 4294967040
        %v3392 = vand.u32 %v3103, 4294967040
        %v3393 = vand.u32 %v3104, 4294967040
        %v3394 = vand.u32 %v3105, 4294967040
        %v3395 = vand.u32 %v3106, 4294967040
        %v3396 = vand.u32 %v3107, 4294967040
        %v3397 = vand.u32 %v3108, 4294967040
        %v3398 = vand.u32 %v3109, 4294967040
        %v3399 = vand.u32 %v3110, 4294967040
        %v3400 = vand.u32 %v3111, 4294967040
        %v3401 = vand.u32 %v3112, 4294967040
        %v3402 = vand.u32 %v3113, 4294967040
        %v3403 = vand.u32 %v3114, 4294967040
        %v3404 = vand.u32 %v3115, 4294967040
        %v3405 = vand.u32 %v3116, 4294967040
        %v3406 = vand.u32 %v3117, 4294967040
        %v3407 = vand.u32 %v3118, 4294967040
        %v3408 = vand.u32 %v3119, 4294967040
        %v3409 = vand.u32 %v3120, 4294967040
        %v3410 = vand.u32 %v3121, 4294967040
        %v3411 = vand.u32 %v3122, 4294967040
        %v3412 = vand.u32 %v3123, 4294967040
        %v3413 = vand.u32 %v3124, 4294967040
        %v3414 = vand.u32 %v3125, 4294967040
        %v3415 = vand.u32 %v3126, 4294967040
        %v3416 = vand.u32 %v3127, 4294967040
        %v3417 = vand.u32 %v3128, 4294967040
        %v3418 = vand.u32 %v3129, 4294967040
        %v3419 = vand.u32 %v3130, 4294967040
        %v3420 = vand.u32 %v3131, 4294967040
        %v3421 = vand.u32 %v3132, 4294967040
        %v3422 = vand.u32 %v3133, 4294967040
        %v3423 = vand.u32 %v3134, 4294967040
        %v3424 = vand.u32 %v3135, 4294967040
        %v3425 = vand.u32 %v3136, 4294967040
        %v3426 = vand.u32 %v3137, 4294967040
        %v3427 = vand.u32 %v3138, 4294967040
        %v3428 = vand.u32 %v3139, 4294967040
        %v3429 = vand.u32 %v3140, 4294967040
        %v3430 = vand.u32 %v3141, 4294967040
        %v3431 = vand.u32 %v3142, 4294967040
        %v3432 = vand.u32 %v3143, 4294967040
        %v3433 = vand.u32 %v3144, 4294967040
        %v3434 = vand.u32 %v3145, 4294967040
        %v3435 = vand.u32 %v3146, 4294967040
        %v3436 = vand.u32 %v3147, 4294967040
        %v3437 = vand.u32 %v3148, 4294967040
        %v3438 = vand.u32 %v3149, 4294967040
        %v3439 = vand.u32 %v3150, 4294967040
        %v3440 = vand.u32 %v3151, 4294967040
        %v3441 = vand.u32 %v3152, 4294967040
        %v3442 = vand.u32 %v3153, 4294967040
        %v3443 = vand.u32 %v3154, 4294967040
        %v3444 = vor.u32 %v3316, %v3156
        %v3445 = vor.u32 %v3317, %v3156
        %v3446 = vor.u32 %v3318, %v3156
        %v3447 = vor.u32 %v3319, %v3156
        %v3448 = vor.u32 %v3320, %v3157
        %v3449 = vor.u32 %v3321, %v3157
        %v3450 = vor.u32 %v3322, %v3157
        %v3451 = vor.u32 %v3323, %v3157
        %v3452 = vor.u32 %v3324, %v3158
        %v3453 = vor.u32 %v3325, %v3158
        %v3454 = vor.u32 %v3326, %v3158
        %v3455 = vor.u32 %v3327, %v3158
        %v3456 = vor.u32 %v3328, %v3159
        %v3457 = vor.u32 %v3329, %v3159
        %v3458 = vor.u32 %v3330, %v3159
        %v3459 = vor.u32 %v3331, %v3159
        %v3460 = vor.u32 %v3332, %v3160
        %v3461 = vor.u32 %v3333, %v3160
        %v3462 = vor.u32 %v3334, %v3160
        %v3463 = vor.u32 %v3335, %v3160
        %v3464 = vor.u32 %v3336, %v3161
        %v3465 = vor.u32 %v3337, %v3161
        %v3466 = vor.u32 %v3338, %v3161
        %v3467 = vor.u32 %v3339, %v3161
        %v3468 = vor.u32 %v3340, %v3162
        %v3469 = vor.u32 %v3341, %v3162
        %v3470 = vor.u32 %v3342, %v3162
        %v3471 = vor.u32 %v3343, %v3162
        %v3472 = vor.u32 %v3344, %v3163
        %v3473 = vor.u32 %v3345, %v3163
        %v3474 = vor.u32 %v3346, %v3163
        %v3475 = vor.u32 %v3347, %v3163
        %v3476 = vor.u32 %v3348, %v3164
        %v3477 = vor.u32 %v3349, %v3164
        %v3478 = vor.u32 %v3350, %v3164
        %v3479 = vor.u32 %v3351, %v3164
        %v3480 = vor.u32 %v3352, %v3165
        %v3481 = vor.u32 %v3353, %v3165
        %v3482 = vor.u32 %v3354, %v3165
        %v3483 = vor.u32 %v3355, %v3165
        %v3484 = vor.u32 %v3356, %v3166
        %v3485 = vor.u32 %v3357, %v3166
        %v3486 = vor.u32 %v3358, %v3166
        %v3487 = vor.u32 %v3359, %v3166
        %v3488 = vor.u32 %v3360, %v3167
        %v3489 = vor.u32 %v3361, %v3167
        %v3490 = vor.u32 %v3362, %v3167
        %v3491 = vor.u32 %v3363, %v3167
        %v3492 = vor.u32 %v3364, %v3168
        %v3493 = vor.u32 %v3365, %v3168
        %v3494 = vor.u32 %v3366, %v3168
        %v3495 = vor.u32 %v3367, %v3168
        %v3496 = vor.u32 %v3368, %v3169
        %v3497 = vor.u32 %v3369, %v3169
        %v3498 = vor.u32 %v3370, %v3169
        %v3499 = vor.u32 %v3371, %v3169
        %v3500 = vor.u32 %v3372, %v3170
        %v3501 = vor.u32 %v3373, %v3170
        %v3502 = vor.u32 %v3374, %v3170
        %v3503 = vor.u32 %v3375, %v3170
        %v3504 = vor.u32 %v3376, %v3171
        %v3505 = vor.u32 %v3377, %v3171
        %v3506 = vor.u32 %v3378, %v3171
        %v3507 = vor.u32 %v3379, %v3171
        %v3508 = vor.u32 %v3380, %v3172
        %v3509 = vor.u32 %v3381, %v3172
        %v3510 = vor.u32 %v3382, %v3172
        %v3511 = vor.u32 %v3383, %v3172
        %v3512 = vor.u32 %v3384, %v3173
        %v3513 = vor.u32 %v3385, %v3173
        %v3514 = vor.u32 %v3386, %v3173
        %v3515 = vor.u32 %v3387, %v3173
        %v3516 = vor.u32 %v3388, %v3174
        %v3517 = vor.u32 %v3389, %v3174
        %v3518 = vor.u32 %v3390, %v3174
        %v3519 = vor.u32 %v3391, %v3174
        %v3520 = vor.u32 %v3392, %v3175
        %v3521 = vor.u32 %v3393, %v3175
        %v3522 = vor.u32 %v3394, %v3175
        %v3523 = vor.u32 %v3395, %v3175
        %v3524 = vor.u32 %v3396, %v3176
        %v3525 = vor.u32 %v3397, %v3176
        %v3526 = vor.u32 %v3398, %v3176
        %v3527 = vor.u32 %v3399, %v3176
        %v3528 = vor.u32 %v3400, %v3177
        %v3529 = vor.u32 %v3401, %v3177
        %v3530 = vor.u32 %v3402, %v3177
        %v3531 = vor.u32 %v3403, %v3177
        %v3532 = vor.u32 %v3404, %v3178
        %v3533 = vor.u32 %v3405, %v3178
        %v3534 = vor.u32 %v3406, %v3178
        %v3535 = vor.u32 %v3407, %v3178
        %v3536 = vor.u32 %v3408, %v3179
        %v3537 = vor.u32 %v3409, %v3179
        %v3538 = vor.u32 %v3410, %v3179
        %v3539 = vor.u32 %v3411, %v3179
        %v3540 = vor.u32 %v3412, %v3180
        %v3541 = vor.u32 %v3413, %v3180
        %v3542 = vor.u32 %v3414, %v3180
        %v3543 = vor.u32 %v3415, %v3180
        %v3544 = vor.u32 %v3416, %v3181
        %v3545 = vor.u32 %v3417, %v3181
        %v3546 = vor.u32 %v3418, %v3181
        %v3547 = vor.u32 %v3419, %v3181
        %v3548 = vor.u32 %v3420, %v3182
        %v3549 = vor.u32 %v3421, %v3182
        %v3550 = vor.u32 %v3422, %v3182
        %v3551 = vor.u32 %v3423, %v3182
        %v3552 = vor.u32 %v3424, %v3183
        %v3553 = vor.u32 %v3425, %v3183
        %v3554 = vor.u32 %v3426, %v3183
        %v3555 = vor.u32 %v3427, %v3183
        %v3556 = vor.u32 %v3428, %v3184
        %v3557 = vor.u32 %v3429, %v3184
        %v3558 = vor.u32 %v3430, %v3184
        %v3559 = vor.u32 %v3431, %v3184
        %v3560 = vor.u32 %v3432, %v3185
        %v3561 = vor.u32 %v3433, %v3185
        %v3562 = vor.u32 %v3434, %v3185
        %v3563 = vor.u32 %v3435, %v3185
        %v3564 = vor.u32 %v3436, %v3186
        %v3565 = vor.u32 %v3437, %v3186
        %v3566 = vor.u32 %v3438, %v3186
        %v3567 = vor.u32 %v3439, %v3186
        %v3568 = vor.u32 %v3440, %v3187
        %v3569 = vor.u32 %v3441, %v3187
        %v3570 = vor.u32 %v3442, %v3187
        %v3571 = vor.u32 %v3443, %v3187
        %vm3572 = vcmp.lt.s32.totalorder %v3444, %v3448
        %v3573 = vsel %vm3572, %v3444, %v3448
        %vm3574 = vcmp.lt.s32.totalorder %v3573, %v3452
        %v3575 = vsel %vm3574, %v3573, %v3452
        %vm3576 = vcmp.lt.s32.totalorder %v3575, %v3456
        %v3577 = vsel %vm3576, %v3575, %v3456
        %vm3578 = vcmp.lt.s32.totalorder %v3577, %v3460
        %v3579 = vsel %vm3578, %v3577, %v3460
        %vm3580 = vcmp.lt.s32.totalorder %v3579, %v3464
        %v3581 = vsel %vm3580, %v3579, %v3464
        %vm3582 = vcmp.lt.s32.totalorder %v3581, %v3468
        %v3583 = vsel %vm3582, %v3581, %v3468
        %vm3584 = vcmp.lt.s32.totalorder %v3583, %v3472
        %v3585 = vsel %vm3584, %v3583, %v3472
        %vm3586 = vcmp.lt.s32.totalorder %v3585, %v3476
        %v3587 = vsel %vm3586, %v3585, %v3476
        %vm3588 = vcmp.lt.s32.totalorder %v3587, %v3480
        %v3589 = vsel %vm3588, %v3587, %v3480
        %vm3590 = vcmp.lt.s32.totalorder %v3589, %v3484
        %v3591 = vsel %vm3590, %v3589, %v3484
        %vm3592 = vcmp.lt.s32.totalorder %v3591, %v3488
        %v3593 = vsel %vm3592, %v3591, %v3488
        %vm3594 = vcmp.lt.s32.totalorder %v3593, %v3492
        %v3595 = vsel %vm3594, %v3593, %v3492
        %vm3596 = vcmp.lt.s32.totalorder %v3595, %v3496
        %v3597 = vsel %vm3596, %v3595, %v3496
        %vm3598 = vcmp.lt.s32.totalorder %v3597, %v3500
        %v3599 = vsel %vm3598, %v3597, %v3500
        %vm3600 = vcmp.lt.s32.totalorder %v3599, %v3504
        %v3601 = vsel %vm3600, %v3599, %v3504
        %vm3602 = vcmp.lt.s32.totalorder %v3601, %v3508
        %v3603 = vsel %vm3602, %v3601, %v3508
        %vm3604 = vcmp.lt.s32.totalorder %v3603, %v3512
        %v3605 = vsel %vm3604, %v3603, %v3512
        %vm3606 = vcmp.lt.s32.totalorder %v3605, %v3516
        %v3607 = vsel %vm3606, %v3605, %v3516
        %vm3608 = vcmp.lt.s32.totalorder %v3607, %v3520
        %v3609 = vsel %vm3608, %v3607, %v3520
        %vm3610 = vcmp.lt.s32.totalorder %v3609, %v3524
        %v3611 = vsel %vm3610, %v3609, %v3524
        %vm3612 = vcmp.lt.s32.totalorder %v3611, %v3528
        %v3613 = vsel %vm3612, %v3611, %v3528
        %vm3614 = vcmp.lt.s32.totalorder %v3613, %v3532
        %v3615 = vsel %vm3614, %v3613, %v3532
        %vm3616 = vcmp.lt.s32.totalorder %v3615, %v3536
        %v3617 = vsel %vm3616, %v3615, %v3536
        %vm3618 = vcmp.lt.s32.totalorder %v3617, %v3540
        %v3619 = vsel %vm3618, %v3617, %v3540
        %vm3620 = vcmp.lt.s32.totalorder %v3619, %v3544
        %v3621 = vsel %vm3620, %v3619, %v3544
        %vm3622 = vcmp.lt.s32.totalorder %v3621, %v3548
        %v3623 = vsel %vm3622, %v3621, %v3548
        %vm3624 = vcmp.lt.s32.totalorder %v3623, %v3552
        %v3625 = vsel %vm3624, %v3623, %v3552
        %vm3626 = vcmp.lt.s32.totalorder %v3625, %v3556
        %v3627 = vsel %vm3626, %v3625, %v3556
        %vm3628 = vcmp.lt.s32.totalorder %v3627, %v3560
        %v3629 = vsel %vm3628, %v3627, %v3560
        %vm3630 = vcmp.lt.s32.totalorder %v3629, %v3564
        %v3631 = vsel %vm3630, %v3629, %v3564
        %vm3632 = vcmp.lt.s32.totalorder %v3631, %v3568
        %v3633 = vsel %vm3632, %v3631, %v3568
        %v3634 = vrot.slane %v3633, 4
        %vm3635 = vcmp.lt.s32.totalorder %v3633, %v3634
        %v3636 = vsel %vm3635, %v3633, %v3634
        %v3637 = vrot.slane %v3636, 2
        %vm3638 = vcmp.lt.s32.totalorder %v3636, %v3637
        %v3639 = vsel %vm3638, %v3636, %v3637
        %v3640 = vrot.slane %v3639, 1
        %vm3641 = vcmp.lt.s32.totalorder %v3639, %v3640
        %v3642 = vsel %vm3641, %v3639, %v3640
        %vm3643 = vcmp.lt.s32.totalorder %v3445, %v3449
        %v3644 = vsel %vm3643, %v3445, %v3449
        %vm3645 = vcmp.lt.s32.totalorder %v3644, %v3453
        %v3646 = vsel %vm3645, %v3644, %v3453
        %vm3647 = vcmp.lt.s32.totalorder %v3646, %v3457
        %v3648 = vsel %vm3647, %v3646, %v3457
        %vm3649 = vcmp.lt.s32.totalorder %v3648, %v3461
        %v3650 = vsel %vm3649, %v3648, %v3461
        %vm3651 = vcmp.lt.s32.totalorder %v3650, %v3465
        %v3652 = vsel %vm3651, %v3650, %v3465
        %vm3653 = vcmp.lt.s32.totalorder %v3652, %v3469
        %v3654 = vsel %vm3653, %v3652, %v3469
        %vm3655 = vcmp.lt.s32.totalorder %v3654, %v3473
        %v3656 = vsel %vm3655, %v3654, %v3473
        %vm3657 = vcmp.lt.s32.totalorder %v3656, %v3477
        %v3658 = vsel %vm3657, %v3656, %v3477
        %vm3659 = vcmp.lt.s32.totalorder %v3658, %v3481
        %v3660 = vsel %vm3659, %v3658, %v3481
        %vm3661 = vcmp.lt.s32.totalorder %v3660, %v3485
        %v3662 = vsel %vm3661, %v3660, %v3485
        %vm3663 = vcmp.lt.s32.totalorder %v3662, %v3489
        %v3664 = vsel %vm3663, %v3662, %v3489
        %vm3665 = vcmp.lt.s32.totalorder %v3664, %v3493
        %v3666 = vsel %vm3665, %v3664, %v3493
        %vm3667 = vcmp.lt.s32.totalorder %v3666, %v3497
        %v3668 = vsel %vm3667, %v3666, %v3497
        %vm3669 = vcmp.lt.s32.totalorder %v3668, %v3501
        %v3670 = vsel %vm3669, %v3668, %v3501
        %vm3671 = vcmp.lt.s32.totalorder %v3670, %v3505
        %v3672 = vsel %vm3671, %v3670, %v3505
        %vm3673 = vcmp.lt.s32.totalorder %v3672, %v3509
        %v3674 = vsel %vm3673, %v3672, %v3509
        %vm3675 = vcmp.lt.s32.totalorder %v3674, %v3513
        %v3676 = vsel %vm3675, %v3674, %v3513
        %vm3677 = vcmp.lt.s32.totalorder %v3676, %v3517
        %v3678 = vsel %vm3677, %v3676, %v3517
        %vm3679 = vcmp.lt.s32.totalorder %v3678, %v3521
        %v3680 = vsel %vm3679, %v3678, %v3521
        %vm3681 = vcmp.lt.s32.totalorder %v3680, %v3525
        %v3682 = vsel %vm3681, %v3680, %v3525
        %vm3683 = vcmp.lt.s32.totalorder %v3682, %v3529
        %v3684 = vsel %vm3683, %v3682, %v3529
        %vm3685 = vcmp.lt.s32.totalorder %v3684, %v3533
        %v3686 = vsel %vm3685, %v3684, %v3533
        %vm3687 = vcmp.lt.s32.totalorder %v3686, %v3537
        %v3688 = vsel %vm3687, %v3686, %v3537
        %vm3689 = vcmp.lt.s32.totalorder %v3688, %v3541
        %v3690 = vsel %vm3689, %v3688, %v3541
        %vm3691 = vcmp.lt.s32.totalorder %v3690, %v3545
        %v3692 = vsel %vm3691, %v3690, %v3545
        %vm3693 = vcmp.lt.s32.totalorder %v3692, %v3549
        %v3694 = vsel %vm3693, %v3692, %v3549
        %vm3695 = vcmp.lt.s32.totalorder %v3694, %v3553
        %v3696 = vsel %vm3695, %v3694, %v3553
        %vm3697 = vcmp.lt.s32.totalorder %v3696, %v3557
        %v3698 = vsel %vm3697, %v3696, %v3557
        %vm3699 = vcmp.lt.s32.totalorder %v3698, %v3561
        %v3700 = vsel %vm3699, %v3698, %v3561
        %vm3701 = vcmp.lt.s32.totalorder %v3700, %v3565
        %v3702 = vsel %vm3701, %v3700, %v3565
        %vm3703 = vcmp.lt.s32.totalorder %v3702, %v3569
        %v3704 = vsel %vm3703, %v3702, %v3569
        %v3705 = vrot.slane %v3704, 4
        %vm3706 = vcmp.lt.s32.totalorder %v3704, %v3705
        %v3707 = vsel %vm3706, %v3704, %v3705
        %v3708 = vrot.slane %v3707, 2
        %vm3709 = vcmp.lt.s32.totalorder %v3707, %v3708
        %v3710 = vsel %vm3709, %v3707, %v3708
        %v3711 = vrot.slane %v3710, 1
        %vm3712 = vcmp.lt.s32.totalorder %v3710, %v3711
        %v3713 = vsel %vm3712, %v3710, %v3711
        %vm3714 = vcmp.lt.s32.totalorder %v3446, %v3450
        %v3715 = vsel %vm3714, %v3446, %v3450
        %vm3716 = vcmp.lt.s32.totalorder %v3715, %v3454
        %v3717 = vsel %vm3716, %v3715, %v3454
        %vm3718 = vcmp.lt.s32.totalorder %v3717, %v3458
        %v3719 = vsel %vm3718, %v3717, %v3458
        %vm3720 = vcmp.lt.s32.totalorder %v3719, %v3462
        %v3721 = vsel %vm3720, %v3719, %v3462
        %vm3722 = vcmp.lt.s32.totalorder %v3721, %v3466
        %v3723 = vsel %vm3722, %v3721, %v3466
        %vm3724 = vcmp.lt.s32.totalorder %v3723, %v3470
        %v3725 = vsel %vm3724, %v3723, %v3470
        %vm3726 = vcmp.lt.s32.totalorder %v3725, %v3474
        %v3727 = vsel %vm3726, %v3725, %v3474
        %vm3728 = vcmp.lt.s32.totalorder %v3727, %v3478
        %v3729 = vsel %vm3728, %v3727, %v3478
        %vm3730 = vcmp.lt.s32.totalorder %v3729, %v3482
        %v3731 = vsel %vm3730, %v3729, %v3482
        %vm3732 = vcmp.lt.s32.totalorder %v3731, %v3486
        %v3733 = vsel %vm3732, %v3731, %v3486
        %vm3734 = vcmp.lt.s32.totalorder %v3733, %v3490
        %v3735 = vsel %vm3734, %v3733, %v3490
        %vm3736 = vcmp.lt.s32.totalorder %v3735, %v3494
        %v3737 = vsel %vm3736, %v3735, %v3494
        %vm3738 = vcmp.lt.s32.totalorder %v3737, %v3498
        %v3739 = vsel %vm3738, %v3737, %v3498
        %vm3740 = vcmp.lt.s32.totalorder %v3739, %v3502
        %v3741 = vsel %vm3740, %v3739, %v3502
        %vm3742 = vcmp.lt.s32.totalorder %v3741, %v3506
        %v3743 = vsel %vm3742, %v3741, %v3506
        %vm3744 = vcmp.lt.s32.totalorder %v3743, %v3510
        %v3745 = vsel %vm3744, %v3743, %v3510
        %vm3746 = vcmp.lt.s32.totalorder %v3745, %v3514
        %v3747 = vsel %vm3746, %v3745, %v3514
        %vm3748 = vcmp.lt.s32.totalorder %v3747, %v3518
        %v3749 = vsel %vm3748, %v3747, %v3518
        %vm3750 = vcmp.lt.s32.totalorder %v3749, %v3522
        %v3751 = vsel %vm3750, %v3749, %v3522
        %vm3752 = vcmp.lt.s32.totalorder %v3751, %v3526
        %v3753 = vsel %vm3752, %v3751, %v3526
        %vm3754 = vcmp.lt.s32.totalorder %v3753, %v3530
        %v3755 = vsel %vm3754, %v3753, %v3530
        %vm3756 = vcmp.lt.s32.totalorder %v3755, %v3534
        %v3757 = vsel %vm3756, %v3755, %v3534
        %vm3758 = vcmp.lt.s32.totalorder %v3757, %v3538
        %v3759 = vsel %vm3758, %v3757, %v3538
        %vm3760 = vcmp.lt.s32.totalorder %v3759, %v3542
        %v3761 = vsel %vm3760, %v3759, %v3542
        %vm3762 = vcmp.lt.s32.totalorder %v3761, %v3546
        %v3763 = vsel %vm3762, %v3761, %v3546
        %vm3764 = vcmp.lt.s32.totalorder %v3763, %v3550
        %v3765 = vsel %vm3764, %v3763, %v3550
        %vm3766 = vcmp.lt.s32.totalorder %v3765, %v3554
        %v3767 = vsel %vm3766, %v3765, %v3554
        %vm3768 = vcmp.lt.s32.totalorder %v3767, %v3558
        %v3769 = vsel %vm3768, %v3767, %v3558
        %vm3770 = vcmp.lt.s32.totalorder %v3769, %v3562
        %v3771 = vsel %vm3770, %v3769, %v3562
        %vm3772 = vcmp.lt.s32.totalorder %v3771, %v3566
        %v3773 = vsel %vm3772, %v3771, %v3566
        %vm3774 = vcmp.lt.s32.totalorder %v3773, %v3570
        %v3775 = vsel %vm3774, %v3773, %v3570
        %v3776 = vrot.slane %v3775, 4
        %vm3777 = vcmp.lt.s32.totalorder %v3775, %v3776
        %v3778 = vsel %vm3777, %v3775, %v3776
        %v3779 = vrot.slane %v3778, 2
        %vm3780 = vcmp.lt.s32.totalorder %v3778, %v3779
        %v3781 = vsel %vm3780, %v3778, %v3779
        %v3782 = vrot.slane %v3781, 1
        %vm3783 = vcmp.lt.s32.totalorder %v3781, %v3782
        %v3784 = vsel %vm3783, %v3781, %v3782
        %vm3785 = vcmp.lt.s32.totalorder %v3447, %v3451
        %v3786 = vsel %vm3785, %v3447, %v3451
        %vm3787 = vcmp.lt.s32.totalorder %v3786, %v3455
        %v3788 = vsel %vm3787, %v3786, %v3455
        %vm3789 = vcmp.lt.s32.totalorder %v3788, %v3459
        %v3790 = vsel %vm3789, %v3788, %v3459
        %vm3791 = vcmp.lt.s32.totalorder %v3790, %v3463
        %v3792 = vsel %vm3791, %v3790, %v3463
        %vm3793 = vcmp.lt.s32.totalorder %v3792, %v3467
        %v3794 = vsel %vm3793, %v3792, %v3467
        %vm3795 = vcmp.lt.s32.totalorder %v3794, %v3471
        %v3796 = vsel %vm3795, %v3794, %v3471
        %vm3797 = vcmp.lt.s32.totalorder %v3796, %v3475
        %v3798 = vsel %vm3797, %v3796, %v3475
        %vm3799 = vcmp.lt.s32.totalorder %v3798, %v3479
        %v3800 = vsel %vm3799, %v3798, %v3479
        %vm3801 = vcmp.lt.s32.totalorder %v3800, %v3483
        %v3802 = vsel %vm3801, %v3800, %v3483
        %vm3803 = vcmp.lt.s32.totalorder %v3802, %v3487
        %v3804 = vsel %vm3803, %v3802, %v3487
        %vm3805 = vcmp.lt.s32.totalorder %v3804, %v3491
        %v3806 = vsel %vm3805, %v3804, %v3491
        %vm3807 = vcmp.lt.s32.totalorder %v3806, %v3495
        %v3808 = vsel %vm3807, %v3806, %v3495
        %vm3809 = vcmp.lt.s32.totalorder %v3808, %v3499
        %v3810 = vsel %vm3809, %v3808, %v3499
        %vm3811 = vcmp.lt.s32.totalorder %v3810, %v3503
        %v3812 = vsel %vm3811, %v3810, %v3503
        %vm3813 = vcmp.lt.s32.totalorder %v3812, %v3507
        %v3814 = vsel %vm3813, %v3812, %v3507
        %vm3815 = vcmp.lt.s32.totalorder %v3814, %v3511
        %v3816 = vsel %vm3815, %v3814, %v3511
        %vm3817 = vcmp.lt.s32.totalorder %v3816, %v3515
        %v3818 = vsel %vm3817, %v3816, %v3515
        %vm3819 = vcmp.lt.s32.totalorder %v3818, %v3519
        %v3820 = vsel %vm3819, %v3818, %v3519
        %vm3821 = vcmp.lt.s32.totalorder %v3820, %v3523
        %v3822 = vsel %vm3821, %v3820, %v3523
        %vm3823 = vcmp.lt.s32.totalorder %v3822, %v3527
        %v3824 = vsel %vm3823, %v3822, %v3527
        %vm3825 = vcmp.lt.s32.totalorder %v3824, %v3531
        %v3826 = vsel %vm3825, %v3824, %v3531
        %vm3827 = vcmp.lt.s32.totalorder %v3826, %v3535
        %v3828 = vsel %vm3827, %v3826, %v3535
        %vm3829 = vcmp.lt.s32.totalorder %v3828, %v3539
        %v3830 = vsel %vm3829, %v3828, %v3539
        %vm3831 = vcmp.lt.s32.totalorder %v3830, %v3543
        %v3832 = vsel %vm3831, %v3830, %v3543
        %vm3833 = vcmp.lt.s32.totalorder %v3832, %v3547
        %v3834 = vsel %vm3833, %v3832, %v3547
        %vm3835 = vcmp.lt.s32.totalorder %v3834, %v3551
        %v3836 = vsel %vm3835, %v3834, %v3551
        %vm3837 = vcmp.lt.s32.totalorder %v3836, %v3555
        %v3838 = vsel %vm3837, %v3836, %v3555
        %vm3839 = vcmp.lt.s32.totalorder %v3838, %v3559
        %v3840 = vsel %vm3839, %v3838, %v3559
        %vm3841 = vcmp.lt.s32.totalorder %v3840, %v3563
        %v3842 = vsel %vm3841, %v3840, %v3563
        %vm3843 = vcmp.lt.s32.totalorder %v3842, %v3567
        %v3844 = vsel %vm3843, %v3842, %v3567
        %vm3845 = vcmp.lt.s32.totalorder %v3844, %v3571
        %v3846 = vsel %vm3845, %v3844, %v3571
        %v3847 = vrot.slane %v3846, 4
        %vm3848 = vcmp.lt.s32.totalorder %v3846, %v3847
        %v3849 = vsel %vm3848, %v3846, %v3847
        %v3850 = vrot.slane %v3849, 2
        %vm3851 = vcmp.lt.s32.totalorder %v3849, %v3850
        %v3852 = vsel %vm3851, %v3849, %v3850
        %v3853 = vrot.slane %v3852, 1
        %vm3854 = vcmp.lt.s32.totalorder %v3852, %v3853
        %v3855 = vsel %vm3854, %v3852, %v3853
        %v3856 = vand.u32 %v3642, 4294967040
        %v3857 = vand.u32 %v3713, 4294967040
        %v3858 = vand.u32 %v3784, 4294967040
        %v3859 = vand.u32 %v3855, 4294967040
        %vm3860 = vcmp.eq.s32.totalorder %v3444, %v3642
        %vm3861 = vcmp.eq.s32.totalorder %v3445, %v3713
        %vm3862 = vcmp.eq.s32.totalorder %v3446, %v3784
        %vm3863 = vcmp.eq.s32.totalorder %v3447, %v3855
        %vm3864 = vcmp.eq.s32.totalorder %v3448, %v3642
        %vm3865 = vcmp.eq.s32.totalorder %v3449, %v3713
        %vm3866 = vcmp.eq.s32.totalorder %v3450, %v3784
        %vm3867 = vcmp.eq.s32.totalorder %v3451, %v3855
        %vm3868 = vcmp.eq.s32.totalorder %v3452, %v3642
        %vm3869 = vcmp.eq.s32.totalorder %v3453, %v3713
        %vm3870 = vcmp.eq.s32.totalorder %v3454, %v3784
        %vm3871 = vcmp.eq.s32.totalorder %v3455, %v3855
        %vm3872 = vcmp.eq.s32.totalorder %v3456, %v3642
        %vm3873 = vcmp.eq.s32.totalorder %v3457, %v3713
        %vm3874 = vcmp.eq.s32.totalorder %v3458, %v3784
        %vm3875 = vcmp.eq.s32.totalorder %v3459, %v3855
        %vm3876 = vcmp.eq.s32.totalorder %v3460, %v3642
        %vm3877 = vcmp.eq.s32.totalorder %v3461, %v3713
        %vm3878 = vcmp.eq.s32.totalorder %v3462, %v3784
        %vm3879 = vcmp.eq.s32.totalorder %v3463, %v3855
        %vm3880 = vcmp.eq.s32.totalorder %v3464, %v3642
        %vm3881 = vcmp.eq.s32.totalorder %v3465, %v3713
        %vm3882 = vcmp.eq.s32.totalorder %v3466, %v3784
        %vm3883 = vcmp.eq.s32.totalorder %v3467, %v3855
        %vm3884 = vcmp.eq.s32.totalorder %v3468, %v3642
        %vm3885 = vcmp.eq.s32.totalorder %v3469, %v3713
        %vm3886 = vcmp.eq.s32.totalorder %v3470, %v3784
        %vm3887 = vcmp.eq.s32.totalorder %v3471, %v3855
        %vm3888 = vcmp.eq.s32.totalorder %v3472, %v3642
        %vm3889 = vcmp.eq.s32.totalorder %v3473, %v3713
        %vm3890 = vcmp.eq.s32.totalorder %v3474, %v3784
        %vm3891 = vcmp.eq.s32.totalorder %v3475, %v3855
        %vm3892 = vcmp.eq.s32.totalorder %v3476, %v3642
        %vm3893 = vcmp.eq.s32.totalorder %v3477, %v3713
        %vm3894 = vcmp.eq.s32.totalorder %v3478, %v3784
        %vm3895 = vcmp.eq.s32.totalorder %v3479, %v3855
        %vm3896 = vcmp.eq.s32.totalorder %v3480, %v3642
        %vm3897 = vcmp.eq.s32.totalorder %v3481, %v3713
        %vm3898 = vcmp.eq.s32.totalorder %v3482, %v3784
        %vm3899 = vcmp.eq.s32.totalorder %v3483, %v3855
        %vm3900 = vcmp.eq.s32.totalorder %v3484, %v3642
        %vm3901 = vcmp.eq.s32.totalorder %v3485, %v3713
        %vm3902 = vcmp.eq.s32.totalorder %v3486, %v3784
        %vm3903 = vcmp.eq.s32.totalorder %v3487, %v3855
        %vm3904 = vcmp.eq.s32.totalorder %v3488, %v3642
        %vm3905 = vcmp.eq.s32.totalorder %v3489, %v3713
        %vm3906 = vcmp.eq.s32.totalorder %v3490, %v3784
        %vm3907 = vcmp.eq.s32.totalorder %v3491, %v3855
        %vm3908 = vcmp.eq.s32.totalorder %v3492, %v3642
        %vm3909 = vcmp.eq.s32.totalorder %v3493, %v3713
        %vm3910 = vcmp.eq.s32.totalorder %v3494, %v3784
        %vm3911 = vcmp.eq.s32.totalorder %v3495, %v3855
        %vm3912 = vcmp.eq.s32.totalorder %v3496, %v3642
        %vm3913 = vcmp.eq.s32.totalorder %v3497, %v3713
        %vm3914 = vcmp.eq.s32.totalorder %v3498, %v3784
        %vm3915 = vcmp.eq.s32.totalorder %v3499, %v3855
        %vm3916 = vcmp.eq.s32.totalorder %v3500, %v3642
        %vm3917 = vcmp.eq.s32.totalorder %v3501, %v3713
        %vm3918 = vcmp.eq.s32.totalorder %v3502, %v3784
        %vm3919 = vcmp.eq.s32.totalorder %v3503, %v3855
        %vm3920 = vcmp.eq.s32.totalorder %v3504, %v3642
        %vm3921 = vcmp.eq.s32.totalorder %v3505, %v3713
        %vm3922 = vcmp.eq.s32.totalorder %v3506, %v3784
        %vm3923 = vcmp.eq.s32.totalorder %v3507, %v3855
        %vm3924 = vcmp.eq.s32.totalorder %v3508, %v3642
        %vm3925 = vcmp.eq.s32.totalorder %v3509, %v3713
        %vm3926 = vcmp.eq.s32.totalorder %v3510, %v3784
        %vm3927 = vcmp.eq.s32.totalorder %v3511, %v3855
        %vm3928 = vcmp.eq.s32.totalorder %v3512, %v3642
        %vm3929 = vcmp.eq.s32.totalorder %v3513, %v3713
        %vm3930 = vcmp.eq.s32.totalorder %v3514, %v3784
        %vm3931 = vcmp.eq.s32.totalorder %v3515, %v3855
        %vm3932 = vcmp.eq.s32.totalorder %v3516, %v3642
        %vm3933 = vcmp.eq.s32.totalorder %v3517, %v3713
        %vm3934 = vcmp.eq.s32.totalorder %v3518, %v3784
        %vm3935 = vcmp.eq.s32.totalorder %v3519, %v3855
        %vm3936 = vcmp.eq.s32.totalorder %v3520, %v3642
        %vm3937 = vcmp.eq.s32.totalorder %v3521, %v3713
        %vm3938 = vcmp.eq.s32.totalorder %v3522, %v3784
        %vm3939 = vcmp.eq.s32.totalorder %v3523, %v3855
        %vm3940 = vcmp.eq.s32.totalorder %v3524, %v3642
        %vm3941 = vcmp.eq.s32.totalorder %v3525, %v3713
        %vm3942 = vcmp.eq.s32.totalorder %v3526, %v3784
        %vm3943 = vcmp.eq.s32.totalorder %v3527, %v3855
        %vm3944 = vcmp.eq.s32.totalorder %v3528, %v3642
        %vm3945 = vcmp.eq.s32.totalorder %v3529, %v3713
        %vm3946 = vcmp.eq.s32.totalorder %v3530, %v3784
        %vm3947 = vcmp.eq.s32.totalorder %v3531, %v3855
        %vm3948 = vcmp.eq.s32.totalorder %v3532, %v3642
        %vm3949 = vcmp.eq.s32.totalorder %v3533, %v3713
        %vm3950 = vcmp.eq.s32.totalorder %v3534, %v3784
        %vm3951 = vcmp.eq.s32.totalorder %v3535, %v3855
        %vm3952 = vcmp.eq.s32.totalorder %v3536, %v3642
        %vm3953 = vcmp.eq.s32.totalorder %v3537, %v3713
        %vm3954 = vcmp.eq.s32.totalorder %v3538, %v3784
        %vm3955 = vcmp.eq.s32.totalorder %v3539, %v3855
        %vm3956 = vcmp.eq.s32.totalorder %v3540, %v3642
        %vm3957 = vcmp.eq.s32.totalorder %v3541, %v3713
        %vm3958 = vcmp.eq.s32.totalorder %v3542, %v3784
        %vm3959 = vcmp.eq.s32.totalorder %v3543, %v3855
        %vm3960 = vcmp.eq.s32.totalorder %v3544, %v3642
        %vm3961 = vcmp.eq.s32.totalorder %v3545, %v3713
        %vm3962 = vcmp.eq.s32.totalorder %v3546, %v3784
        %vm3963 = vcmp.eq.s32.totalorder %v3547, %v3855
        %vm3964 = vcmp.eq.s32.totalorder %v3548, %v3642
        %vm3965 = vcmp.eq.s32.totalorder %v3549, %v3713
        %vm3966 = vcmp.eq.s32.totalorder %v3550, %v3784
        %vm3967 = vcmp.eq.s32.totalorder %v3551, %v3855
        %vm3968 = vcmp.eq.s32.totalorder %v3552, %v3642
        %vm3969 = vcmp.eq.s32.totalorder %v3553, %v3713
        %vm3970 = vcmp.eq.s32.totalorder %v3554, %v3784
        %vm3971 = vcmp.eq.s32.totalorder %v3555, %v3855
        %vm3972 = vcmp.eq.s32.totalorder %v3556, %v3642
        %vm3973 = vcmp.eq.s32.totalorder %v3557, %v3713
        %vm3974 = vcmp.eq.s32.totalorder %v3558, %v3784
        %vm3975 = vcmp.eq.s32.totalorder %v3559, %v3855
        %vm3976 = vcmp.eq.s32.totalorder %v3560, %v3642
        %vm3977 = vcmp.eq.s32.totalorder %v3561, %v3713
        %vm3978 = vcmp.eq.s32.totalorder %v3562, %v3784
        %vm3979 = vcmp.eq.s32.totalorder %v3563, %v3855
        %vm3980 = vcmp.eq.s32.totalorder %v3564, %v3642
        %vm3981 = vcmp.eq.s32.totalorder %v3565, %v3713
        %vm3982 = vcmp.eq.s32.totalorder %v3566, %v3784
        %vm3983 = vcmp.eq.s32.totalorder %v3567, %v3855
        %vm3984 = vcmp.eq.s32.totalorder %v3568, %v3642
        %vm3985 = vcmp.eq.s32.totalorder %v3569, %v3713
        %vm3986 = vcmp.eq.s32.totalorder %v3570, %v3784
        %vm3987 = vcmp.eq.s32.totalorder %v3571, %v3855
        %v3988 = vsel %vm3860, %v788, 0.0
        %v3989 = vsel %vm3861, %v790, 0.0
        %v3990 = vsel %vm3862, %v1429, 0.0
        %v3991 = vsel %vm3863, %v1431, 0.0
        %v3992 = vsel %vm3864, %v794, 0.0
        %v3993 = vsel %vm3865, %v796, 0.0
        %v3994 = vsel %vm3866, %v1435, 0.0
        %v3995 = vsel %vm3867, %v1437, 0.0
        %v3996 = vsel %vm3868, %v800, 0.0
        %v3997 = vsel %vm3869, %v802, 0.0
        %v3998 = vsel %vm3870, %v1441, 0.0
        %v3999 = vsel %vm3871, %v1443, 0.0
        %v4000 = vsel %vm3872, %v806, 0.0
        %v4001 = vsel %vm3873, %v808, 0.0
        %v4002 = vsel %vm3874, %v1447, 0.0
        %v4003 = vsel %vm3875, %v1449, 0.0
        %v4004 = vsel %vm3876, %v812, 0.0
        %v4005 = vsel %vm3877, %v814, 0.0
        %v4006 = vsel %vm3878, %v1453, 0.0
        %v4007 = vsel %vm3879, %v1455, 0.0
        %v4008 = vsel %vm3880, %v818, 0.0
        %v4009 = vsel %vm3881, %v820, 0.0
        %v4010 = vsel %vm3882, %v1459, 0.0
        %v4011 = vsel %vm3883, %v1461, 0.0
        %v4012 = vsel %vm3884, %v824, 0.0
        %v4013 = vsel %vm3885, %v826, 0.0
        %v4014 = vsel %vm3886, %v1465, 0.0
        %v4015 = vsel %vm3887, %v1467, 0.0
        %v4016 = vsel %vm3888, %v830, 0.0
        %v4017 = vsel %vm3889, %v832, 0.0
        %v4018 = vsel %vm3890, %v1471, 0.0
        %v4019 = vsel %vm3891, %v1473, 0.0
        %v4020 = vsel %vm3892, %v836, 0.0
        %v4021 = vsel %vm3893, %v838, 0.0
        %v4022 = vsel %vm3894, %v1477, 0.0
        %v4023 = vsel %vm3895, %v1479, 0.0
        %v4024 = vsel %vm3896, %v842, 0.0
        %v4025 = vsel %vm3897, %v844, 0.0
        %v4026 = vsel %vm3898, %v1483, 0.0
        %v4027 = vsel %vm3899, %v1485, 0.0
        %v4028 = vsel %vm3900, %v848, 0.0
        %v4029 = vsel %vm3901, %v850, 0.0
        %v4030 = vsel %vm3902, %v1489, 0.0
        %v4031 = vsel %vm3903, %v1491, 0.0
        %v4032 = vsel %vm3904, %v854, 0.0
        %v4033 = vsel %vm3905, %v856, 0.0
        %v4034 = vsel %vm3906, %v1495, 0.0
        %v4035 = vsel %vm3907, %v1497, 0.0
        %v4036 = vsel %vm3908, %v860, 0.0
        %v4037 = vsel %vm3909, %v862, 0.0
        %v4038 = vsel %vm3910, %v1501, 0.0
        %v4039 = vsel %vm3911, %v1503, 0.0
        %v4040 = vsel %vm3912, %v866, 0.0
        %v4041 = vsel %vm3913, %v868, 0.0
        %v4042 = vsel %vm3914, %v1507, 0.0
        %v4043 = vsel %vm3915, %v1509, 0.0
        %v4044 = vsel %vm3916, %v872, 0.0
        %v4045 = vsel %vm3917, %v874, 0.0
        %v4046 = vsel %vm3918, %v1513, 0.0
        %v4047 = vsel %vm3919, %v1515, 0.0
        %v4048 = vsel %vm3920, %v878, 0.0
        %v4049 = vsel %vm3921, %v880, 0.0
        %v4050 = vsel %vm3922, %v1519, 0.0
        %v4051 = vsel %vm3923, %v1521, 0.0
        %v4052 = vsel %vm3924, %v884, 0.0
        %v4053 = vsel %vm3925, %v886, 0.0
        %v4054 = vsel %vm3926, %v1525, 0.0
        %v4055 = vsel %vm3927, %v1527, 0.0
        %v4056 = vsel %vm3928, %v890, 0.0
        %v4057 = vsel %vm3929, %v892, 0.0
        %v4058 = vsel %vm3930, %v1531, 0.0
        %v4059 = vsel %vm3931, %v1533, 0.0
        %v4060 = vsel %vm3932, %v896, 0.0
        %v4061 = vsel %vm3933, %v898, 0.0
        %v4062 = vsel %vm3934, %v1537, 0.0
        %v4063 = vsel %vm3935, %v1539, 0.0
        %v4064 = vsel %vm3936, %v902, 0.0
        %v4065 = vsel %vm3937, %v904, 0.0
        %v4066 = vsel %vm3938, %v1543, 0.0
        %v4067 = vsel %vm3939, %v1545, 0.0
        %v4068 = vsel %vm3940, %v908, 0.0
        %v4069 = vsel %vm3941, %v910, 0.0
        %v4070 = vsel %vm3942, %v1549, 0.0
        %v4071 = vsel %vm3943, %v1551, 0.0
        %v4072 = vsel %vm3944, %v914, 0.0
        %v4073 = vsel %vm3945, %v916, 0.0
        %v4074 = vsel %vm3946, %v1555, 0.0
        %v4075 = vsel %vm3947, %v1557, 0.0
        %v4076 = vsel %vm3948, %v920, 0.0
        %v4077 = vsel %vm3949, %v922, 0.0
        %v4078 = vsel %vm3950, %v1561, 0.0
        %v4079 = vsel %vm3951, %v1563, 0.0
        %v4080 = vsel %vm3952, %v926, 0.0
        %v4081 = vsel %vm3953, %v928, 0.0
        %v4082 = vsel %vm3954, %v1567, 0.0
        %v4083 = vsel %vm3955, %v1569, 0.0
        %v4084 = vsel %vm3956, %v932, 0.0
        %v4085 = vsel %vm3957, %v934, 0.0
        %v4086 = vsel %vm3958, %v1573, 0.0
        %v4087 = vsel %vm3959, %v1575, 0.0
        %v4088 = vsel %vm3960, %v938, 0.0
        %v4089 = vsel %vm3961, %v940, 0.0
        %v4090 = vsel %vm3962, %v1579, 0.0
        %v4091 = vsel %vm3963, %v1581, 0.0
        %v4092 = vsel %vm3964, %v944, 0.0
        %v4093 = vsel %vm3965, %v946, 0.0
        %v4094 = vsel %vm3966, %v1585, 0.0
        %v4095 = vsel %vm3967, %v1587, 0.0
        %v4096 = vsel %vm3968, %v950, 0.0
        %v4097 = vsel %vm3969, %v952, 0.0
        %v4098 = vsel %vm3970, %v1591, 0.0
        %v4099 = vsel %vm3971, %v1593, 0.0
        %v4100 = vsel %vm3972, %v956, 0.0
        %v4101 = vsel %vm3973, %v958, 0.0
        %v4102 = vsel %vm3974, %v1597, 0.0
        %v4103 = vsel %vm3975, %v1599, 0.0
        %v4104 = vsel %vm3976, %v962, 0.0
        %v4105 = vsel %vm3977, %v964, 0.0
        %v4106 = vsel %vm3978, %v1603, 0.0
        %v4107 = vsel %vm3979, %v1605, 0.0
        %v4108 = vsel %vm3980, %v968, 0.0
        %v4109 = vsel %vm3981, %v970, 0.0
        %v4110 = vsel %vm3982, %v1609, 0.0
        %v4111 = vsel %vm3983, %v1611, 0.0
        %v4112 = vsel %vm3984, %v974, 0.0
        %v4113 = vsel %vm3985, %v976, 0.0
        %v4114 = vsel %vm3986, %v1615, 0.0
        %v4115 = vsel %vm3987, %v1617, 0.0
        %v4116 = vpack.c.bf16 %v3992, %v3988
        %v4117 = vpack.c.bf16 %v3993, %v3989
        %v4118 = vpack.c.bf16 %v3994, %v3990
        %v4119 = vpack.c.bf16 %v3995, %v3991
        %v4120 = vpack.c.bf16 %v4000, %v3996
        %v4121 = vpack.c.bf16 %v4001, %v3997
        %v4122 = vpack.c.bf16 %v4002, %v3998
        %v4123 = vpack.c.bf16 %v4003, %v3999
        %v4124 = vpack.c.bf16 %v4008, %v4004
        %v4125 = vpack.c.bf16 %v4009, %v4005
        %v4126 = vpack.c.bf16 %v4010, %v4006
        %v4127 = vpack.c.bf16 %v4011, %v4007
        %v4128 = vpack.c.bf16 %v4016, %v4012
        %v4129 = vpack.c.bf16 %v4017, %v4013
        %v4130 = vpack.c.bf16 %v4018, %v4014
        %v4131 = vpack.c.bf16 %v4019, %v4015
        %v4132 = vpack.c.bf16 %v4024, %v4020
        %v4133 = vpack.c.bf16 %v4025, %v4021
        %v4134 = vpack.c.bf16 %v4026, %v4022
        %v4135 = vpack.c.bf16 %v4027, %v4023
        %v4136 = vpack.c.bf16 %v4032, %v4028
        %v4137 = vpack.c.bf16 %v4033, %v4029
        %v4138 = vpack.c.bf16 %v4034, %v4030
        %v4139 = vpack.c.bf16 %v4035, %v4031
        %v4140 = vpack.c.bf16 %v4040, %v4036
        %v4141 = vpack.c.bf16 %v4041, %v4037
        %v4142 = vpack.c.bf16 %v4042, %v4038
        %v4143 = vpack.c.bf16 %v4043, %v4039
        %v4144 = vpack.c.bf16 %v4048, %v4044
        %v4145 = vpack.c.bf16 %v4049, %v4045
        %v4146 = vpack.c.bf16 %v4050, %v4046
        %v4147 = vpack.c.bf16 %v4051, %v4047
        %v4148 = vpack.c.bf16 %v4056, %v4052
        %v4149 = vpack.c.bf16 %v4057, %v4053
        %v4150 = vpack.c.bf16 %v4058, %v4054
        %v4151 = vpack.c.bf16 %v4059, %v4055
        %v4152 = vpack.c.bf16 %v4064, %v4060
        %v4153 = vpack.c.bf16 %v4065, %v4061
        %v4154 = vpack.c.bf16 %v4066, %v4062
        %v4155 = vpack.c.bf16 %v4067, %v4063
        %v4156 = vpack.c.bf16 %v4072, %v4068
        %v4157 = vpack.c.bf16 %v4073, %v4069
        %v4158 = vpack.c.bf16 %v4074, %v4070
        %v4159 = vpack.c.bf16 %v4075, %v4071
        %v4160 = vpack.c.bf16 %v4080, %v4076
        %v4161 = vpack.c.bf16 %v4081, %v4077
        %v4162 = vpack.c.bf16 %v4082, %v4078
        %v4163 = vpack.c.bf16 %v4083, %v4079
        %v4164 = vpack.c.bf16 %v4088, %v4084
        %v4165 = vpack.c.bf16 %v4089, %v4085
        %v4166 = vpack.c.bf16 %v4090, %v4086
        %v4167 = vpack.c.bf16 %v4091, %v4087
        %v4168 = vpack.c.bf16 %v4096, %v4092
        %v4169 = vpack.c.bf16 %v4097, %v4093
        %v4170 = vpack.c.bf16 %v4098, %v4094
        %v4171 = vpack.c.bf16 %v4099, %v4095
        %v4172 = vpack.c.bf16 %v4104, %v4100
        %v4173 = vpack.c.bf16 %v4105, %v4101
        %v4174 = vpack.c.bf16 %v4106, %v4102
        %v4175 = vpack.c.bf16 %v4107, %v4103
        %v4176 = vpack.c.bf16 %v4112, %v4108
        %v4177 = vpack.c.bf16 %v4113, %v4109
        %v4178 = vpack.c.bf16 %v4114, %v4110
        %v4179 = vpack.c.bf16 %v4115, %v4111
        %v4180 = vsel %vm3860, %v980, 0.0
        %v4181 = vsel %vm3861, %v982, 0.0
        %v4182 = vsel %vm3862, %v1621, 0.0
        %v4183 = vsel %vm3863, %v1623, 0.0
        %v4184 = vsel %vm3864, %v986, 0.0
        %v4185 = vsel %vm3865, %v988, 0.0
        %v4186 = vsel %vm3866, %v1627, 0.0
        %v4187 = vsel %vm3867, %v1629, 0.0
        %v4188 = vsel %vm3868, %v992, 0.0
        %v4189 = vsel %vm3869, %v994, 0.0
        %v4190 = vsel %vm3870, %v1633, 0.0
        %v4191 = vsel %vm3871, %v1635, 0.0
        %v4192 = vsel %vm3872, %v998, 0.0
        %v4193 = vsel %vm3873, %v1000, 0.0
        %v4194 = vsel %vm3874, %v1639, 0.0
        %v4195 = vsel %vm3875, %v1641, 0.0
        %v4196 = vsel %vm3876, %v1004, 0.0
        %v4197 = vsel %vm3877, %v1006, 0.0
        %v4198 = vsel %vm3878, %v1645, 0.0
        %v4199 = vsel %vm3879, %v1647, 0.0
        %v4200 = vsel %vm3880, %v1010, 0.0
        %v4201 = vsel %vm3881, %v1012, 0.0
        %v4202 = vsel %vm3882, %v1651, 0.0
        %v4203 = vsel %vm3883, %v1653, 0.0
        %v4204 = vsel %vm3884, %v1016, 0.0
        %v4205 = vsel %vm3885, %v1018, 0.0
        %v4206 = vsel %vm3886, %v1657, 0.0
        %v4207 = vsel %vm3887, %v1659, 0.0
        %v4208 = vsel %vm3888, %v1022, 0.0
        %v4209 = vsel %vm3889, %v1024, 0.0
        %v4210 = vsel %vm3890, %v1663, 0.0
        %v4211 = vsel %vm3891, %v1665, 0.0
        %v4212 = vsel %vm3892, %v1028, 0.0
        %v4213 = vsel %vm3893, %v1030, 0.0
        %v4214 = vsel %vm3894, %v1669, 0.0
        %v4215 = vsel %vm3895, %v1671, 0.0
        %v4216 = vsel %vm3896, %v1034, 0.0
        %v4217 = vsel %vm3897, %v1036, 0.0
        %v4218 = vsel %vm3898, %v1675, 0.0
        %v4219 = vsel %vm3899, %v1677, 0.0
        %v4220 = vsel %vm3900, %v1040, 0.0
        %v4221 = vsel %vm3901, %v1042, 0.0
        %v4222 = vsel %vm3902, %v1681, 0.0
        %v4223 = vsel %vm3903, %v1683, 0.0
        %v4224 = vsel %vm3904, %v1046, 0.0
        %v4225 = vsel %vm3905, %v1048, 0.0
        %v4226 = vsel %vm3906, %v1687, 0.0
        %v4227 = vsel %vm3907, %v1689, 0.0
        %v4228 = vsel %vm3908, %v1052, 0.0
        %v4229 = vsel %vm3909, %v1054, 0.0
        %v4230 = vsel %vm3910, %v1693, 0.0
        %v4231 = vsel %vm3911, %v1695, 0.0
        %v4232 = vsel %vm3912, %v1058, 0.0
        %v4233 = vsel %vm3913, %v1060, 0.0
        %v4234 = vsel %vm3914, %v1699, 0.0
        %v4235 = vsel %vm3915, %v1701, 0.0
        %v4236 = vsel %vm3916, %v1064, 0.0
        %v4237 = vsel %vm3917, %v1066, 0.0
        %v4238 = vsel %vm3918, %v1705, 0.0
        %v4239 = vsel %vm3919, %v1707, 0.0
        %v4240 = vsel %vm3920, %v1070, 0.0
        %v4241 = vsel %vm3921, %v1072, 0.0
        %v4242 = vsel %vm3922, %v1711, 0.0
        %v4243 = vsel %vm3923, %v1713, 0.0
        %v4244 = vsel %vm3924, %v1076, 0.0
        %v4245 = vsel %vm3925, %v1078, 0.0
        %v4246 = vsel %vm3926, %v1717, 0.0
        %v4247 = vsel %vm3927, %v1719, 0.0
        %v4248 = vsel %vm3928, %v1082, 0.0
        %v4249 = vsel %vm3929, %v1084, 0.0
        %v4250 = vsel %vm3930, %v1723, 0.0
        %v4251 = vsel %vm3931, %v1725, 0.0
        %v4252 = vsel %vm3932, %v1088, 0.0
        %v4253 = vsel %vm3933, %v1090, 0.0
        %v4254 = vsel %vm3934, %v1729, 0.0
        %v4255 = vsel %vm3935, %v1731, 0.0
        %v4256 = vsel %vm3936, %v1094, 0.0
        %v4257 = vsel %vm3937, %v1096, 0.0
        %v4258 = vsel %vm3938, %v1735, 0.0
        %v4259 = vsel %vm3939, %v1737, 0.0
        %v4260 = vsel %vm3940, %v1100, 0.0
        %v4261 = vsel %vm3941, %v1102, 0.0
        %v4262 = vsel %vm3942, %v1741, 0.0
        %v4263 = vsel %vm3943, %v1743, 0.0
        %v4264 = vsel %vm3944, %v1106, 0.0
        %v4265 = vsel %vm3945, %v1108, 0.0
        %v4266 = vsel %vm3946, %v1747, 0.0
        %v4267 = vsel %vm3947, %v1749, 0.0
        %v4268 = vsel %vm3948, %v1112, 0.0
        %v4269 = vsel %vm3949, %v1114, 0.0
        %v4270 = vsel %vm3950, %v1753, 0.0
        %v4271 = vsel %vm3951, %v1755, 0.0
        %v4272 = vsel %vm3952, %v1118, 0.0
        %v4273 = vsel %vm3953, %v1120, 0.0
        %v4274 = vsel %vm3954, %v1759, 0.0
        %v4275 = vsel %vm3955, %v1761, 0.0
        %v4276 = vsel %vm3956, %v1124, 0.0
        %v4277 = vsel %vm3957, %v1126, 0.0
        %v4278 = vsel %vm3958, %v1765, 0.0
        %v4279 = vsel %vm3959, %v1767, 0.0
        %v4280 = vsel %vm3960, %v1130, 0.0
        %v4281 = vsel %vm3961, %v1132, 0.0
        %v4282 = vsel %vm3962, %v1771, 0.0
        %v4283 = vsel %vm3963, %v1773, 0.0
        %v4284 = vsel %vm3964, %v1136, 0.0
        %v4285 = vsel %vm3965, %v1138, 0.0
        %v4286 = vsel %vm3966, %v1777, 0.0
        %v4287 = vsel %vm3967, %v1779, 0.0
        %v4288 = vsel %vm3968, %v1142, 0.0
        %v4289 = vsel %vm3969, %v1144, 0.0
        %v4290 = vsel %vm3970, %v1783, 0.0
        %v4291 = vsel %vm3971, %v1785, 0.0
        %v4292 = vsel %vm3972, %v1148, 0.0
        %v4293 = vsel %vm3973, %v1150, 0.0
        %v4294 = vsel %vm3974, %v1789, 0.0
        %v4295 = vsel %vm3975, %v1791, 0.0
        %v4296 = vsel %vm3976, %v1154, 0.0
        %v4297 = vsel %vm3977, %v1156, 0.0
        %v4298 = vsel %vm3978, %v1795, 0.0
        %v4299 = vsel %vm3979, %v1797, 0.0
        %v4300 = vsel %vm3980, %v1160, 0.0
        %v4301 = vsel %vm3981, %v1162, 0.0
        %v4302 = vsel %vm3982, %v1801, 0.0
        %v4303 = vsel %vm3983, %v1803, 0.0
        %v4304 = vsel %vm3984, %v1166, 0.0
        %v4305 = vsel %vm3985, %v1168, 0.0
        %v4306 = vsel %vm3986, %v1807, 0.0
        %v4307 = vsel %vm3987, %v1809, 0.0
        %v4308 = vpack.c.bf16 %v4184, %v4180
        %v4309 = vpack.c.bf16 %v4185, %v4181
        %v4310 = vpack.c.bf16 %v4186, %v4182
        %v4311 = vpack.c.bf16 %v4187, %v4183
        %v4312 = vpack.c.bf16 %v4192, %v4188
        %v4313 = vpack.c.bf16 %v4193, %v4189
        %v4314 = vpack.c.bf16 %v4194, %v4190
        %v4315 = vpack.c.bf16 %v4195, %v4191
        %v4316 = vpack.c.bf16 %v4200, %v4196
        %v4317 = vpack.c.bf16 %v4201, %v4197
        %v4318 = vpack.c.bf16 %v4202, %v4198
        %v4319 = vpack.c.bf16 %v4203, %v4199
        %v4320 = vpack.c.bf16 %v4208, %v4204
        %v4321 = vpack.c.bf16 %v4209, %v4205
        %v4322 = vpack.c.bf16 %v4210, %v4206
        %v4323 = vpack.c.bf16 %v4211, %v4207
        %v4324 = vpack.c.bf16 %v4216, %v4212
        %v4325 = vpack.c.bf16 %v4217, %v4213
        %v4326 = vpack.c.bf16 %v4218, %v4214
        %v4327 = vpack.c.bf16 %v4219, %v4215
        %v4328 = vpack.c.bf16 %v4224, %v4220
        %v4329 = vpack.c.bf16 %v4225, %v4221
        %v4330 = vpack.c.bf16 %v4226, %v4222
        %v4331 = vpack.c.bf16 %v4227, %v4223
        %v4332 = vpack.c.bf16 %v4232, %v4228
        %v4333 = vpack.c.bf16 %v4233, %v4229
        %v4334 = vpack.c.bf16 %v4234, %v4230
        %v4335 = vpack.c.bf16 %v4235, %v4231
        %v4336 = vpack.c.bf16 %v4240, %v4236
        %v4337 = vpack.c.bf16 %v4241, %v4237
        %v4338 = vpack.c.bf16 %v4242, %v4238
        %v4339 = vpack.c.bf16 %v4243, %v4239
        %v4340 = vpack.c.bf16 %v4248, %v4244
        %v4341 = vpack.c.bf16 %v4249, %v4245
        %v4342 = vpack.c.bf16 %v4250, %v4246
        %v4343 = vpack.c.bf16 %v4251, %v4247
        %v4344 = vpack.c.bf16 %v4256, %v4252
        %v4345 = vpack.c.bf16 %v4257, %v4253
        %v4346 = vpack.c.bf16 %v4258, %v4254
        %v4347 = vpack.c.bf16 %v4259, %v4255
        %v4348 = vpack.c.bf16 %v4264, %v4260
        %v4349 = vpack.c.bf16 %v4265, %v4261
        %v4350 = vpack.c.bf16 %v4266, %v4262
        %v4351 = vpack.c.bf16 %v4267, %v4263
        %v4352 = vpack.c.bf16 %v4272, %v4268
        %v4353 = vpack.c.bf16 %v4273, %v4269
        %v4354 = vpack.c.bf16 %v4274, %v4270
        %v4355 = vpack.c.bf16 %v4275, %v4271
        %v4356 = vpack.c.bf16 %v4280, %v4276
        %v4357 = vpack.c.bf16 %v4281, %v4277
        %v4358 = vpack.c.bf16 %v4282, %v4278
        %v4359 = vpack.c.bf16 %v4283, %v4279
        %v4360 = vpack.c.bf16 %v4288, %v4284
        %v4361 = vpack.c.bf16 %v4289, %v4285
        %v4362 = vpack.c.bf16 %v4290, %v4286
        %v4363 = vpack.c.bf16 %v4291, %v4287
        %v4364 = vpack.c.bf16 %v4296, %v4292
        %v4365 = vpack.c.bf16 %v4297, %v4293
        %v4366 = vpack.c.bf16 %v4298, %v4294
        %v4367 = vpack.c.bf16 %v4299, %v4295
        %v4368 = vpack.c.bf16 %v4304, %v4300
        %v4369 = vpack.c.bf16 %v4305, %v4301
        %v4370 = vpack.c.bf16 %v4306, %v4302
        %v4371 = vpack.c.bf16 %v4307, %v4303
        %v4372 = vsel %vm3860, 1.0, 0.0
        %v4373 = vsel %vm3861, 1.0, 0.0
        %v4374 = vsel %vm3862, 1.0, 0.0
        %v4375 = vsel %vm3863, 1.0, 0.0
        %v4376 = vsel %vm3864, 1.0, 0.0
        %v4377 = vsel %vm3865, 1.0, 0.0
        %v4378 = vsel %vm3866, 1.0, 0.0
        %v4379 = vsel %vm3867, 1.0, 0.0
        %v4380 = vsel %vm3868, 1.0, 0.0
        %v4381 = vsel %vm3869, 1.0, 0.0
        %v4382 = vsel %vm3870, 1.0, 0.0
        %v4383 = vsel %vm3871, 1.0, 0.0
        %v4384 = vsel %vm3872, 1.0, 0.0
        %v4385 = vsel %vm3873, 1.0, 0.0
        %v4386 = vsel %vm3874, 1.0, 0.0
        %v4387 = vsel %vm3875, 1.0, 0.0
        %v4388 = vsel %vm3876, 1.0, 0.0
        %v4389 = vsel %vm3877, 1.0, 0.0
        %v4390 = vsel %vm3878, 1.0, 0.0
        %v4391 = vsel %vm3879, 1.0, 0.0
        %v4392 = vsel %vm3880, 1.0, 0.0
        %v4393 = vsel %vm3881, 1.0, 0.0
        %v4394 = vsel %vm3882, 1.0, 0.0
        %v4395 = vsel %vm3883, 1.0, 0.0
        %v4396 = vsel %vm3884, 1.0, 0.0
        %v4397 = vsel %vm3885, 1.0, 0.0
        %v4398 = vsel %vm3886, 1.0, 0.0
        %v4399 = vsel %vm3887, 1.0, 0.0
        %v4400 = vsel %vm3888, 1.0, 0.0
        %v4401 = vsel %vm3889, 1.0, 0.0
        %v4402 = vsel %vm3890, 1.0, 0.0
        %v4403 = vsel %vm3891, 1.0, 0.0
        %v4404 = vsel %vm3892, 1.0, 0.0
        %v4405 = vsel %vm3893, 1.0, 0.0
        %v4406 = vsel %vm3894, 1.0, 0.0
        %v4407 = vsel %vm3895, 1.0, 0.0
        %v4408 = vsel %vm3896, 1.0, 0.0
        %v4409 = vsel %vm3897, 1.0, 0.0
        %v4410 = vsel %vm3898, 1.0, 0.0
        %v4411 = vsel %vm3899, 1.0, 0.0
        %v4412 = vsel %vm3900, 1.0, 0.0
        %v4413 = vsel %vm3901, 1.0, 0.0
        %v4414 = vsel %vm3902, 1.0, 0.0
        %v4415 = vsel %vm3903, 1.0, 0.0
        %v4416 = vsel %vm3904, 1.0, 0.0
        %v4417 = vsel %vm3905, 1.0, 0.0
        %v4418 = vsel %vm3906, 1.0, 0.0
        %v4419 = vsel %vm3907, 1.0, 0.0
        %v4420 = vsel %vm3908, 1.0, 0.0
        %v4421 = vsel %vm3909, 1.0, 0.0
        %v4422 = vsel %vm3910, 1.0, 0.0
        %v4423 = vsel %vm3911, 1.0, 0.0
        %v4424 = vsel %vm3912, 1.0, 0.0
        %v4425 = vsel %vm3913, 1.0, 0.0
        %v4426 = vsel %vm3914, 1.0, 0.0
        %v4427 = vsel %vm3915, 1.0, 0.0
        %v4428 = vsel %vm3916, 1.0, 0.0
        %v4429 = vsel %vm3917, 1.0, 0.0
        %v4430 = vsel %vm3918, 1.0, 0.0
        %v4431 = vsel %vm3919, 1.0, 0.0
        %v4432 = vsel %vm3920, 1.0, 0.0
        %v4433 = vsel %vm3921, 1.0, 0.0
        %v4434 = vsel %vm3922, 1.0, 0.0
        %v4435 = vsel %vm3923, 1.0, 0.0
        %v4436 = vsel %vm3924, 1.0, 0.0
        %v4437 = vsel %vm3925, 1.0, 0.0
        %v4438 = vsel %vm3926, 1.0, 0.0
        %v4439 = vsel %vm3927, 1.0, 0.0
        %v4440 = vsel %vm3928, 1.0, 0.0
        %v4441 = vsel %vm3929, 1.0, 0.0
        %v4442 = vsel %vm3930, 1.0, 0.0
        %v4443 = vsel %vm3931, 1.0, 0.0
        %v4444 = vsel %vm3932, 1.0, 0.0
        %v4445 = vsel %vm3933, 1.0, 0.0
        %v4446 = vsel %vm3934, 1.0, 0.0
        %v4447 = vsel %vm3935, 1.0, 0.0
        %v4448 = vsel %vm3936, 1.0, 0.0
        %v4449 = vsel %vm3937, 1.0, 0.0
        %v4450 = vsel %vm3938, 1.0, 0.0
        %v4451 = vsel %vm3939, 1.0, 0.0
        %v4452 = vsel %vm3940, 1.0, 0.0
        %v4453 = vsel %vm3941, 1.0, 0.0
        %v4454 = vsel %vm3942, 1.0, 0.0
        %v4455 = vsel %vm3943, 1.0, 0.0
        %v4456 = vsel %vm3944, 1.0, 0.0
        %v4457 = vsel %vm3945, 1.0, 0.0
        %v4458 = vsel %vm3946, 1.0, 0.0
        %v4459 = vsel %vm3947, 1.0, 0.0
        %v4460 = vsel %vm3948, 1.0, 0.0
        %v4461 = vsel %vm3949, 1.0, 0.0
        %v4462 = vsel %vm3950, 1.0, 0.0
        %v4463 = vsel %vm3951, 1.0, 0.0
        %v4464 = vsel %vm3952, 1.0, 0.0
        %v4465 = vsel %vm3953, 1.0, 0.0
        %v4466 = vsel %vm3954, 1.0, 0.0
        %v4467 = vsel %vm3955, 1.0, 0.0
        %v4468 = vsel %vm3956, 1.0, 0.0
        %v4469 = vsel %vm3957, 1.0, 0.0
        %v4470 = vsel %vm3958, 1.0, 0.0
        %v4471 = vsel %vm3959, 1.0, 0.0
        %v4472 = vsel %vm3960, 1.0, 0.0
        %v4473 = vsel %vm3961, 1.0, 0.0
        %v4474 = vsel %vm3962, 1.0, 0.0
        %v4475 = vsel %vm3963, 1.0, 0.0
        %v4476 = vsel %vm3964, 1.0, 0.0
        %v4477 = vsel %vm3965, 1.0, 0.0
        %v4478 = vsel %vm3966, 1.0, 0.0
        %v4479 = vsel %vm3967, 1.0, 0.0
        %v4480 = vsel %vm3968, 1.0, 0.0
        %v4481 = vsel %vm3969, 1.0, 0.0
        %v4482 = vsel %vm3970, 1.0, 0.0
        %v4483 = vsel %vm3971, 1.0, 0.0
        %v4484 = vsel %vm3972, 1.0, 0.0
        %v4485 = vsel %vm3973, 1.0, 0.0
        %v4486 = vsel %vm3974, 1.0, 0.0
        %v4487 = vsel %vm3975, 1.0, 0.0
        %v4488 = vsel %vm3976, 1.0, 0.0
        %v4489 = vsel %vm3977, 1.0, 0.0
        %v4490 = vsel %vm3978, 1.0, 0.0
        %v4491 = vsel %vm3979, 1.0, 0.0
        %v4492 = vsel %vm3980, 1.0, 0.0
        %v4493 = vsel %vm3981, 1.0, 0.0
        %v4494 = vsel %vm3982, 1.0, 0.0
        %v4495 = vsel %vm3983, 1.0, 0.0
        %v4496 = vsel %vm3984, 1.0, 0.0
        %v4497 = vsel %vm3985, 1.0, 0.0
        %v4498 = vsel %vm3986, 1.0, 0.0
        %v4499 = vsel %vm3987, 1.0, 0.0
        %v4500 = vpack.c.bf16 %v4376, %v4372
        %v4501 = vpack.c.bf16 %v4377, %v4373
        %v4502 = vpack.c.bf16 %v4378, %v4374
        %v4503 = vpack.c.bf16 %v4379, %v4375
        %v4504 = vpack.c.bf16 %v4384, %v4380
        %v4505 = vpack.c.bf16 %v4385, %v4381
        %v4506 = vpack.c.bf16 %v4386, %v4382
        %v4507 = vpack.c.bf16 %v4387, %v4383
        %v4508 = vpack.c.bf16 %v4392, %v4388
        %v4509 = vpack.c.bf16 %v4393, %v4389
        %v4510 = vpack.c.bf16 %v4394, %v4390
        %v4511 = vpack.c.bf16 %v4395, %v4391
        %v4512 = vpack.c.bf16 %v4400, %v4396
        %v4513 = vpack.c.bf16 %v4401, %v4397
        %v4514 = vpack.c.bf16 %v4402, %v4398
        %v4515 = vpack.c.bf16 %v4403, %v4399
        %v4516 = vpack.c.bf16 %v4408, %v4404
        %v4517 = vpack.c.bf16 %v4409, %v4405
        %v4518 = vpack.c.bf16 %v4410, %v4406
        %v4519 = vpack.c.bf16 %v4411, %v4407
        %v4520 = vpack.c.bf16 %v4416, %v4412
        %v4521 = vpack.c.bf16 %v4417, %v4413
        %v4522 = vpack.c.bf16 %v4418, %v4414
        %v4523 = vpack.c.bf16 %v4419, %v4415
        %v4524 = vpack.c.bf16 %v4424, %v4420
        %v4525 = vpack.c.bf16 %v4425, %v4421
        %v4526 = vpack.c.bf16 %v4426, %v4422
        %v4527 = vpack.c.bf16 %v4427, %v4423
        %v4528 = vpack.c.bf16 %v4432, %v4428
        %v4529 = vpack.c.bf16 %v4433, %v4429
        %v4530 = vpack.c.bf16 %v4434, %v4430
        %v4531 = vpack.c.bf16 %v4435, %v4431
        %v4532 = vpack.c.bf16 %v4440, %v4436
        %v4533 = vpack.c.bf16 %v4441, %v4437
        %v4534 = vpack.c.bf16 %v4442, %v4438
        %v4535 = vpack.c.bf16 %v4443, %v4439
        %v4536 = vpack.c.bf16 %v4448, %v4444
        %v4537 = vpack.c.bf16 %v4449, %v4445
        %v4538 = vpack.c.bf16 %v4450, %v4446
        %v4539 = vpack.c.bf16 %v4451, %v4447
        %v4540 = vpack.c.bf16 %v4456, %v4452
        %v4541 = vpack.c.bf16 %v4457, %v4453
        %v4542 = vpack.c.bf16 %v4458, %v4454
        %v4543 = vpack.c.bf16 %v4459, %v4455
        %v4544 = vpack.c.bf16 %v4464, %v4460
        %v4545 = vpack.c.bf16 %v4465, %v4461
        %v4546 = vpack.c.bf16 %v4466, %v4462
        %v4547 = vpack.c.bf16 %v4467, %v4463
        %v4548 = vpack.c.bf16 %v4472, %v4468
        %v4549 = vpack.c.bf16 %v4473, %v4469
        %v4550 = vpack.c.bf16 %v4474, %v4470
        %v4551 = vpack.c.bf16 %v4475, %v4471
        %v4552 = vpack.c.bf16 %v4480, %v4476
        %v4553 = vpack.c.bf16 %v4481, %v4477
        %v4554 = vpack.c.bf16 %v4482, %v4478
        %v4555 = vpack.c.bf16 %v4483, %v4479
        %v4556 = vpack.c.bf16 %v4488, %v4484
        %v4557 = vpack.c.bf16 %v4489, %v4485
        %v4558 = vpack.c.bf16 %v4490, %v4486
        %v4559 = vpack.c.bf16 %v4491, %v4487
        %v4560 = vpack.c.bf16 %v4496, %v4492
        %v4561 = vpack.c.bf16 %v4497, %v4493
        %v4562 = vpack.c.bf16 %v4498, %v4494
        %v4563 = vpack.c.bf16 %v4499, %v4495
        %v4566 = vunpack.c.l.b16 %v414
        %v4567 = vunpack.c.h.b16 %v414
        %v4568 = vunpack.c.l.b16 %v417
        %v4569 = vunpack.c.h.b16 %v417
        %v4570 = vpack.c.b16 %v4568, %v4566
        %v4571 = vpack.c.b16 %v4569, %v4567
        %4574 = vmatprep.subr.bf16.mxu0 %v4337
        %4575 = vmatpush1.bf16.msra.mxu0 %v4336
        %4576 = vmatprep.subr.bf16.mxu0 %v4333
        %4577 = vmatpush1.bf16.msra.mxu0 %v4332
        %4578 = vmatprep.subr.bf16.mxu0 %v4329
        %4579 = vmatpush1.bf16.msra.mxu0 %v4328
        %4580 = vmatprep.subr.bf16.mxu0 %v4325
        %4581 = vmatpush1.bf16.msra.mxu0 %v4324
        %4582 = vmatprep.subr.bf16.mxu0 %v4321
        %4583 = vmatpush1.bf16.msra.mxu0 %v4320
        %4584 = vmatprep.subr.bf16.mxu0 %v4317
        %4585 = vmatpush1.bf16.msra.mxu0 %v4316
        %4586 = vmatprep.subr.bf16.mxu0 %v4313
        %4587 = vmatpush1.bf16.msra.mxu0 %v4312
        %4588 = vmatprep.subr.bf16.mxu0 %v4309
        %4589 = vmatpush1.bf16.msra.mxu0 %v4308
        %4590 = vmatprep.subr.bf16.mxu0 %v4369
        %4591 = vmatpush2.bf16.msra.mxu0 %v4368
        %4592 = vmatprep.subr.bf16.mxu0 %v4365
        %4593 = vmatpush2.bf16.msra.mxu0 %v4364
        %4594 = vmatprep.subr.bf16.mxu0 %v4361
        %4595 = vmatpush2.bf16.msra.mxu0 %v4360
        %4596 = vmatprep.subr.bf16.mxu0 %v4357
        %4597 = vmatpush2.bf16.msra.mxu0 %v4356
        %4598 = vmatprep.subr.bf16.mxu0 %v4353
        %4599 = vmatpush2.bf16.msra.mxu0 %v4352
        %4600 = vmatprep.subr.bf16.mxu0 %v4349
        %4601 = vmatpush2.bf16.msra.mxu0 %v4348
        %4602 = vmatprep.subr.bf16.mxu0 %v4345
        %4603 = vmatpush2.bf16.msra.mxu0 %v4344
        %4604 = vmatprep.subr.bf16.mxu0 %v4341
        %4605 = vmatpush2.bf16.msra.mxu0 %v4340
        %4606 = vmatprep.mubr.bf16.mxu0 %v4571
        %4607 = vmatmul.mubr.bf16.gmra.mxu0 %v4570
        %v4608 = vpop.f32.mrf.mxu0
        %v4609 = vadd.f32 0.0, %v4608
        %v4610 = vpop.f32.mrf.mxu0
        %v4611 = vadd.f32 0.0, %v4610
        %v4612 = vpop.f32.mrf.mxu0
        %v4613 = vadd.f32 0.0, %v4612
        %v4614 = vpop.f32.mrf.mxu0
        %v4615 = vadd.f32 0.0, %v4614
        %4616 = vdwg.mxu0
        %4617 = vmatprep.subr.bf16.mxu0 %v4339
        %4618 = vmatpush1.bf16.msra.mxu0 %v4338
        %4619 = vmatprep.subr.bf16.mxu0 %v4335
        %4620 = vmatpush1.bf16.msra.mxu0 %v4334
        %4621 = vmatprep.subr.bf16.mxu0 %v4331
        %4622 = vmatpush1.bf16.msra.mxu0 %v4330
        %4623 = vmatprep.subr.bf16.mxu0 %v4327
        %4624 = vmatpush1.bf16.msra.mxu0 %v4326
        %4625 = vmatprep.subr.bf16.mxu0 %v4323
        %4626 = vmatpush1.bf16.msra.mxu0 %v4322
        %4627 = vmatprep.subr.bf16.mxu0 %v4319
        %4628 = vmatpush1.bf16.msra.mxu0 %v4318
        %4629 = vmatprep.subr.bf16.mxu0 %v4315
        %4630 = vmatpush1.bf16.msra.mxu0 %v4314
        %4631 = vmatprep.subr.bf16.mxu0 %v4311
        %4632 = vmatpush1.bf16.msra.mxu0 %v4310
        %4633 = vmatprep.subr.bf16.mxu0 %v4371
        %4634 = vmatpush2.bf16.msra.mxu0 %v4370
        %4635 = vmatprep.subr.bf16.mxu0 %v4367
        %4636 = vmatpush2.bf16.msra.mxu0 %v4366
        %4637 = vmatprep.subr.bf16.mxu0 %v4363
        %4638 = vmatpush2.bf16.msra.mxu0 %v4362
        %4639 = vmatprep.subr.bf16.mxu0 %v4359
        %4640 = vmatpush2.bf16.msra.mxu0 %v4358
        %4641 = vmatprep.subr.bf16.mxu0 %v4355
        %4642 = vmatpush2.bf16.msra.mxu0 %v4354
        %4643 = vmatprep.subr.bf16.mxu0 %v4351
        %4644 = vmatpush2.bf16.msra.mxu0 %v4350
        %4645 = vmatprep.subr.bf16.mxu0 %v4347
        %4646 = vmatpush2.bf16.msra.mxu0 %v4346
        %4647 = vmatprep.subr.bf16.mxu0 %v4343
        %4648 = vmatpush2.bf16.msra.mxu0 %v4342
        %4649 = vmatprep.mubr.bf16.mxu0 %v4571
        %4650 = vmatmul.mubr.bf16.gmra.mxu0 %v4570
        %v4651 = vpop.f32.mrf.mxu0
        %v4652 = vadd.f32 0.0, %v4651
        %v4653 = vpop.f32.mrf.mxu0
        %v4654 = vadd.f32 0.0, %v4653
        %v4655 = vpop.f32.mrf.mxu0
        %v4656 = vadd.f32 0.0, %v4655
        %v4657 = vpop.f32.mrf.mxu0
        %v4658 = vadd.f32 0.0, %v4657
        %4659 = vdwg.mxu0
        %v4662 = vunpack.c.l.b16 %v413
        %v4663 = vunpack.c.h.b16 %v413
        %v4664 = vunpack.c.l.b16 %v416
        %v4665 = vunpack.c.h.b16 %v416
        %v4666 = vpack.c.b16 %v4664, %v4662
        %v4667 = vpack.c.b16 %v4665, %v4663
        %4670 = vmatprep.subr.bf16.mxu0 %v4145
        %4671 = vmatpush1.bf16.msra.mxu0 %v4144
        %4672 = vmatprep.subr.bf16.mxu0 %v4141
        %4673 = vmatpush1.bf16.msra.mxu0 %v4140
        %4674 = vmatprep.subr.bf16.mxu0 %v4137
        %4675 = vmatpush1.bf16.msra.mxu0 %v4136
        %4676 = vmatprep.subr.bf16.mxu0 %v4133
        %4677 = vmatpush1.bf16.msra.mxu0 %v4132
        %4678 = vmatprep.subr.bf16.mxu0 %v4129
        %4679 = vmatpush1.bf16.msra.mxu0 %v4128
        %4680 = vmatprep.subr.bf16.mxu0 %v4125
        %4681 = vmatpush1.bf16.msra.mxu0 %v4124
        %4682 = vmatprep.subr.bf16.mxu0 %v4121
        %4683 = vmatpush1.bf16.msra.mxu0 %v4120
        %4684 = vmatprep.subr.bf16.mxu0 %v4117
        %4685 = vmatpush1.bf16.msra.mxu0 %v4116
        %4686 = vmatprep.subr.bf16.mxu0 %v4177
        %4687 = vmatpush2.bf16.msra.mxu0 %v4176
        %4688 = vmatprep.subr.bf16.mxu0 %v4173
        %4689 = vmatpush2.bf16.msra.mxu0 %v4172
        %4690 = vmatprep.subr.bf16.mxu0 %v4169
        %4691 = vmatpush2.bf16.msra.mxu0 %v4168
        %4692 = vmatprep.subr.bf16.mxu0 %v4165
        %4693 = vmatpush2.bf16.msra.mxu0 %v4164
        %4694 = vmatprep.subr.bf16.mxu0 %v4161
        %4695 = vmatpush2.bf16.msra.mxu0 %v4160
        %4696 = vmatprep.subr.bf16.mxu0 %v4157
        %4697 = vmatpush2.bf16.msra.mxu0 %v4156
        %4698 = vmatprep.subr.bf16.mxu0 %v4153
        %4699 = vmatpush2.bf16.msra.mxu0 %v4152
        %4700 = vmatprep.subr.bf16.mxu0 %v4149
        %4701 = vmatpush2.bf16.msra.mxu0 %v4148
        %4702 = vmatprep.mubr.bf16.mxu0 %v4667
        %4703 = vmatmul.mubr.bf16.gmra.mxu0 %v4666
        %v4704 = vpop.f32.mrf.mxu0
        %v4705 = vadd.f32 %v4609, %v4704
        %v4706 = vpop.f32.mrf.mxu0
        %v4707 = vadd.f32 %v4611, %v4706
        %v4708 = vpop.f32.mrf.mxu0
        %v4709 = vadd.f32 %v4613, %v4708
        %v4710 = vpop.f32.mrf.mxu0
        %v4711 = vadd.f32 %v4615, %v4710
        %4712 = vdwg.mxu0
        %4713 = vmatprep.subr.bf16.mxu0 %v4147
        %4714 = vmatpush1.bf16.msra.mxu0 %v4146
        %4715 = vmatprep.subr.bf16.mxu0 %v4143
        %4716 = vmatpush1.bf16.msra.mxu0 %v4142
        %4717 = vmatprep.subr.bf16.mxu0 %v4139
        %4718 = vmatpush1.bf16.msra.mxu0 %v4138
        %4719 = vmatprep.subr.bf16.mxu0 %v4135
        %4720 = vmatpush1.bf16.msra.mxu0 %v4134
        %4721 = vmatprep.subr.bf16.mxu0 %v4131
        %4722 = vmatpush1.bf16.msra.mxu0 %v4130
        %4723 = vmatprep.subr.bf16.mxu0 %v4127
        %4724 = vmatpush1.bf16.msra.mxu0 %v4126
        %4725 = vmatprep.subr.bf16.mxu0 %v4123
        %4726 = vmatpush1.bf16.msra.mxu0 %v4122
        %4727 = vmatprep.subr.bf16.mxu0 %v4119
        %4728 = vmatpush1.bf16.msra.mxu0 %v4118
        %4729 = vmatprep.subr.bf16.mxu0 %v4179
        %4730 = vmatpush2.bf16.msra.mxu0 %v4178
        %4731 = vmatprep.subr.bf16.mxu0 %v4175
        %4732 = vmatpush2.bf16.msra.mxu0 %v4174
        %4733 = vmatprep.subr.bf16.mxu0 %v4171
        %4734 = vmatpush2.bf16.msra.mxu0 %v4170
        %4735 = vmatprep.subr.bf16.mxu0 %v4167
        %4736 = vmatpush2.bf16.msra.mxu0 %v4166
        %4737 = vmatprep.subr.bf16.mxu0 %v4163
        %4738 = vmatpush2.bf16.msra.mxu0 %v4162
        %4739 = vmatprep.subr.bf16.mxu0 %v4159
        %4740 = vmatpush2.bf16.msra.mxu0 %v4158
        %4741 = vmatprep.subr.bf16.mxu0 %v4155
        %4742 = vmatpush2.bf16.msra.mxu0 %v4154
        %4743 = vmatprep.subr.bf16.mxu0 %v4151
        %4744 = vmatpush2.bf16.msra.mxu0 %v4150
        %4745 = vmatprep.mubr.bf16.mxu0 %v4667
        %4746 = vmatmul.mubr.bf16.gmra.mxu0 %v4666
        %v4747 = vpop.f32.mrf.mxu0
        %v4748 = vadd.f32 %v4652, %v4747
        %v4749 = vpop.f32.mrf.mxu0
        %v4750 = vadd.f32 %v4654, %v4749
        %v4751 = vpop.f32.mrf.mxu0
        %v4752 = vadd.f32 %v4656, %v4751
        %v4753 = vpop.f32.mrf.mxu0
        %v4754 = vadd.f32 %v4658, %v4753
        %4755 = vdwg.mxu0
        %v4758 = vunpack.c.l.b16 %v415
        %v4759 = vunpack.c.h.b16 %v415
        %v4760 = vunpack.c.l.b16 %v418
        %v4761 = vunpack.c.h.b16 %v418
        %v4762 = vpack.c.b16 %v4760, %v4758
        %v4763 = vpack.c.b16 %v4761, %v4759
        %4766 = vmatprep.subr.bf16.mxu0 %v4529
        %4767 = vmatpush1.bf16.msra.mxu0 %v4528
        %4768 = vmatprep.subr.bf16.mxu0 %v4525
        %4769 = vmatpush1.bf16.msra.mxu0 %v4524
        %4770 = vmatprep.subr.bf16.mxu0 %v4521
        %4771 = vmatpush1.bf16.msra.mxu0 %v4520
        %4772 = vmatprep.subr.bf16.mxu0 %v4517
        %4773 = vmatpush1.bf16.msra.mxu0 %v4516
        %4774 = vmatprep.subr.bf16.mxu0 %v4513
        %4775 = vmatpush1.bf16.msra.mxu0 %v4512
        %4776 = vmatprep.subr.bf16.mxu0 %v4509
        %4777 = vmatpush1.bf16.msra.mxu0 %v4508
        %4778 = vmatprep.subr.bf16.mxu0 %v4505
        %4779 = vmatpush1.bf16.msra.mxu0 %v4504
        %4780 = vmatprep.subr.bf16.mxu0 %v4501
        %4781 = vmatpush1.bf16.msra.mxu0 %v4500
        %4782 = vmatprep.subr.bf16.mxu0 %v4561
        %4783 = vmatpush2.bf16.msra.mxu0 %v4560
        %4784 = vmatprep.subr.bf16.mxu0 %v4557
        %4785 = vmatpush2.bf16.msra.mxu0 %v4556
        %4786 = vmatprep.subr.bf16.mxu0 %v4553
        %4787 = vmatpush2.bf16.msra.mxu0 %v4552
        %4788 = vmatprep.subr.bf16.mxu0 %v4549
        %4789 = vmatpush2.bf16.msra.mxu0 %v4548
        %4790 = vmatprep.subr.bf16.mxu0 %v4545
        %4791 = vmatpush2.bf16.msra.mxu0 %v4544
        %4792 = vmatprep.subr.bf16.mxu0 %v4541
        %4793 = vmatpush2.bf16.msra.mxu0 %v4540
        %4794 = vmatprep.subr.bf16.mxu0 %v4537
        %4795 = vmatpush2.bf16.msra.mxu0 %v4536
        %4796 = vmatprep.subr.bf16.mxu0 %v4533
        %4797 = vmatpush2.bf16.msra.mxu0 %v4532
        %4798 = vmatprep.mubr.bf16.mxu0 %v4763
        %4799 = vmatmul.mubr.bf16.gmra.mxu0 %v4762
        %v4800 = vpop.f32.mrf.mxu0
        %v4801 = vadd.f32 0.0, %v4800
        %v4802 = vpop.f32.mrf.mxu0
        %v4803 = vadd.f32 0.0, %v4802
        %v4804 = vpop.f32.mrf.mxu0
        %v4805 = vadd.f32 0.0, %v4804
        %v4806 = vpop.f32.mrf.mxu0
        %v4807 = vadd.f32 0.0, %v4806
        %4808 = vdwg.mxu0
        %4809 = vmatprep.subr.bf16.mxu0 %v4531
        %4810 = vmatpush1.bf16.msra.mxu0 %v4530
        %4811 = vmatprep.subr.bf16.mxu0 %v4527
        %4812 = vmatpush1.bf16.msra.mxu0 %v4526
        %4813 = vmatprep.subr.bf16.mxu0 %v4523
        %4814 = vmatpush1.bf16.msra.mxu0 %v4522
        %4815 = vmatprep.subr.bf16.mxu0 %v4519
        %4816 = vmatpush1.bf16.msra.mxu0 %v4518
        %4817 = vmatprep.subr.bf16.mxu0 %v4515
        %4818 = vmatpush1.bf16.msra.mxu0 %v4514
        %4819 = vmatprep.subr.bf16.mxu0 %v4511
        %4820 = vmatpush1.bf16.msra.mxu0 %v4510
        %4821 = vmatprep.subr.bf16.mxu0 %v4507
        %4822 = vmatpush1.bf16.msra.mxu0 %v4506
        %4823 = vmatprep.subr.bf16.mxu0 %v4503
        %4824 = vmatpush1.bf16.msra.mxu0 %v4502
        %4825 = vmatprep.subr.bf16.mxu0 %v4563
        %4826 = vmatpush2.bf16.msra.mxu0 %v4562
        %4827 = vmatprep.subr.bf16.mxu0 %v4559
        %4828 = vmatpush2.bf16.msra.mxu0 %v4558
        %4829 = vmatprep.subr.bf16.mxu0 %v4555
        %4830 = vmatpush2.bf16.msra.mxu0 %v4554
        %4831 = vmatprep.subr.bf16.mxu0 %v4551
        %4832 = vmatpush2.bf16.msra.mxu0 %v4550
        %4833 = vmatprep.subr.bf16.mxu0 %v4547
        %4834 = vmatpush2.bf16.msra.mxu0 %v4546
        %4835 = vmatprep.subr.bf16.mxu0 %v4543
        %4836 = vmatpush2.bf16.msra.mxu0 %v4542
        %4837 = vmatprep.subr.bf16.mxu0 %v4539
        %4838 = vmatpush2.bf16.msra.mxu0 %v4538
        %4839 = vmatprep.subr.bf16.mxu0 %v4535
        %4840 = vmatpush2.bf16.msra.mxu0 %v4534
        %4841 = vmatprep.mubr.bf16.mxu0 %v4763
        %4842 = vmatmul.mubr.bf16.gmra.mxu0 %v4762
        %v4843 = vpop.f32.mrf.mxu0
        %v4844 = vadd.f32 0.0, %v4843
        %v4845 = vpop.f32.mrf.mxu0
        %v4846 = vadd.f32 0.0, %v4845
        %v4847 = vpop.f32.mrf.mxu0
        %v4848 = vadd.f32 0.0, %v4847
        %v4849 = vpop.f32.mrf.mxu0
        %v4850 = vadd.f32 0.0, %v4849
        %4851 = vdwg.mxu0
        %v4852 = vadd.f32 %v4705, %v4801
        %v4853 = vadd.f32 %v4707, %v4803
        %v4854 = vadd.f32 %v4748, %v4844
        %v4855 = vadd.f32 %v4750, %v4846
        %v4856 = vadd.f32 %v4709, %v4805
        %v4857 = vadd.f32 %v4711, %v4807
        %v4858 = vadd.f32 %v4752, %v4848
        %v4859 = vadd.f32 %v4754, %v4850
        %v4860 = vld [vmem:[#allocation2] sm:$0xf]
        %v4861 = vlaneseq
        %v4862 = vshrl.u32 %v4861, 7
        %v4863 = vsub.s32 0, %v4862
        %v4864 = vrot.slane %v4860, %v4863
        %v4865 = vlaneseq
        %v4866 = vshrl.u32 %v4865, 7
        %v4867 = vsub.s32 1, %v4866
        %v4868 = vrot.slane %v4860, %v4867
        %v4869 = vlaneseq
        %v4870 = vshrl.u32 %v4869, 7
        %v4871 = vsub.s32 2, %v4870
        %v4872 = vrot.slane %v4860, %v4871
        %v4873 = vlaneseq
        %v4874 = vshrl.u32 %v4873, 7
        %v4875 = vsub.s32 3, %v4874
        %v4876 = vrot.slane %v4860, %v4875
        %vm4877 = vcmp.lt.s32.totalorder %v3856, %v4864
        %vm4878 = vcmp.lt.s32.totalorder %v3857, %v4868
        %vm4879 = vcmp.lt.s32.totalorder %v3858, %v4872
        %vm4880 = vcmp.lt.s32.totalorder %v3859, %v4876
        %v4881 = vsel %vm4877, %v3856, %v4864
        %v4882 = vsel %vm4878, %v3857, %v4868
        %v4883 = vsel %vm4879, %v3858, %v4872
        %v4884 = vsel %vm4880, %v3859, %v4876
        %v4885 = vcombine.low %v4881, %v4882
        %v4886 = vcombine.low %v4883, %v4884
        %v4888 = vunpack.c.l.s4 1966171168
        %v4889 = vunpack.c.0.s8 %v4888
        %v4890 = vlaneseq
        %v4891 = vshrl.u32 %v4890, 7
        %v4892 = vsub.s32 %v4889, %v4891
        %v4893 = vrot.slane %v4885, %v4892
        %v4895 = vunpack.c.l.s4 1966171168
        %v4896 = vunpack.c.0.s8 %v4895
        %v4897 = vlaneseq
        %v4898 = vshrl.u32 %v4897, 7
        %v4899 = vsub.s32 %v4896, %v4898
        %v4900 = vrot.slane %v4886, %v4899
        %v4901 = vcombine.low %v4893, %v4900
        %v4903 = vunpack.c.l.s4 1966171168
        %v4904 = vunpack.c.0.s8 %v4903
        %v4905 = vlaneseq
        %v4906 = vshrl.u32 %v4905, 7
        %v4907 = vsub.s32 %v4904, %v4906
        %v4908 = vrot.slane %v4901, %v4907
        %v4909 = vlaneseq
        %vm4910 = vcmp.ge.s32.totalorder %v4909, 0
        %vm4911 = vcmp.lt.s32.totalorder %v4909, 512
        %vm4912 = vmand %vm4910, %vm4911
        %4913 = vst.msk [vmem:[#allocation2] sm:$0xf] %vm4912, %v4908
        %v4914 = vld [vmem:[%s264] sm:$0xff]
        %v4915 = vld [vmem:[%s264 + $0x8] sm:$0xff]
        %v4916 = vld [vmem:[%s264 + $0x10] sm:$0xff]
        %v4917 = vld [vmem:[%s264 + $0x18] sm:$0xff]
        %v4918 = vld [vmem:[%s264 + $0x20] sm:$0xf]
        %v4919 = vld [vmem:[%s264 + $0x28] sm:$0xf]
        %v4920 = vld [vmem:[%s264 + $0x30] sm:$0xf]
        %v4921 = vld [vmem:[%s264 + $0x38] sm:$0xf]
        %v4922 = vsel %vm4877, 1, 0
        %v4923 = vsel %vm4878, 1, 0
        %v4924 = vsel %vm4879, 1, 0
        %v4925 = vsel %vm4880, 1, 0
        %v4926 = vlaneseq
        %v4927 = vshrl.u32 %v4926, 7
        %v4928 = vsub.s32 0, %v4927
        %v4929 = vrot.slane %v4922, %v4928
        %v4930 = vlaneseq
        %v4931 = vshrl.u32 %v4930, 7
        %v4932 = vsub.s32 0, %v4931
        %v4933 = vrot.slane %v4923, %v4932
        %v4934 = vlaneseq
        %v4935 = vshrl.u32 %v4934, 7
        %v4936 = vsub.s32 0, %v4935
        %v4937 = vrot.slane %v4924, %v4936
        %v4938 = vlaneseq
        %v4939 = vshrl.u32 %v4938, 7
        %v4940 = vsub.s32 0, %v4939
        %v4941 = vrot.slane %v4925, %v4940
        %vm4942 = vcmp.eq.s32.totalorder %v4929, 1
        %vm4943 = vcmp.eq.s32.totalorder %v4933, 1
        %vm4944 = vcmp.eq.s32.totalorder %v4937, 1
        %vm4945 = vcmp.eq.s32.totalorder %v4941, 1
        %v4946 = vsel %vm4942, %v4852, %v4914
        %v4947 = vsel %vm4943, %v4853, %v4915
        %v4948 = vsel %vm4944, %v4854, %v4916
        %v4949 = vsel %vm4945, %v4855, %v4917
        %v4950 = vsel %vm4942, %v4856, %v4918
        %v4951 = vsel %vm4943, %v4857, %v4919
        %v4952 = vsel %vm4944, %v4858, %v4920
        %v4953 = vsel %vm4945, %v4859, %v4921
        %4954 = vst [vmem:[%s264] sm:$0xff] %v4946
        %4955 = vst [vmem:[%s264 + $0x8] sm:$0xff] %v4947
        %4956 = vst [vmem:[%s264 + $0x10] sm:$0xff] %v4948
        %4957 = vst [vmem:[%s264 + $0x18] sm:$0xff] %v4949
        %4958 = vst [vmem:[%s264 + $0x20] sm:$0xf] %v4950
        %4959 = vst [vmem:[%s264 + $0x28] sm:$0xf] %v4951
        %4960 = vst [vmem:[%s264 + $0x30] sm:$0xf] %v4952
        %4961 = vst [vmem:[%s264 + $0x38] sm:$0xf] %v4953
        %p4962 = scmp.eq.s32.totalorder %s26, 1
        // Predicated region
        $region37: #{tpu_custom_call.1} parent=31 // pred_check
          %p4963 = pneg %p4962
        $region38: #{tpu_custom_call.1} parent=31 // pred_check_branch
          %4965 = sbr.rel (%p4963) target = $region40
        $region39: #{tpu_custom_call.1} parent=31 // pred_region
          %v4966 = vld [vmem:[#allocation2] sm:$0xf]
          %vm4967 = vcmp.lt.s32.totalorder %v4966, 1232348160
          %v4968 = vsel %vm4967, 1, 0
          %v4969 = vcvt.s32.f32 %v4968
          %4970 = vst.msk [vmem:[%s271] sm:$0xf] %vm4912, %v4969
        $region40: #{tpu_custom_call.1} parent=31 // pred_fallthru
          _
        %s4971 = sand.u32 %s134, 1
        %s4972 = sand.u32 %s134, 1
        %s4973 = smul.addr %s4972, 64
        %s4974 = scalar_lea.vmem [#allocation3], %s4973
        %s4975 = sand.u32 %s162, 1
        %s4976 = scalar_lea.sflag [#allocation5], %s4975
        %s4977 = sand.u32 %s162, 1
        %s4978 = smul.addr %s4977, 4
        %s4979 = scalar_lea.vmem [#allocation4], %s4978
        // Predicated region
        $region41: #{tpu_custom_call.1} parent=31 // pred_check
          %p4980 = pneg %p144
        $region42: #{tpu_custom_call.1} parent=31 // pred_check_branch
          %4982 = sbr.rel (%p4980) target = $region44
        $region43: #{tpu_custom_call.1} parent=31 // pred_region
          %s4983 = smul.u32 4, %s25
          %s4984 = smul.addr %s24, 16
          %s4985 = sadd.s32 %s4983, %s4984
          %s4986 = smul.addr %s4985, 8
          %s4987 = scalar_lea.vmem %s3, %s4986
          // Predicated region
          $region45: #{tpu_custom_call.1} parent=43 // pred_check
            _
          $region46: #{tpu_custom_call.1} parent=43 // pred_check_branch
            %4989 = sbr.rel (0) target = $region48
          $region47: #{tpu_custom_call.1} parent=43 // pred_region
            // Predicated region
            $region49: #{tpu_custom_call.1} parent=47 // pred_check
              _
            $region50: #{tpu_custom_call.1} parent=47 // pred_check_branch
              %4991 = sbr.rel (0) target = $region52
            $region51: #{tpu_custom_call.1} parent=47 // pred_region
              loop: start=0, step=1, limit=1
              $region53: #{tpu_custom_call.1} parent=51 // loop_pre_header
                _
              $region54: #{tpu_custom_call.1} parent=51 // loop_header
                %s4993 = sphi 0, %s4997
                %p4994 = scmp.ge.s32.totalorder %s4993, 1
                %s4998 = sphi %s4974, %s4974
                %s4999 = sphi %s4987, %s4987
              $region55: #{tpu_custom_call.1} parent=51 // loop_header_branch
                %4996 = sbr.rel (%p4994) target = $region59
              $region56: #{tpu_custom_call.1} parent=51 // loop_body
                %v5000 = vld [vmem:[%s4998] sm:$0xff]
                %5001 = vst [vmem:[%s4999] sm:$0xff] %v5000
                %v5002 = vld [vmem:[%s4998 + $0x8] sm:$0xff]
                %5003 = vst [vmem:[%s4999 + $0x8] sm:$0xff] %v5002
                %v5004 = vld [vmem:[%s4998 + $0x10] sm:$0xff]
                %5005 = vst [vmem:[%s4999 + $0x10] sm:$0xff] %v5004
                %v5006 = vld [vmem:[%s4998 + $0x18] sm:$0xff]
                %5007 = vst [vmem:[%s4999 + $0x18] sm:$0xff] %v5006
                %v5008 = vld [vmem:[%s4998 + $0x20] sm:$0xff]
                %5009 = vst [vmem:[%s4999 + $0x40] sm:$0xff] %v5008
                %v5010 = vld [vmem:[%s4998 + $0x28] sm:$0xff]
                %5011 = vst [vmem:[%s4999 + $0x48] sm:$0xff] %v5010
                %v5012 = vld [vmem:[%s4998 + $0x30] sm:$0xff]
                %5013 = vst [vmem:[%s4999 + $0x50] sm:$0xff] %v5012
                %v5014 = vld [vmem:[%s4998 + $0x38] sm:$0xff]
                %5015 = vst [vmem:[%s4999 + $0x58] sm:$0xff] %v5014
              $region57: #{tpu_custom_call.1} parent=51 // loop_footer
                %s4997 = sadd.s32 1, %s4993
              $region58: #{tpu_custom_call.1} parent=51 // loop_footer_branch
                %4992 = sbr.rel target = $region54
              $region59: #{tpu_custom_call.1} parent=51 // loop_exit
                _
            $region52: #{tpu_custom_call.1} parent=47 // pred_fallthru
              _
            // Predicated region
            $region60: #{tpu_custom_call.1} parent=47 // pred_check
              _
            $region61: #{tpu_custom_call.1} parent=47 // pred_check_branch
              %5017 = sbr.rel target = $region63
            $region62: #{tpu_custom_call.1} parent=47 // pred_region
              _
            $region63: #{tpu_custom_call.1} parent=47 // pred_fallthru
              _
          $region48: #{tpu_custom_call.1} parent=43 // pred_fallthru
            _
          %5018 = vnop
        $region44: #{tpu_custom_call.1} parent=31 // pred_fallthru
          _
        // Predicated region
        $region64: #{tpu_custom_call.1} parent=31 // pred_check
          %p5019 = pneg %p172
        $region65: #{tpu_custom_call.1} parent=31 // pred_check_branch
          %5021 = sbr.rel (%p5019) target = $region67
        $region66: #{tpu_custom_call.1} parent=31 // pred_region
          %s5022 = smul.u32 4, %s25
          %s5024 = ssub.s32 64, 64
          %5025 = vsyncadd %s4976, %s5024
          %s5026 = smul.addr %s24, 8
          %s5027 = sadd.s32 %s5022, %s5026
          %s5028 = smul.addr %s5027, 16
          %s5029 = scalar_lea.hbm %s4, %s5028
          %s5031 = sshll.u32 %s4979, 4
          %s5032 = int_to_ptr.vmem [resolvable:$true] %s5031
          %5034 = dma.vmem_to_hbm [thread:$0]  %s5032, 64, %s5029, %s4976
        $region67: #{tpu_custom_call.1} parent=31 // pred_fallthru
          _
      $region32: #{tpu_custom_call.1} parent=5 // pred_fallthru
        _
      %p5035 = scmp.le.s32.totalorder 2, %s14
      // Predicated region
      $region68: #{tpu_custom_call.1} parent=5 // pred_check
        %p5036 = pneg %p5035
      $region69: #{tpu_custom_call.1} parent=5 // pred_check_branch
        %5038 = sbr.rel (%p5036) target = $region71
      $region70: #{tpu_custom_call.1} parent=5 // pred_region
        %s5039 = ssub.s32 %s14, 2
        // Predicated region
        $region72: #{tpu_custom_call.1} parent=70 // pred_check
          %p5040 = pneg %p150
        $region73: #{tpu_custom_call.1} parent=70 // pred_check_branch
          %5042 = sbr.rel (%p5040) target = $region75
        $region74: #{tpu_custom_call.1} parent=70 // pred_region
          %s5043 = sand.u32 %s135, 1
          %s5044 = sand.u32 %s135, 1
          %s5045 = smul.addr %s5044, 64
          %s5046 = scalar_lea.vmem [#allocation3], %s5045
        $region75: #{tpu_custom_call.1} parent=70 // pred_fallthru
          _
        // Predicated region
        $region76: #{tpu_custom_call.1} parent=70 // pred_check
          %p5047 = pneg %p178
        $region77: #{tpu_custom_call.1} parent=70 // pred_check_branch
          %5049 = sbr.rel (%p5047) target = $region79
        $region78: #{tpu_custom_call.1} parent=70 // pred_region
          %s5050 = sand.u32 %s163, 1
          %s5051 = scalar_lea.sflag [#allocation5], %s5050
          %s5052 = sand.u32 %s163, 1
          %s5053 = smul.addr %s5052, 4
          %s5054 = scalar_lea.vmem [#allocation4], %s5053
          %5055 = dma.done %s5051, 64
        $region79: #{tpu_custom_call.1} parent=70 // pred_fallthru
          _
      $region71: #{tpu_custom_call.1} parent=5 // pred_fallthru
        _
    $region6: #{tpu_custom_call.1} parent=1 // loop_footer
      %s18 = sadd.s32 1, %s14
    $region7: #{tpu_custom_call.1} parent=1 // loop_footer_branch
      %13 = sbr.rel target = $region3
    $region8: #{tpu_custom_call.1} parent=1 // loop_exit
      _
    %5056 = vsyncpa [#allocation5], 1
    %s5057 = scalar_lea.sflag [#allocation5], 1
    %5058 = vsyncpa %s5057, 1

</llo_original>
